<compile_context>
chip_gen: v7x
topology: tpu7x:2x2x1
jax: 0.10.0
libtpu: 0.0.40
codegen_flags: <defaults>
</compile_context>

<pallas_src>
import jax
import jax.numpy as jnp
from jax.experimental import pallas as pl
from jax.experimental.pallas import tpu as pltpu

IN_DIM = 784      # 28*28 MNIST
IN_PAD = 896      # contraction dim padded to a multiple of 128
H1 = 1024
OUT_DIM = 40
OUT_PAD = 128     # lane-padded output width (40 -> 128), sliced back in wrapper


def _round_up(x, m):
    return ((x + m - 1) // m) * m


def _ceil_div(a, b):
    return -(-a // b)


def _encoder_kernel(x_ref, w1_ref, b1_ref, w2_ref, b2_ref, o_ref):
    # Layer 1: Linear(784[->896] -> 1024) + ReLU.  bf16 operands, f32 accum.
    h1 = jnp.dot(x_ref[...], w1_ref[...], preferred_element_type=jnp.float32)
    h1 = jnp.maximum(h1 + b1_ref[...], 0.0)

    # Layer 2: Linear(1024 -> 128[=40 padded]) + ReLU.
    h2 = jnp.dot(h1.astype(jnp.bfloat16), w2_ref[...],
                 preferred_element_type=jnp.float32)
    o_ref[...] = jnp.maximum(h2 + b2_ref[...], 0.0).astype(o_ref.dtype)


def _vmem_limit_bytes(tb):
    bf16, f32 = 2, 4
    footprint = (
        2 * tb * IN_PAD * bf16              # x tile, double-buffered, bf16
        + 2 * tb * OUT_PAD * f32            # out tile, double-buffered, f32
        + 2 * IN_PAD * H1 * bf16            # w1 (resident, default 2 buffers)
        + 2 * H1 * OUT_PAD * bf16           # w2 (resident, default 2 buffers)
        + 2 * 8 * (H1 + OUT_PAD) * f32      # b1/b2, sublane-padded 1 -> 8
        + tb * H1 * (f32 + bf16)            # h1 (f32) + its bf16 copy
    )
    # Headroom for compiler scratch / layout padding; cap well below v7x's
    # 64 MiB physical VMEM per TensorCore.
    return min(56 << 20, footprint + (10 << 20))


def mnist_encoder_forward(x, params, *, block_b=1024):
    """x: (B, 784) float32 -> (B, 40) float32."""
    w1, b1, w2, b2 = params  # w*: (in, out) bf16, padded; b*: f32
    B = x.shape[0]

    # At least 2 grid steps (v7x has 2 TensorCores), rounded to an even count
    # for load balance; tile right-sized to minimize batch padding.
    n_steps = max(_ceil_div(B, block_b), 2)
    n_steps += n_steps % 2
    tb = _round_up(_ceil_div(B, n_steps), 8)
    b_pad = n_steps * tb

    # bf16 input (halves the x-tile DMA; accumulation stays f32) and
    # zero-padding of batch rows + contraction columns (784 -> 896).
    x = jnp.pad(x.astype(jnp.bfloat16),
                ((0, b_pad - B), (0, IN_PAD - IN_DIM)))

    out = pl.pallas_call(
        _encoder_kernel,
        out_shape=jax.ShapeDtypeStruct((b_pad, OUT_PAD), jnp.float32),
        grid=(n_steps,),
        in_specs=[
            pl.BlockSpec((tb, IN_PAD), lambda i: (i, 0)),       # x: gridded
            pl.BlockSpec((IN_PAD, H1), lambda i: (0, 0)),       # w1: resident
            pl.BlockSpec((1, H1), lambda i: (0, 0)),            # b1: resident
            pl.BlockSpec((H1, OUT_PAD), lambda i: (0, 0)),      # w2: resident
            pl.BlockSpec((1, OUT_PAD), lambda i: (0, 0)),       # b2: resident
        ],
        out_specs=pl.BlockSpec((tb, OUT_PAD), lambda i: (i, 0)),
        compiler_params=pltpu.CompilerParams(
            dimension_semantics=("parallel",),
            vmem_limit_bytes=_vmem_limit_bytes(tb),
        ),
    )(x, w1, b1, w2, b2)

    # Strip batch padding and the lane padding of the 40-wide output.
    return out[:B, :OUT_DIM]


def init_params(key):
    """Deterministic synthetic parameters matching the nn.Linear layers.

    Weights are stored (in_features, out_features) — i.e. transposed vs.
    PyTorch — so the kernel computes plain `x @ W`, matching y = x @ W.T + b.
    W1 rows are zero-padded 784 -> 896 (aligned contraction dim) and the
    second layer's out dim is zero-padded 40 -> 128 (lane-dense stores); both
    paddings are numerically exact for Linear + ReLU.  Weights are bf16
    (MXU operands); biases stay f32 (added to the f32 accumulator).
    """
    ks = jax.random.split(key, 4)

    def linear(kw, kb, fan_in, fan_out):
        bound = 1.0 / jnp.sqrt(jnp.float32(fan_in))
        w = jax.random.uniform(kw, (fan_in, fan_out), jnp.float32, -bound, bound)
        b = jax.random.uniform(kb, (1, fan_out), jnp.float32, -bound, bound)
        return w, b

    w1, b1 = linear(ks[0], ks[1], IN_DIM, H1)
    w2, b2 = linear(ks[2], ks[3], H1, OUT_DIM)

    w1p = jnp.pad(w1, ((0, IN_PAD - IN_DIM), (0, 0))).astype(jnp.bfloat16)
    w2p = jnp.pad(w2, ((0, 0), (0, OUT_PAD - OUT_DIM))).astype(jnp.bfloat16)
    b2p = jnp.pad(b2, ((0, 0), (0, OUT_PAD - OUT_DIM)))
    return (w1p, b1, w2p, b2p)


def _reference(x, params):
    """Pure-JAX f32 reference on the unpadded weights."""
    w1p, b1, w2p, b2p = params
    w1 = w1p[:IN_DIM].astype(jnp.float32)
    w2 = w2p[:, :OUT_DIM].astype(jnp.float32)
    h1 = jnp.maximum(x @ w1 + b1, 0.0)
    return jnp.maximum(h1 @ w2 + b2p[:, :OUT_DIM], 0.0)


if __name__ == "__main__":
    key = jax.random.PRNGKey(0)
    k_params, k_x1, k_x2 = jax.random.split(key, 3)

    params = init_params(k_params)

    # Small-batch check (2 small grid steps).
    B = 8
    x = jax.random.normal(k_x1, (B, IN_DIM), jnp.float32)
    out = jax.block_until_ready(mnist_encoder_forward(x, params))
    ref = _reference(x, params)
    assert out.shape == (B, OUT_DIM), out.shape
    assert jnp.allclose(out, ref, atol=2e-2, rtol=2e-2), \
        "small-batch mismatch vs reference"

    # Multi-tile check (ragged batch: exercises tile right-sizing + padding).
    B2 = 300
    x2 = jax.random.normal(k_x2, (B2, IN_DIM), jnp.float32)
    out2 = jax.block_until_ready(mnist_encoder_forward(x2, params, block_b=128))
    ref2 = _reference(x2, params)
    assert out2.shape == (B2, OUT_DIM), out2.shape
    assert jnp.allclose(out2, ref2, atol=2e-2, rtol=2e-2), \
        "multi-tile mismatch vs reference"

    print("KERNEL_OK")
</pallas_src>

<mosaic_0001>
module attributes {stable_mosaic.version = 11 : i64} {
  func.func @_encoder_kernel(%arg0: i32, %arg1: memref<8x896xbf16, #tpu.memory_space<vmem>>, %arg2: memref<896x1024xbf16, #tpu.memory_space<vmem>>, %arg3: memref<1x1024xf32, #tpu.memory_space<vmem>>, %arg4: memref<1024x128xbf16, #tpu.memory_space<vmem>>, %arg5: memref<1x128xf32, #tpu.memory_space<vmem>>, %arg6: memref<8x128xf32, #tpu.memory_space<vmem>>) attributes {dimension_semantics = [#tpu.dimension_semantics<parallel>], iteration_bounds = array<i64: 2>, scalar_prefetch = 0 : i64, scratch_operands = 0 : i64, tpu.core_type = #tpu.core_type<tc>, window_params = [{transform_indices = @transform_0, window_bounds = array<i64: 8, 896>}, {pipeline_mode = #tpu.pipeline_mode<synchronous>, transform_indices = @transform_1, window_bounds = array<i64: 896, 1024>}, {pipeline_mode = #tpu.pipeline_mode<synchronous>, transform_indices = @transform_2, window_bounds = array<i64: 1, 1024>}, {pipeline_mode = #tpu.pipeline_mode<synchronous>, transform_indices = @transform_3, window_bounds = array<i64: 1024, 128>}, {pipeline_mode = #tpu.pipeline_mode<synchronous>, transform_indices = @transform_4, window_bounds = array<i64: 1, 128>}, {transform_indices = @transform_5, window_bounds = array<i64: 8, 128>}]} {
    %c0 = arith.constant 0 : index
    %c0_0 = arith.constant 0 : index
    %0 = vector.load %arg1[%c0, %c0_0] : memref<8x896xbf16, #tpu.memory_space<vmem>>, vector<8x896xbf16>
    %c0_1 = arith.constant 0 : index
    %c0_2 = arith.constant 0 : index
    %1 = vector.load %arg2[%c0_1, %c0_2] : memref<896x1024xbf16, #tpu.memory_space<vmem>>, vector<896x1024xbf16>
    %cst = arith.constant dense<0.000000e+00> : vector<8x1024xf32>
    %2 = tpu.matmul %0, %1, %cst {dimension_numbers = #tpu.dot_dimension_numbers<[1], [0], [0], [1], [0, 0, 1, 1], [], []>} : vector<8x896xbf16>, vector<896x1024xbf16>, vector<8x1024xf32> -> vector<8x1024xf32>
    %c0_3 = arith.constant 0 : index
    %c0_4 = arith.constant 0 : index
    %3 = vector.load %arg3[%c0_3, %c0_4] : memref<1x1024xf32, #tpu.memory_space<vmem>>, vector<1x1024xf32>
    %4 = vector.broadcast %3 : vector<1x1024xf32> to vector<8x1024xf32>
    %5 = arith.addf %2, %4 : vector<8x1024xf32>
    %cst_5 = arith.constant 0.000000e+00 : f32
    %6 = vector.broadcast %cst_5 : f32 to vector<8x1024xf32>
    %7 = arith.maximumf %5, %6 : vector<8x1024xf32>
    %8 = arith.truncf %7 : vector<8x1024xf32> to vector<8x1024xbf16>
    %c0_6 = arith.constant 0 : index
    %c0_7 = arith.constant 0 : index
    %9 = vector.load %arg4[%c0_6, %c0_7] : memref<1024x128xbf16, #tpu.memory_space<vmem>>, vector<1024x128xbf16>
    %cst_8 = arith.constant dense<0.000000e+00> : vector<8x128xf32>
    %10 = tpu.matmul %8, %9, %cst_8 {dimension_numbers = #tpu.dot_dimension_numbers<[1], [0], [0], [1], [0, 0, 1, 1], [], []>} : vector<8x1024xbf16>, vector<1024x128xbf16>, vector<8x128xf32> -> vector<8x128xf32>
    %c0_9 = arith.constant 0 : index
    %c0_10 = arith.constant 0 : index
    %11 = vector.load %arg5[%c0_9, %c0_10] : memref<1x128xf32, #tpu.memory_space<vmem>>, vector<1x128xf32>
    %12 = vector.broadcast %11 : vector<1x128xf32> to vector<8x128xf32>
    %13 = arith.addf %10, %12 : vector<8x128xf32>
    %cst_11 = arith.constant 0.000000e+00 : f32
    %14 = vector.broadcast %cst_11 : f32 to vector<8x128xf32>
    %15 = arith.maximumf %13, %14 : vector<8x128xf32>
    %c0_12 = arith.constant 0 : index
    %c0_13 = arith.constant 0 : index
    %16 = vector.load %arg6[%c0_12, %c0_13] : memref<8x128xf32, #tpu.memory_space<vmem>>, vector<8x128xf32>
    tpu.vector_store %arg6[%c0_12, %c0_13], %15 {strides = array<i32>} : memref<8x128xf32, #tpu.memory_space<vmem>>, vector<8x128xf32>,
    return
  }
  func.func @transform_0(%arg0: i32) -> (i32, i32) {
    %c0_i32 = arith.constant 0 : i32
    %c0_i32_0 = arith.constant 0 : i32
    return %arg0, %c0_i32 : i32, i32
  }
  func.func @transform_1(%arg0: i32) -> (i32, i32) {
    %c0_i32 = arith.constant 0 : i32
    %c0_i32_0 = arith.constant 0 : i32
    %c0_i32_1 = arith.constant 0 : i32
    return %c0_i32, %c0_i32_0 : i32, i32
  }
  func.func @transform_2(%arg0: i32) -> (i32, i32) {
    %c0_i32 = arith.constant 0 : i32
    %c0_i32_0 = arith.constant 0 : i32
    %c0_i32_1 = arith.constant 0 : i32
    return %c0_i32, %c0_i32_0 : i32, i32
  }
  func.func @transform_3(%arg0: i32) -> (i32, i32) {
    %c0_i32 = arith.constant 0 : i32
    %c0_i32_0 = arith.constant 0 : i32
    %c0_i32_1 = arith.constant 0 : i32
    return %c0_i32, %c0_i32_0 : i32, i32
  }
  func.func @transform_4(%arg0: i32) -> (i32, i32) {
    %c0_i32 = arith.constant 0 : i32
    %c0_i32_0 = arith.constant 0 : i32
    %c0_i32_1 = arith.constant 0 : i32
    return %c0_i32, %c0_i32_0 : i32, i32
  }
  func.func @transform_5(%arg0: i32) -> (i32, i32) {
    %c0_i32 = arith.constant 0 : i32
    %c0_i32_0 = arith.constant 0 : i32
    return %arg0, %c0_i32 : i32, i32
  }
}

</mosaic_0001>

<llo_original>
// kernel: tpu_custom_call.1
$region0: #{tpu_custom_call.1}
  #allocation0 [shape = 'u32[]', space=smem, size = 0x4, offset = 0x4, fixed_abs, tag = 'smem constant byte address 0x4 - core index']
  #allocation1 [shape = 'u32[144,128]{1,0:T(1,128)}', space=vmem, size = 0x12000, scoped, tag = 'internal scratch']
  %s0 = inlined_call_operand.hbm [shape: bf16[16,896], index: 0, kind: input, shape index: {}]
  %s1 = inlined_call_operand.hbm [shape: bf16[896,1024], index: 1, kind: input, shape index: {}]
  %s2 = inlined_call_operand.hbm [shape: f32[1,1024], index: 2, kind: input, shape index: {}]
  %s3 = inlined_call_operand.hbm [shape: bf16[1024,128], index: 3, kind: input, shape index: {}]
  %s4 = inlined_call_operand.hbm [shape: f32[1,128], index: 4, kind: input, shape index: {}]
  %s5 = inlined_call_operand.hbm [shape: f32[16,128], index: 5, kind: output, shape index: {}]
  %s6 = sld [smem:[#allocation0]]
  $region73: #{tpu_custom_call.1} parent=0
    _
  %s8 = ssub.s32 1, %s6
  %s9 = scalar_select 0, %s8, %s6
  $region1: #{tpu_custom_call.1} parent=0
    #allocation2 [shape = 'u8[28672]{0}', space=vmem, size = 0x7000, scoped, tag = 'input window, operand 0']
    #allocation3 [shape = 's32[2]{0}', space=sflag, size = 0x8, scoped, tag = 'scoped memory for tpu_custom_call.1']
    #allocation4 [shape = 's32[2]{0}', space=sflag, size = 0x8, scoped, tag = 'scoped memory for tpu_custom_call.1']
    #allocation5 [shape = 'u8[1835008]{0}', space=vmem, size = 0x1c0000, scoped, tag = 'input window, operand 1, single buffered']
    #allocation6 [shape = 's32[1]{0}', space=sflag, size = 0x4, scoped, tag = 'scoped memory for tpu_custom_call.1']
    #allocation7 [shape = 'u8[4096]{0}', space=vmem, size = 0x1000, scoped, tag = 'input window, operand 2, single buffered']
    #allocation8 [shape = 'u8[262144]{0}', space=vmem, size = 0x40000, scoped, tag = 'input window, operand 3, single buffered']
    #allocation9 [shape = 's32[1]{0}', space=sflag, size = 0x4, scoped, tag = 'scoped memory for tpu_custom_call.1']
    #allocation10 [shape = 'u8[512]{0}', space=vmem, size = 0x400, scoped, tag = 'input window, operand 4, single buffered']
    #allocation11 [shape = 'u8[8192]{0}', space=vmem, size = 0x2000, scoped, tag = 'output window, operand 0']
    %10 = vsyncpa [#allocation3], 0
    %s11 = scalar_lea.sflag [#allocation3], 1
    %12 = vsyncpa %s11, 0
    %13 = vsyncpa [#allocation6], 0
    %14 = vsyncpa [#allocation9], 0
    %15 = vsyncpa [#allocation4], 0
    %s16 = scalar_lea.sflag [#allocation4], 1
    %17 = vsyncpa %s16, 0
    loop: start=0, step=1, limit=4
    $region2: #{tpu_custom_call.1} parent=1 // loop_pre_header
      _
    $region3: #{tpu_custom_call.1} parent=1 // loop_header
      %s19 = sphi 0, %s23
      %p20 = scmp.ge.s32.totalorder %s19, 4
      %s29 = sphi 0, %s31
      %s32 = sphi 0, %s29
      %s33 = sphi 0, %s32
      %s49 = sphi 0, %s33
      %s53 = sphi 0, %s53
      %s55 = sphi 0, %s53
      %s56 = sphi 0, %s55
      %s70 = sphi 0, %s56
      %s74 = sphi 0, %s74
      %s76 = sphi 0, %s74
      %s77 = sphi 0, %s76
      %s91 = sphi 0, %s77
      %s95 = sphi 0, %s95
      %s97 = sphi 0, %s95
      %s98 = sphi 0, %s97
      %s112 = sphi 0, %s98
      %s116 = sphi 0, %s116
      %s118 = sphi 0, %s116
      %s119 = sphi 0, %s118
      %s133 = sphi 0, %s119
      %s139 = sphi 0, %s141
      %s142 = sphi 0, %s139
      %s143 = sphi 0, %s142
      %s159 = sphi 0, %s143
    $region4: #{tpu_custom_call.1} parent=1 // loop_header_branch
      %22 = sbr.rel (%p20) target = $region8
    $region5: #{tpu_custom_call.1} parent=1 // loop_body
      %s24 = ssub.s32 %s19, 1
      %s25 = ssub.s32 %s19, 2
      %s26 = sadd.s32 %s19, 1
      %s27 = ssub.s32 %s19, %s26
      %p28 = scmp.eq.s32.totalorder %s27, 0
      %s30 = sadd.s32 %s29, 1
      %s31 = scalar_select %p28, %s29, %s30
      %p34 = pneg %p28
      %p35 = scmp.eq.s32.totalorder %s19, 1
      %p36 = por %p34, %p35
      %p37 = scmp.ne.s32.totalorder %s29, %s32
      %p38 = scmp.eq.s32.totalorder %s19, 0
      %p39 = por %p37, %p38
      %p40 = scmp.ne.s32.totalorder %s29, %s32
      %p41 = scmp.eq.s32.totalorder %s24, 1
      %p42 = por %p40, %p41
      %p43 = scmp.ne.s32.totalorder %s32, %s33
      %p44 = scmp.eq.s32.totalorder %s24, 0
      %p45 = por %p43, %p44
      %p46 = scmp.ne.s32.totalorder %s32, %s33
      %p47 = scmp.eq.s32.totalorder %s25, 1
      %p48 = por %p46, %p47
      %p50 = scmp.ne.s32.totalorder %s33, %s49
      %p51 = scmp.eq.s32.totalorder %s25, 0
      %p52 = por %p50, %p51
      %s54 = sadd.s32 %s53, 1
      %p57 = scmp.eq.s32.totalorder %s19, 1
      %p58 = scmp.ne.s32.totalorder %s53, %s55
      %p59 = scmp.eq.s32.totalorder %s19, 0
      %p60 = por %p58, %p59
      %p61 = scmp.ne.s32.totalorder %s53, %s55
      %p62 = scmp.eq.s32.totalorder %s24, 1
      %p63 = por %p61, %p62
      %p64 = scmp.ne.s32.totalorder %s55, %s56
      %p65 = scmp.eq.s32.totalorder %s24, 0
      %p66 = por %p64, %p65
      %p67 = scmp.ne.s32.totalorder %s55, %s56
      %p68 = scmp.eq.s32.totalorder %s25, 1
      %p69 = por %p67, %p68
      %p71 = scmp.ne.s32.totalorder %s56, %s70
      %p72 = scmp.eq.s32.totalorder %s25, 0
      %p73 = por %p71, %p72
      %s75 = sadd.s32 %s74, 1
      %p78 = scmp.eq.s32.totalorder %s19, 1
      %p79 = scmp.ne.s32.totalorder %s74, %s76
      %p80 = scmp.eq.s32.totalorder %s19, 0
      %p81 = por %p79, %p80
      %p82 = scmp.ne.s32.totalorder %s74, %s76
      %p83 = scmp.eq.s32.totalorder %s24, 1
      %p84 = por %p82, %p83
      %p85 = scmp.ne.s32.totalorder %s76, %s77
      %p86 = scmp.eq.s32.totalorder %s24, 0
      %p87 = por %p85, %p86
      %p88 = scmp.ne.s32.totalorder %s76, %s77
      %p89 = scmp.eq.s32.totalorder %s25, 1
      %p90 = por %p88, %p89
      %p92 = scmp.ne.s32.totalorder %s77, %s91
      %p93 = scmp.eq.s32.totalorder %s25, 0
      %p94 = por %p92, %p93
      %s96 = sadd.s32 %s95, 1
      %p99 = scmp.eq.s32.totalorder %s19, 1
      %p100 = scmp.ne.s32.totalorder %s95, %s97
      %p101 = scmp.eq.s32.totalorder %s19, 0
      %p102 = por %p100, %p101
      %p103 = scmp.ne.s32.totalorder %s95, %s97
      %p104 = scmp.eq.s32.totalorder %s24, 1
      %p105 = por %p103, %p104
      %p106 = scmp.ne.s32.totalorder %s97, %s98
      %p107 = scmp.eq.s32.totalorder %s24, 0
      %p108 = por %p106, %p107
      %p109 = scmp.ne.s32.totalorder %s97, %s98
      %p110 = scmp.eq.s32.totalorder %s25, 1
      %p111 = por %p109, %p110
      %p113 = scmp.ne.s32.totalorder %s98, %s112
      %p114 = scmp.eq.s32.totalorder %s25, 0
      %p115 = por %p113, %p114
      %s117 = sadd.s32 %s116, 1
      %p120 = scmp.eq.s32.totalorder %s19, 1
      %p121 = scmp.ne.s32.totalorder %s116, %s118
      %p122 = scmp.eq.s32.totalorder %s19, 0
      %p123 = por %p121, %p122
      %p124 = scmp.ne.s32.totalorder %s116, %s118
      %p125 = scmp.eq.s32.totalorder %s24, 1
      %p126 = por %p124, %p125
      %p127 = scmp.ne.s32.totalorder %s118, %s119
      %p128 = scmp.eq.s32.totalorder %s24, 0
      %p129 = por %p127, %p128
      %p130 = scmp.ne.s32.totalorder %s118, %s119
      %p131 = scmp.eq.s32.totalorder %s25, 1
      %p132 = por %p130, %p131
      %p134 = scmp.ne.s32.totalorder %s119, %s133
      %p135 = scmp.eq.s32.totalorder %s25, 0
      %p136 = por %p134, %p135
      %s137 = ssub.s32 %s19, %s26
      %p138 = scmp.eq.s32.totalorder %s137, 0
      %s140 = sadd.s32 %s139, 1
      %s141 = scalar_select %p138, %s139, %s140
      %p144 = pneg %p138
      %p145 = scmp.eq.s32.totalorder %s19, 1
      %p146 = por %p144, %p145
      %p147 = scmp.ne.s32.totalorder %s139, %s142
      %p148 = scmp.eq.s32.totalorder %s19, 0
      %p149 = por %p147, %p148
      %p150 = scmp.ne.s32.totalorder %s139, %s142
      %p151 = scmp.eq.s32.totalorder %s24, 1
      %p152 = por %p150, %p151
      %p153 = scmp.ne.s32.totalorder %s142, %s143
      %p154 = scmp.eq.s32.totalorder %s24, 0
      %p155 = por %p153, %p154
      %p156 = scmp.ne.s32.totalorder %s142, %s143
      %p157 = scmp.eq.s32.totalorder %s25, 1
      %p158 = por %p156, %p157
      %p160 = scmp.ne.s32.totalorder %s143, %s159
      %p161 = scmp.eq.s32.totalorder %s25, 0
      %p162 = por %p160, %p161
      %p163 = scmp.le.s32.totalorder 1, %s19
      %p164 = scmp.lt.s32.totalorder %s19, 3
      %p165 = pnand %p163, %p164
      %p166 = pneg %p165
      // Predicated region
      $region9: #{tpu_custom_call.1} parent=5 // pred_check
        _
      $region10: #{tpu_custom_call.1} parent=5 // pred_check_branch
        %168 = sbr.rel (%p165) target = $region12
      $region11: #{tpu_custom_call.1} parent=5 // pred_region
        %s169 = ssub.s32 %s19, 1
        // Predicated region
        $region13: #{tpu_custom_call.1} parent=11 // pred_check
          %p170 = pneg %p66
        $region14: #{tpu_custom_call.1} parent=11 // pred_check_branch
          %172 = sbr.rel (%p170) target = $region16
        $region15: #{tpu_custom_call.1} parent=11 // pred_region
          %s174 = ssub.s32 57344, 57344
          %175 = vsyncadd [#allocation6], %s174
          %s176 = sshll.u32 [#allocation5], 4
          %s177 = int_to_ptr.vmem [resolvable:$true] %s176
          %182 = dma.hbm_to_vmem [thread:$0]  %s1, 57344, %s177, [#allocation6], 512, 512, 32
        $region16: #{tpu_custom_call.1} parent=11 // pred_fallthru
          _
        // Predicated region
        $region17: #{tpu_custom_call.1} parent=11 // pred_check
          %p183 = pneg %p87
        $region18: #{tpu_custom_call.1} parent=11 // pred_check_branch
          %185 = sbr.rel (%p183) target = $region20
        $region19: #{tpu_custom_call.1} parent=11 // pred_region
          %s187 = ssub.s32 128, 128
          %188 = vsyncadd [#allocation6], %s187
          %s190 = sshll.u32 [#allocation7], 4
          %s191 = int_to_ptr.vmem [resolvable:$true] %s190
          %193 = dma.hbm_to_vmem [thread:$0]  %s2, 128, %s191, [#allocation6]
        $region20: #{tpu_custom_call.1} parent=11 // pred_fallthru
          _
        // Predicated region
        $region21: #{tpu_custom_call.1} parent=11 // pred_check
          %p194 = pneg %p108
        $region22: #{tpu_custom_call.1} parent=11 // pred_check_branch
          %196 = sbr.rel (%p194) target = $region24
        $region23: #{tpu_custom_call.1} parent=11 // pred_region
          %s198 = ssub.s32 8192, 8192
          %199 = vsyncadd [#allocation9], %s198
          %s200 = sshll.u32 [#allocation8], 4
          %s201 = int_to_ptr.vmem [resolvable:$true] %s200
          %206 = dma.hbm_to_vmem [thread:$0]  %s3, 8192, %s201, [#allocation9], 64, 64, 4
        $region24: #{tpu_custom_call.1} parent=11 // pred_fallthru
          _
        // Predicated region
        $region25: #{tpu_custom_call.1} parent=11 // pred_check
          %p207 = pneg %p129
        $region26: #{tpu_custom_call.1} parent=11 // pred_check_branch
          %209 = sbr.rel (%p207) target = $region28
        $region27: #{tpu_custom_call.1} parent=11 // pred_region
          %s211 = ssub.s32 16, 16
          %212 = vsyncadd [#allocation9], %s211
          %s214 = sshll.u32 [#allocation10], 4
          %s215 = int_to_ptr.vmem [resolvable:$true] %s214
          %217 = dma.hbm_to_vmem [thread:$0]  %s4, 16, %s215, [#allocation9]
        $region28: #{tpu_custom_call.1} parent=11 // pred_fallthru
          _
      $region12: #{tpu_custom_call.1} parent=5 // pred_fallthru
        _
      %p218 = scmp.lt.s32.totalorder %s19, 2
      // Predicated region
      $region29: #{tpu_custom_call.1} parent=5 // pred_check
        %p219 = pneg %p218
      $region30: #{tpu_custom_call.1} parent=5 // pred_check_branch
        %221 = sbr.rel (%p219) target = $region32
      $region31: #{tpu_custom_call.1} parent=5 // pred_region
        // Predicated region
        $region33: #{tpu_custom_call.1} parent=31 // pred_check
          %p222 = pneg %p39
        $region34: #{tpu_custom_call.1} parent=31 // pred_check_branch
          %224 = sbr.rel (%p222) target = $region36
        $region35: #{tpu_custom_call.1} parent=31 // pred_region
          %s225 = sand.u32 %s29, 1
          %s226 = scalar_lea.sflag [#allocation3], %s225
          %s227 = sand.u32 %s29, 1
          %s228 = smul.addr %s227, 28
          %s229 = scalar_lea.vmem [#allocation2], %s228
          %s231 = ssub.s32 448, 448
          %232 = vsyncadd %s226, %s231
          %s233 = smul.addr %s19, 7
          %s234 = smul.addr %s233, 64
          %s235 = scalar_lea.hbm %s0, %s234
          %s237 = sshll.u32 %s229, 4
          %s238 = int_to_ptr.vmem [resolvable:$true] %s237
          %240 = dma.hbm_to_vmem [thread:$0]  %s235, 448, %s238, %s226
        $region36: #{tpu_custom_call.1} parent=31 // pred_fallthru
          _
      $region32: #{tpu_custom_call.1} parent=5 // pred_fallthru
        _
      %p241 = scmp.le.s32.totalorder 1, %s19
      %p242 = scmp.lt.s32.totalorder %s19, 3
      %p243 = pnand %p241, %p242
      %p244 = pneg %p243
      // Predicated region
      $region37: #{tpu_custom_call.1} parent=5 // pred_check
        _
      $region38: #{tpu_custom_call.1} parent=5 // pred_check_branch
        %246 = sbr.rel (%p243) target = $region40
      $region39: #{tpu_custom_call.1} parent=5 // pred_region
        %s247 = ssub.s32 %s19, 1
        %s248 = sand.u32 %s32, 1
        %s249 = scalar_lea.sflag [#allocation3], %s248
        %s250 = sand.u32 %s32, 1
        %s251 = smul.addr %s250, 28
        %s252 = scalar_lea.vmem [#allocation2], %s251
        // Predicated region
        $region41: #{tpu_custom_call.1} parent=39 // pred_check
          %p253 = pneg %p45
        $region42: #{tpu_custom_call.1} parent=39 // pred_check_branch
          %255 = sbr.rel (%p253) target = $region44
        $region43: #{tpu_custom_call.1} parent=39 // pred_region
          %256 = dma.done %s249, 448
        $region44: #{tpu_custom_call.1} parent=39 // pred_fallthru
          _
        // Predicated region
        $region45: #{tpu_custom_call.1} parent=39 // pred_check
          %p257 = pneg %p66
        $region46: #{tpu_custom_call.1} parent=39 // pred_check_branch
          %259 = sbr.rel (%p257) target = $region48
        $region47: #{tpu_custom_call.1} parent=39 // pred_region
          %260 = dma.done [#allocation6], 57344
        $region48: #{tpu_custom_call.1} parent=39 // pred_fallthru
          _
        // Predicated region
        $region49: #{tpu_custom_call.1} parent=39 // pred_check
          %p261 = pneg %p87
        $region50: #{tpu_custom_call.1} parent=39 // pred_check_branch
          %263 = sbr.rel (%p261) target = $region52
        $region51: #{tpu_custom_call.1} parent=39 // pred_region
          %264 = dma.done [#allocation6], 128
        $region52: #{tpu_custom_call.1} parent=39 // pred_fallthru
          _
        // Predicated region
        $region53: #{tpu_custom_call.1} parent=39 // pred_check
          %p265 = pneg %p108
        $region54: #{tpu_custom_call.1} parent=39 // pred_check_branch
          %267 = sbr.rel (%p265) target = $region56
        $region55: #{tpu_custom_call.1} parent=39 // pred_region
          %268 = dma.done [#allocation9], 8192
        $region56: #{tpu_custom_call.1} parent=39 // pred_fallthru
          _
        // Predicated region
        $region57: #{tpu_custom_call.1} parent=39 // pred_check
          %p269 = pneg %p129
        $region58: #{tpu_custom_call.1} parent=39 // pred_check_branch
          %271 = sbr.rel (%p269) target = $region60
        $region59: #{tpu_custom_call.1} parent=39 // pred_region
          %272 = dma.done [#allocation9], 16
        $region60: #{tpu_custom_call.1} parent=39 // pred_fallthru
          _
        %s273 = sand.u32 %s32, 1
        %s274 = scalar_lea.sflag [#allocation3], %s273
        %s275 = sand.u32 %s32, 1
        %s276 = smul.addr %s275, 28
        %s277 = scalar_lea.vmem [#allocation2], %s276
        %p278 = pneg %p45
        %p279 = pneg %p42
        %p280 = pneg %p66
        %p281 = pneg %p63
        %p282 = pneg %p87
        %p283 = pneg %p84
        %p284 = pneg %p108
        %p285 = pneg %p105
        %p286 = pneg %p129
        %p287 = pneg %p126
        %p288 = pneg %p155
        %p289 = pneg %p152
        %s290 = sand.u32 %s142, 1
        %s291 = scalar_lea.sflag [#allocation4], %s290
        %s292 = sand.u32 %s142, 1
        %s293 = smul.addr %s292, 8
        %s294 = scalar_lea.vmem [#allocation11], %s293
        %v296 = vld [vmem:[%s252] sm:$0xff]
        %v297 = vld [vmem:[%s252 + $0x8] sm:$0xff]
        %v298 = vld [vmem:[%s252 + $0x10] sm:$0xff]
        %v299 = vld [vmem:[%s252 + $0x18] sm:$0xf]
        %v300 = vld [vmem:[#allocation5] sm:$0xff]
        %v301 = vld [vmem:[#allocation5 + $0x8] sm:$0xff]
        %v302 = vld [vmem:[#allocation5 + $0x10] sm:$0xff]
        %v303 = vld [vmem:[#allocation5 + $0x18] sm:$0xff]
        %v304 = vld [vmem:[#allocation5 + $0x20] sm:$0xff]
        %v305 = vld [vmem:[#allocation5 + $0x28] sm:$0xff]
        %v306 = vld [vmem:[#allocation5 + $0x30] sm:$0xff]
        %v307 = vld [vmem:[#allocation5 + $0x38] sm:$0xff]
        %v308 = vld [vmem:[#allocation5 + $0x40] sm:$0xff]
        %v309 = vld [vmem:[#allocation5 + $0x48] sm:$0xff]
        %v310 = vld [vmem:[#allocation5 + $0x50] sm:$0xff]
        %v311 = vld [vmem:[#allocation5 + $0x58] sm:$0xff]
        %v312 = vld [vmem:[#allocation5 + $0x60] sm:$0xff]
        %v313 = vld [vmem:[#allocation5 + $0x68] sm:$0xff]
        %v314 = vld [vmem:[#allocation5 + $0x70] sm:$0xff]
        %v315 = vld [vmem:[#allocation5 + $0x78] sm:$0xff]
        %v316 = vld [vmem:[#allocation5 + $0x80] sm:$0xff]
        %v317 = vld [vmem:[#allocation5 + $0x88] sm:$0xff]
        %v318 = vld [vmem:[#allocation5 + $0x90] sm:$0xff]
        %v319 = vld [vmem:[#allocation5 + $0x98] sm:$0xff]
        %v320 = vld [vmem:[#allocation5 + $0xa0] sm:$0xff]
        %v321 = vld [vmem:[#allocation5 + $0xa8] sm:$0xff]
        %v322 = vld [vmem:[#allocation5 + $0xb0] sm:$0xff]
        %v323 = vld [vmem:[#allocation5 + $0xb8] sm:$0xff]
        %v324 = vld [vmem:[#allocation5 + $0xc0] sm:$0xff]
        %v325 = vld [vmem:[#allocation5 + $0xc8] sm:$0xff]
        %v326 = vld [vmem:[#allocation5 + $0xd0] sm:$0xff]
        %v327 = vld [vmem:[#allocation5 + $0xd8] sm:$0xff]
        %v328 = vld [vmem:[#allocation5 + $0xe0] sm:$0xff]
        %v329 = vld [vmem:[#allocation5 + $0xe8] sm:$0xff]
        %v330 = vld [vmem:[#allocation5 + $0xf0] sm:$0xff]
        %v331 = vld [vmem:[#allocation5 + $0xf8] sm:$0xff]
        %v332 = vld [vmem:[#allocation5 + $0x100] sm:$0xff]
        %v333 = vld [vmem:[#allocation5 + $0x108] sm:$0xff]
        %v334 = vld [vmem:[#allocation5 + $0x110] sm:$0xff]
        %v335 = vld [vmem:[#allocation5 + $0x118] sm:$0xff]
        %v336 = vld [vmem:[#allocation5 + $0x120] sm:$0xff]
        %v337 = vld [vmem:[#allocation5 + $0x128] sm:$0xff]
        %v338 = vld [vmem:[#allocation5 + $0x130] sm:$0xff]
        %v339 = vld [vmem:[#allocation5 + $0x138] sm:$0xff]
        %v340 = vld [vmem:[#allocation5 + $0x140] sm:$0xff]
        %v341 = vld [vmem:[#allocation5 + $0x148] sm:$0xff]
        %v342 = vld [vmem:[#allocation5 + $0x150] sm:$0xff]
        %v343 = vld [vmem:[#allocation5 + $0x158] sm:$0xff]
        %v344 = vld [vmem:[#allocation5 + $0x160] sm:$0xff]
        %v345 = vld [vmem:[#allocation5 + $0x168] sm:$0xff]
        %v346 = vld [vmem:[#allocation5 + $0x170] sm:$0xff]
        %v347 = vld [vmem:[#allocation5 + $0x178] sm:$0xff]
        %v348 = vld [vmem:[#allocation5 + $0x180] sm:$0xff]
        %v349 = vld [vmem:[#allocation5 + $0x188] sm:$0xff]
        %v350 = vld [vmem:[#allocation5 + $0x190] sm:$0xff]
        %v351 = vld [vmem:[#allocation5 + $0x198] sm:$0xff]
        %v352 = vld [vmem:[#allocation5 + $0x1a0] sm:$0xff]
        %v353 = vld [vmem:[#allocation5 + $0x1a8] sm:$0xff]
        %v354 = vld [vmem:[#allocation5 + $0x1b0] sm:$0xff]
        %v355 = vld [vmem:[#allocation5 + $0x1b8] sm:$0xff]
        %v356 = vld [vmem:[#allocation5 + $0x1c0] sm:$0xff]
        %v357 = vld [vmem:[#allocation5 + $0x1c8] sm:$0xff]
        %v358 = vld [vmem:[#allocation5 + $0x1d0] sm:$0xff]
        %v359 = vld [vmem:[#allocation5 + $0x1d8] sm:$0xff]
        %v360 = vld [vmem:[#allocation5 + $0x1e0] sm:$0xff]
        %v361 = vld [vmem:[#allocation5 + $0x1e8] sm:$0xff]
        %v362 = vld [vmem:[#allocation5 + $0x1f0] sm:$0xff]
        %v363 = vld [vmem:[#allocation5 + $0x1f8] sm:$0xff]
        %v364 = vld [vmem:[#allocation5 + $0x200] sm:$0xff]
        %v365 = vld [vmem:[#allocation5 + $0x208] sm:$0xff]
        %v366 = vld [vmem:[#allocation5 + $0x210] sm:$0xff]
        %v367 = vld [vmem:[#allocation5 + $0x218] sm:$0xff]
        %v368 = vld [vmem:[#allocation5 + $0x220] sm:$0xff]
        %v369 = vld [vmem:[#allocation5 + $0x228] sm:$0xff]
        %v370 = vld [vmem:[#allocation5 + $0x230] sm:$0xff]
        %v371 = vld [vmem:[#allocation5 + $0x238] sm:$0xff]
        %v372 = vld [vmem:[#allocation5 + $0x240] sm:$0xff]
        %v373 = vld [vmem:[#allocation5 + $0x248] sm:$0xff]
        %v374 = vld [vmem:[#allocation5 + $0x250] sm:$0xff]
        %v375 = vld [vmem:[#allocation5 + $0x258] sm:$0xff]
        %v376 = vld [vmem:[#allocation5 + $0x260] sm:$0xff]
        %v377 = vld [vmem:[#allocation5 + $0x268] sm:$0xff]
        %v378 = vld [vmem:[#allocation5 + $0x270] sm:$0xff]
        %v379 = vld [vmem:[#allocation5 + $0x278] sm:$0xff]
        %v380 = vld [vmem:[#allocation5 + $0x280] sm:$0xff]
        %v381 = vld [vmem:[#allocation5 + $0x288] sm:$0xff]
        %v382 = vld [vmem:[#allocation5 + $0x290] sm:$0xff]
        %v383 = vld [vmem:[#allocation5 + $0x298] sm:$0xff]
        %v384 = vld [vmem:[#allocation5 + $0x2a0] sm:$0xff]
        %v385 = vld [vmem:[#allocation5 + $0x2a8] sm:$0xff]
        %v386 = vld [vmem:[#allocation5 + $0x2b0] sm:$0xff]
        %v387 = vld [vmem:[#allocation5 + $0x2b8] sm:$0xff]
        %v388 = vld [vmem:[#allocation5 + $0x2c0] sm:$0xff]
        %v389 = vld [vmem:[#allocation5 + $0x2c8] sm:$0xff]
        %v390 = vld [vmem:[#allocation5 + $0x2d0] sm:$0xff]
        %v391 = vld [vmem:[#allocation5 + $0x2d8] sm:$0xff]
        %v392 = vld [vmem:[#allocation5 + $0x2e0] sm:$0xff]
        %v393 = vld [vmem:[#allocation5 + $0x2e8] sm:$0xff]
        %v394 = vld [vmem:[#allocation5 + $0x2f0] sm:$0xff]
        %v395 = vld [vmem:[#allocation5 + $0x2f8] sm:$0xff]
        %v396 = vld [vmem:[#allocation5 + $0x300] sm:$0xff]
        %v397 = vld [vmem:[#allocation5 + $0x308] sm:$0xff]
        %v398 = vld [vmem:[#allocation5 + $0x310] sm:$0xff]
        %v399 = vld [vmem:[#allocation5 + $0x318] sm:$0xff]
        %v400 = vld [vmem:[#allocation5 + $0x320] sm:$0xff]
        %v401 = vld [vmem:[#allocation5 + $0x328] sm:$0xff]
        %v402 = vld [vmem:[#allocation5 + $0x330] sm:$0xff]
        %v403 = vld [vmem:[#allocation5 + $0x338] sm:$0xff]
        %v404 = vld [vmem:[#allocation5 + $0x340] sm:$0xff]
        %v405 = vld [vmem:[#allocation5 + $0x348] sm:$0xff]
        %v406 = vld [vmem:[#allocation5 + $0x350] sm:$0xff]
        %v407 = vld [vmem:[#allocation5 + $0x358] sm:$0xff]
        %v408 = vld [vmem:[#allocation5 + $0x360] sm:$0xff]
        %v409 = vld [vmem:[#allocation5 + $0x368] sm:$0xff]
        %v410 = vld [vmem:[#allocation5 + $0x370] sm:$0xff]
        %v411 = vld [vmem:[#allocation5 + $0x378] sm:$0xff]
        %v412 = vld [vmem:[#allocation5 + $0x380] sm:$0xff]
        %v413 = vld [vmem:[#allocation5 + $0x388] sm:$0xff]
        %v414 = vld [vmem:[#allocation5 + $0x390] sm:$0xff]
        %v415 = vld [vmem:[#allocation5 + $0x398] sm:$0xff]
        %v416 = vld [vmem:[#allocation5 + $0x3a0] sm:$0xff]
        %v417 = vld [vmem:[#allocation5 + $0x3a8] sm:$0xff]
        %v418 = vld [vmem:[#allocation5 + $0x3b0] sm:$0xff]
        %v419 = vld [vmem:[#allocation5 + $0x3b8] sm:$0xff]
        %v420 = vld [vmem:[#allocation5 + $0x3c0] sm:$0xff]
        %v421 = vld [vmem:[#allocation5 + $0x3c8] sm:$0xff]
        %v422 = vld [vmem:[#allocation5 + $0x3d0] sm:$0xff]
        %v423 = vld [vmem:[#allocation5 + $0x3d8] sm:$0xff]
        %v424 = vld [vmem:[#allocation5 + $0x3e0] sm:$0xff]
        %v425 = vld [vmem:[#allocation5 + $0x3e8] sm:$0xff]
        %v426 = vld [vmem:[#allocation5 + $0x3f0] sm:$0xff]
        %v427 = vld [vmem:[#allocation5 + $0x3f8] sm:$0xff]
        %v428 = vld [vmem:[#allocation5 + $0x400] sm:$0xff]
        %v429 = vld [vmem:[#allocation5 + $0x408] sm:$0xff]
        %v430 = vld [vmem:[#allocation5 + $0x410] sm:$0xff]
        %v431 = vld [vmem:[#allocation5 + $0x418] sm:$0xff]
        %v432 = vld [vmem:[#allocation5 + $0x420] sm:$0xff]
        %v433 = vld [vmem:[#allocation5 + $0x428] sm:$0xff]
        %v434 = vld [vmem:[#allocation5 + $0x430] sm:$0xff]
        %v435 = vld [vmem:[#allocation5 + $0x438] sm:$0xff]
        %v436 = vld [vmem:[#allocation5 + $0x440] sm:$0xff]
        %v437 = vld [vmem:[#allocation5 + $0x448] sm:$0xff]
        %v438 = vld [vmem:[#allocation5 + $0x450] sm:$0xff]
        %v439 = vld [vmem:[#allocation5 + $0x458] sm:$0xff]
        %v440 = vld [vmem:[#allocation5 + $0x460] sm:$0xff]
        %v441 = vld [vmem:[#allocation5 + $0x468] sm:$0xff]
        %v442 = vld [vmem:[#allocation5 + $0x470] sm:$0xff]
        %v443 = vld [vmem:[#allocation5 + $0x478] sm:$0xff]
        %v444 = vld [vmem:[#allocation5 + $0x480] sm:$0xff]
        %v445 = vld [vmem:[#allocation5 + $0x488] sm:$0xff]
        %v446 = vld [vmem:[#allocation5 + $0x490] sm:$0xff]
        %v447 = vld [vmem:[#allocation5 + $0x498] sm:$0xff]
        %v448 = vld [vmem:[#allocation5 + $0x4a0] sm:$0xff]
        %v449 = vld [vmem:[#allocation5 + $0x4a8] sm:$0xff]
        %v450 = vld [vmem:[#allocation5 + $0x4b0] sm:$0xff]
        %v451 = vld [vmem:[#allocation5 + $0x4b8] sm:$0xff]
        %v452 = vld [vmem:[#allocation5 + $0x4c0] sm:$0xff]
        %v453 = vld [vmem:[#allocation5 + $0x4c8] sm:$0xff]
        %v454 = vld [vmem:[#allocation5 + $0x4d0] sm:$0xff]
        %v455 = vld [vmem:[#allocation5 + $0x4d8] sm:$0xff]
        %v456 = vld [vmem:[#allocation5 + $0x4e0] sm:$0xff]
        %v457 = vld [vmem:[#allocation5 + $0x4e8] sm:$0xff]
        %v458 = vld [vmem:[#allocation5 + $0x4f0] sm:$0xff]
        %v459 = vld [vmem:[#allocation5 + $0x4f8] sm:$0xff]
        %v460 = vld [vmem:[#allocation5 + $0x500] sm:$0xff]
        %v461 = vld [vmem:[#allocation5 + $0x508] sm:$0xff]
        %v462 = vld [vmem:[#allocation5 + $0x510] sm:$0xff]
        %v463 = vld [vmem:[#allocation5 + $0x518] sm:$0xff]
        %v464 = vld [vmem:[#allocation5 + $0x520] sm:$0xff]
        %v465 = vld [vmem:[#allocation5 + $0x528] sm:$0xff]
        %v466 = vld [vmem:[#allocation5 + $0x530] sm:$0xff]
        %v467 = vld [vmem:[#allocation5 + $0x538] sm:$0xff]
        %v468 = vld [vmem:[#allocation5 + $0x540] sm:$0xff]
        %v469 = vld [vmem:[#allocation5 + $0x548] sm:$0xff]
        %v470 = vld [vmem:[#allocation5 + $0x550] sm:$0xff]
        %v471 = vld [vmem:[#allocation5 + $0x558] sm:$0xff]
        %v472 = vld [vmem:[#allocation5 + $0x560] sm:$0xff]
        %v473 = vld [vmem:[#allocation5 + $0x568] sm:$0xff]
        %v474 = vld [vmem:[#allocation5 + $0x570] sm:$0xff]
        %v475 = vld [vmem:[#allocation5 + $0x578] sm:$0xff]
        %v476 = vld [vmem:[#allocation5 + $0x580] sm:$0xff]
        %v477 = vld [vmem:[#allocation5 + $0x588] sm:$0xff]
        %v478 = vld [vmem:[#allocation5 + $0x590] sm:$0xff]
        %v479 = vld [vmem:[#allocation5 + $0x598] sm:$0xff]
        %v480 = vld [vmem:[#allocation5 + $0x5a0] sm:$0xff]
        %v481 = vld [vmem:[#allocation5 + $0x5a8] sm:$0xff]
        %v482 = vld [vmem:[#allocation5 + $0x5b0] sm:$0xff]
        %v483 = vld [vmem:[#allocation5 + $0x5b8] sm:$0xff]
        %v484 = vld [vmem:[#allocation5 + $0x5c0] sm:$0xff]
        %v485 = vld [vmem:[#allocation5 + $0x5c8] sm:$0xff]
        %v486 = vld [vmem:[#allocation5 + $0x5d0] sm:$0xff]
        %v487 = vld [vmem:[#allocation5 + $0x5d8] sm:$0xff]
        %v488 = vld [vmem:[#allocation5 + $0x5e0] sm:$0xff]
        %v489 = vld [vmem:[#allocation5 + $0x5e8] sm:$0xff]
        %v490 = vld [vmem:[#allocation5 + $0x5f0] sm:$0xff]
        %v491 = vld [vmem:[#allocation5 + $0x5f8] sm:$0xff]
        %v492 = vld [vmem:[#allocation5 + $0x600] sm:$0xff]
        %v493 = vld [vmem:[#allocation5 + $0x608] sm:$0xff]
        %v494 = vld [vmem:[#allocation5 + $0x610] sm:$0xff]
        %v495 = vld [vmem:[#allocation5 + $0x618] sm:$0xff]
        %v496 = vld [vmem:[#allocation5 + $0x620] sm:$0xff]
        %v497 = vld [vmem:[#allocation5 + $0x628] sm:$0xff]
        %v498 = vld [vmem:[#allocation5 + $0x630] sm:$0xff]
        %v499 = vld [vmem:[#allocation5 + $0x638] sm:$0xff]
        %v500 = vld [vmem:[#allocation5 + $0x640] sm:$0xff]
        %v501 = vld [vmem:[#allocation5 + $0x648] sm:$0xff]
        %v502 = vld [vmem:[#allocation5 + $0x650] sm:$0xff]
        %v503 = vld [vmem:[#allocation5 + $0x658] sm:$0xff]
        %v504 = vld [vmem:[#allocation5 + $0x660] sm:$0xff]
        %v505 = vld [vmem:[#allocation5 + $0x668] sm:$0xff]
        %v506 = vld [vmem:[#allocation5 + $0x670] sm:$0xff]
        %v507 = vld [vmem:[#allocation5 + $0x678] sm:$0xff]
        %v508 = vld [vmem:[#allocation5 + $0x680] sm:$0xff]
        %v509 = vld [vmem:[#allocation5 + $0x688] sm:$0xff]
        %v510 = vld [vmem:[#allocation5 + $0x690] sm:$0xff]
        %v511 = vld [vmem:[#allocation5 + $0x698] sm:$0xff]
        %v512 = vld [vmem:[#allocation5 + $0x6a0] sm:$0xff]
        %v513 = vld [vmem:[#allocation5 + $0x6a8] sm:$0xff]
        %v514 = vld [vmem:[#allocation5 + $0x6b0] sm:$0xff]
        %v515 = vld [vmem:[#allocation5 + $0x6b8] sm:$0xff]
        %v516 = vld [vmem:[#allocation5 + $0x6c0] sm:$0xff]
        %v517 = vld [vmem:[#allocation5 + $0x6c8] sm:$0xff]
        %v518 = vld [vmem:[#allocation5 + $0x6d0] sm:$0xff]
        %v519 = vld [vmem:[#allocation5 + $0x6d8] sm:$0xff]
        %v520 = vld [vmem:[#allocation5 + $0x6e0] sm:$0xff]
        %v521 = vld [vmem:[#allocation5 + $0x6e8] sm:$0xff]
        %v522 = vld [vmem:[#allocation5 + $0x6f0] sm:$0xff]
        %v523 = vld [vmem:[#allocation5 + $0x6f8] sm:$0xff]
        %v524 = vld [vmem:[#allocation5 + $0x700] sm:$0xff]
        %v525 = vld [vmem:[#allocation5 + $0x708] sm:$0xff]
        %v526 = vld [vmem:[#allocation5 + $0x710] sm:$0xff]
        %v527 = vld [vmem:[#allocation5 + $0x718] sm:$0xff]
        %v528 = vld [vmem:[#allocation5 + $0x720] sm:$0xff]
        %v529 = vld [vmem:[#allocation5 + $0x728] sm:$0xff]
        %v530 = vld [vmem:[#allocation5 + $0x730] sm:$0xff]
        %v531 = vld [vmem:[#allocation5 + $0x738] sm:$0xff]
        %v532 = vld [vmem:[#allocation5 + $0x740] sm:$0xff]
        %v533 = vld [vmem:[#allocation5 + $0x748] sm:$0xff]
        %v534 = vld [vmem:[#allocation5 + $0x750] sm:$0xff]
        %v535 = vld [vmem:[#allocation5 + $0x758] sm:$0xff]
        %v536 = vld [vmem:[#allocation5 + $0x760] sm:$0xff]
        %v537 = vld [vmem:[#allocation5 + $0x768] sm:$0xff]
        %v538 = vld [vmem:[#allocation5 + $0x770] sm:$0xff]
        %v539 = vld [vmem:[#allocation5 + $0x778] sm:$0xff]
        %v540 = vld [vmem:[#allocation5 + $0x780] sm:$0xff]
        %v541 = vld [vmem:[#allocation5 + $0x788] sm:$0xff]
        %v542 = vld [vmem:[#allocation5 + $0x790] sm:$0xff]
        %v543 = vld [vmem:[#allocation5 + $0x798] sm:$0xff]
        %v544 = vld [vmem:[#allocation5 + $0x7a0] sm:$0xff]
        %v545 = vld [vmem:[#allocation5 + $0x7a8] sm:$0xff]
        %v546 = vld [vmem:[#allocation5 + $0x7b0] sm:$0xff]
        %v547 = vld [vmem:[#allocation5 + $0x7b8] sm:$0xff]
        %v548 = vld [vmem:[#allocation5 + $0x7c0] sm:$0xff]
        %v549 = vld [vmem:[#allocation5 + $0x7c8] sm:$0xff]
        %v550 = vld [vmem:[#allocation5 + $0x7d0] sm:$0xff]
        %v551 = vld [vmem:[#allocation5 + $0x7d8] sm:$0xff]
        %v552 = vld [vmem:[#allocation5 + $0x7e0] sm:$0xff]
        %v553 = vld [vmem:[#allocation5 + $0x7e8] sm:$0xff]
        %v554 = vld [vmem:[#allocation5 + $0x7f0] sm:$0xff]
        %v555 = vld [vmem:[#allocation5 + $0x7f8] sm:$0xff]
        %v556 = vld [vmem:[#allocation5 + $0x800] sm:$0xff]
        %v557 = vld [vmem:[#allocation5 + $0x808] sm:$0xff]
        %v558 = vld [vmem:[#allocation5 + $0x810] sm:$0xff]
        %v559 = vld [vmem:[#allocation5 + $0x818] sm:$0xff]
        %v560 = vld [vmem:[#allocation5 + $0x820] sm:$0xff]
        %v561 = vld [vmem:[#allocation5 + $0x828] sm:$0xff]
        %v562 = vld [vmem:[#allocation5 + $0x830] sm:$0xff]
        %v563 = vld [vmem:[#allocation5 + $0x838] sm:$0xff]
        %v564 = vld [vmem:[#allocation5 + $0x840] sm:$0xff]
        %v565 = vld [vmem:[#allocation5 + $0x848] sm:$0xff]
        %v566 = vld [vmem:[#allocation5 + $0x850] sm:$0xff]
        %v567 = vld [vmem:[#allocation5 + $0x858] sm:$0xff]
        %v568 = vld [vmem:[#allocation5 + $0x860] sm:$0xff]
        %v569 = vld [vmem:[#allocation5 + $0x868] sm:$0xff]
        %v570 = vld [vmem:[#allocation5 + $0x870] sm:$0xff]
        %v571 = vld [vmem:[#allocation5 + $0x878] sm:$0xff]
        %v572 = vld [vmem:[#allocation5 + $0x880] sm:$0xff]
        %v573 = vld [vmem:[#allocation5 + $0x888] sm:$0xff]
        %v574 = vld [vmem:[#allocation5 + $0x890] sm:$0xff]
        %v575 = vld [vmem:[#allocation5 + $0x898] sm:$0xff]
        %v576 = vld [vmem:[#allocation5 + $0x8a0] sm:$0xff]
        %v577 = vld [vmem:[#allocation5 + $0x8a8] sm:$0xff]
        %v578 = vld [vmem:[#allocation5 + $0x8b0] sm:$0xff]
        %v579 = vld [vmem:[#allocation5 + $0x8b8] sm:$0xff]
        %v580 = vld [vmem:[#allocation5 + $0x8c0] sm:$0xff]
        %v581 = vld [vmem:[#allocation5 + $0x8c8] sm:$0xff]
        %v582 = vld [vmem:[#allocation5 + $0x8d0] sm:$0xff]
        %v583 = vld [vmem:[#allocation5 + $0x8d8] sm:$0xff]
        %v584 = vld [vmem:[#allocation5 + $0x8e0] sm:$0xff]
        %v585 = vld [vmem:[#allocation5 + $0x8e8] sm:$0xff]
        %v586 = vld [vmem:[#allocation5 + $0x8f0] sm:$0xff]
        %v587 = vld [vmem:[#allocation5 + $0x8f8] sm:$0xff]
        %v588 = vld [vmem:[#allocation5 + $0x900] sm:$0xff]
        %v589 = vld [vmem:[#allocation5 + $0x908] sm:$0xff]
        %v590 = vld [vmem:[#allocation5 + $0x910] sm:$0xff]
        %v591 = vld [vmem:[#allocation5 + $0x918] sm:$0xff]
        %v592 = vld [vmem:[#allocation5 + $0x920] sm:$0xff]
        %v593 = vld [vmem:[#allocation5 + $0x928] sm:$0xff]
        %v594 = vld [vmem:[#allocation5 + $0x930] sm:$0xff]
        %v595 = vld [vmem:[#allocation5 + $0x938] sm:$0xff]
        %v596 = vld [vmem:[#allocation5 + $0x940] sm:$0xff]
        %v597 = vld [vmem:[#allocation5 + $0x948] sm:$0xff]
        %v598 = vld [vmem:[#allocation5 + $0x950] sm:$0xff]
        %v599 = vld [vmem:[#allocation5 + $0x958] sm:$0xff]
        %v600 = vld [vmem:[#allocation5 + $0x960] sm:$0xff]
        %v601 = vld [vmem:[#allocation5 + $0x968] sm:$0xff]
        %v602 = vld [vmem:[#allocation5 + $0x970] sm:$0xff]
        %v603 = vld [vmem:[#allocation5 + $0x978] sm:$0xff]
        %v604 = vld [vmem:[#allocation5 + $0x980] sm:$0xff]
        %v605 = vld [vmem:[#allocation5 + $0x988] sm:$0xff]
        %v606 = vld [vmem:[#allocation5 + $0x990] sm:$0xff]
        %v607 = vld [vmem:[#allocation5 + $0x998] sm:$0xff]
        %v608 = vld [vmem:[#allocation5 + $0x9a0] sm:$0xff]
        %v609 = vld [vmem:[#allocation5 + $0x9a8] sm:$0xff]
        %v610 = vld [vmem:[#allocation5 + $0x9b0] sm:$0xff]
        %v611 = vld [vmem:[#allocation5 + $0x9b8] sm:$0xff]
        %v612 = vld [vmem:[#allocation5 + $0x9c0] sm:$0xff]
        %v613 = vld [vmem:[#allocation5 + $0x9c8] sm:$0xff]
        %v614 = vld [vmem:[#allocation5 + $0x9d0] sm:$0xff]
        %v615 = vld [vmem:[#allocation5 + $0x9d8] sm:$0xff]
        %v616 = vld [vmem:[#allocation5 + $0x9e0] sm:$0xff]
        %v617 = vld [vmem:[#allocation5 + $0x9e8] sm:$0xff]
        %v618 = vld [vmem:[#allocation5 + $0x9f0] sm:$0xff]
        %v619 = vld [vmem:[#allocation5 + $0x9f8] sm:$0xff]
        %v620 = vld [vmem:[#allocation5 + $0xa00] sm:$0xff]
        %v621 = vld [vmem:[#allocation5 + $0xa08] sm:$0xff]
        %v622 = vld [vmem:[#allocation5 + $0xa10] sm:$0xff]
        %v623 = vld [vmem:[#allocation5 + $0xa18] sm:$0xff]
        %v624 = vld [vmem:[#allocation5 + $0xa20] sm:$0xff]
        %v625 = vld [vmem:[#allocation5 + $0xa28] sm:$0xff]
        %v626 = vld [vmem:[#allocation5 + $0xa30] sm:$0xff]
        %v627 = vld [vmem:[#allocation5 + $0xa38] sm:$0xff]
        %v628 = vld [vmem:[#allocation5 + $0xa40] sm:$0xff]
        %v629 = vld [vmem:[#allocation5 + $0xa48] sm:$0xff]
        %v630 = vld [vmem:[#allocation5 + $0xa50] sm:$0xff]
        %v631 = vld [vmem:[#allocation5 + $0xa58] sm:$0xff]
        %v632 = vld [vmem:[#allocation5 + $0xa60] sm:$0xff]
        %v633 = vld [vmem:[#allocation5 + $0xa68] sm:$0xff]
        %v634 = vld [vmem:[#allocation5 + $0xa70] sm:$0xff]
        %v635 = vld [vmem:[#allocation5 + $0xa78] sm:$0xff]
        %v636 = vld [vmem:[#allocation5 + $0xa80] sm:$0xff]
        %v637 = vld [vmem:[#allocation5 + $0xa88] sm:$0xff]
        %v638 = vld [vmem:[#allocation5 + $0xa90] sm:$0xff]
        %v639 = vld [vmem:[#allocation5 + $0xa98] sm:$0xff]
        %v640 = vld [vmem:[#allocation5 + $0xaa0] sm:$0xff]
        %v641 = vld [vmem:[#allocation5 + $0xaa8] sm:$0xff]
        %v642 = vld [vmem:[#allocation5 + $0xab0] sm:$0xff]
        %v643 = vld [vmem:[#allocation5 + $0xab8] sm:$0xff]
        %v644 = vld [vmem:[#allocation5 + $0xac0] sm:$0xff]
        %v645 = vld [vmem:[#allocation5 + $0xac8] sm:$0xff]
        %v646 = vld [vmem:[#allocation5 + $0xad0] sm:$0xff]
        %v647 = vld [vmem:[#allocation5 + $0xad8] sm:$0xff]
        %v648 = vld [vmem:[#allocation5 + $0xae0] sm:$0xff]
        %v649 = vld [vmem:[#allocation5 + $0xae8] sm:$0xff]
        %v650 = vld [vmem:[#allocation5 + $0xaf0] sm:$0xff]
        %v651 = vld [vmem:[#allocation5 + $0xaf8] sm:$0xff]
        %v652 = vld [vmem:[#allocation5 + $0xb00] sm:$0xff]
        %v653 = vld [vmem:[#allocation5 + $0xb08] sm:$0xff]
        %v654 = vld [vmem:[#allocation5 + $0xb10] sm:$0xff]
        %v655 = vld [vmem:[#allocation5 + $0xb18] sm:$0xff]
        %v656 = vld [vmem:[#allocation5 + $0xb20] sm:$0xff]
        %v657 = vld [vmem:[#allocation5 + $0xb28] sm:$0xff]
        %v658 = vld [vmem:[#allocation5 + $0xb30] sm:$0xff]
        %v659 = vld [vmem:[#allocation5 + $0xb38] sm:$0xff]
        %v660 = vld [vmem:[#allocation5 + $0xb40] sm:$0xff]
        %v661 = vld [vmem:[#allocation5 + $0xb48] sm:$0xff]
        %v662 = vld [vmem:[#allocation5 + $0xb50] sm:$0xff]
        %v663 = vld [vmem:[#allocation5 + $0xb58] sm:$0xff]
        %v664 = vld [vmem:[#allocation5 + $0xb60] sm:$0xff]
        %v665 = vld [vmem:[#allocation5 + $0xb68] sm:$0xff]
        %v666 = vld [vmem:[#allocation5 + $0xb70] sm:$0xff]
        %v667 = vld [vmem:[#allocation5 + $0xb78] sm:$0xff]
        %v668 = vld [vmem:[#allocation5 + $0xb80] sm:$0xff]
        %v669 = vld [vmem:[#allocation5 + $0xb88] sm:$0xff]
        %v670 = vld [vmem:[#allocation5 + $0xb90] sm:$0xff]
        %v671 = vld [vmem:[#allocation5 + $0xb98] sm:$0xff]
        %v672 = vld [vmem:[#allocation5 + $0xba0] sm:$0xff]
        %v673 = vld [vmem:[#allocation5 + $0xba8] sm:$0xff]
        %v674 = vld [vmem:[#allocation5 + $0xbb0] sm:$0xff]
        %v675 = vld [vmem:[#allocation5 + $0xbb8] sm:$0xff]
        %v676 = vld [vmem:[#allocation5 + $0xbc0] sm:$0xff]
        %v677 = vld [vmem:[#allocation5 + $0xbc8] sm:$0xff]
        %v678 = vld [vmem:[#allocation5 + $0xbd0] sm:$0xff]
        %v679 = vld [vmem:[#allocation5 + $0xbd8] sm:$0xff]
        %v680 = vld [vmem:[#allocation5 + $0xbe0] sm:$0xff]
        %v681 = vld [vmem:[#allocation5 + $0xbe8] sm:$0xff]
        %v682 = vld [vmem:[#allocation5 + $0xbf0] sm:$0xff]
        %v683 = vld [vmem:[#allocation5 + $0xbf8] sm:$0xff]
        %v684 = vld [vmem:[#allocation5 + $0xc00] sm:$0xff]
        %v685 = vld [vmem:[#allocation5 + $0xc08] sm:$0xff]
        %v686 = vld [vmem:[#allocation5 + $0xc10] sm:$0xff]
        %v687 = vld [vmem:[#allocation5 + $0xc18] sm:$0xff]
        %v688 = vld [vmem:[#allocation5 + $0xc20] sm:$0xff]
        %v689 = vld [vmem:[#allocation5 + $0xc28] sm:$0xff]
        %v690 = vld [vmem:[#allocation5 + $0xc30] sm:$0xff]
        %v691 = vld [vmem:[#allocation5 + $0xc38] sm:$0xff]
        %v692 = vld [vmem:[#allocation5 + $0xc40] sm:$0xff]
        %v693 = vld [vmem:[#allocation5 + $0xc48] sm:$0xff]
        %v694 = vld [vmem:[#allocation5 + $0xc50] sm:$0xff]
        %v695 = vld [vmem:[#allocation5 + $0xc58] sm:$0xff]
        %v696 = vld [vmem:[#allocation5 + $0xc60] sm:$0xff]
        %v697 = vld [vmem:[#allocation5 + $0xc68] sm:$0xff]
        %v698 = vld [vmem:[#allocation5 + $0xc70] sm:$0xff]
        %v699 = vld [vmem:[#allocation5 + $0xc78] sm:$0xff]
        %v700 = vld [vmem:[#allocation5 + $0xc80] sm:$0xff]
        %v701 = vld [vmem:[#allocation5 + $0xc88] sm:$0xff]
        %v702 = vld [vmem:[#allocation5 + $0xc90] sm:$0xff]
        %v703 = vld [vmem:[#allocation5 + $0xc98] sm:$0xff]
        %v704 = vld [vmem:[#allocation5 + $0xca0] sm:$0xff]
        %v705 = vld [vmem:[#allocation5 + $0xca8] sm:$0xff]
        %v706 = vld [vmem:[#allocation5 + $0xcb0] sm:$0xff]
        %v707 = vld [vmem:[#allocation5 + $0xcb8] sm:$0xff]
        %v708 = vld [vmem:[#allocation5 + $0xcc0] sm:$0xff]
        %v709 = vld [vmem:[#allocation5 + $0xcc8] sm:$0xff]
        %v710 = vld [vmem:[#allocation5 + $0xcd0] sm:$0xff]
        %v711 = vld [vmem:[#allocation5 + $0xcd8] sm:$0xff]
        %v712 = vld [vmem:[#allocation5 + $0xce0] sm:$0xff]
        %v713 = vld [vmem:[#allocation5 + $0xce8] sm:$0xff]
        %v714 = vld [vmem:[#allocation5 + $0xcf0] sm:$0xff]
        %v715 = vld [vmem:[#allocation5 + $0xcf8] sm:$0xff]
        %v716 = vld [vmem:[#allocation5 + $0xd00] sm:$0xff]
        %v717 = vld [vmem:[#allocation5 + $0xd08] sm:$0xff]
        %v718 = vld [vmem:[#allocation5 + $0xd10] sm:$0xff]
        %v719 = vld [vmem:[#allocation5 + $0xd18] sm:$0xff]
        %v720 = vld [vmem:[#allocation5 + $0xd20] sm:$0xff]
        %v721 = vld [vmem:[#allocation5 + $0xd28] sm:$0xff]
        %v722 = vld [vmem:[#allocation5 + $0xd30] sm:$0xff]
        %v723 = vld [vmem:[#allocation5 + $0xd38] sm:$0xff]
        %v724 = vld [vmem:[#allocation5 + $0xd40] sm:$0xff]
        %v725 = vld [vmem:[#allocation5 + $0xd48] sm:$0xff]
        %v726 = vld [vmem:[#allocation5 + $0xd50] sm:$0xff]
        %v727 = vld [vmem:[#allocation5 + $0xd58] sm:$0xff]
        %v728 = vld [vmem:[#allocation5 + $0xd60] sm:$0xff]
        %v729 = vld [vmem:[#allocation5 + $0xd68] sm:$0xff]
        %v730 = vld [vmem:[#allocation5 + $0xd70] sm:$0xff]
        %v731 = vld [vmem:[#allocation5 + $0xd78] sm:$0xff]
        %v732 = vld [vmem:[#allocation5 + $0xd80] sm:$0xff]
        %v733 = vld [vmem:[#allocation5 + $0xd88] sm:$0xff]
        %v734 = vld [vmem:[#allocation5 + $0xd90] sm:$0xff]
        %v735 = vld [vmem:[#allocation5 + $0xd98] sm:$0xff]
        %v736 = vld [vmem:[#allocation5 + $0xda0] sm:$0xff]
        %v737 = vld [vmem:[#allocation5 + $0xda8] sm:$0xff]
        %v738 = vld [vmem:[#allocation5 + $0xdb0] sm:$0xff]
        %v739 = vld [vmem:[#allocation5 + $0xdb8] sm:$0xff]
        %v740 = vld [vmem:[#allocation5 + $0xdc0] sm:$0xff]
        %v741 = vld [vmem:[#allocation5 + $0xdc8] sm:$0xff]
        %v742 = vld [vmem:[#allocation5 + $0xdd0] sm:$0xff]
        %v743 = vld [vmem:[#allocation5 + $0xdd8] sm:$0xff]
        %v744 = vld [vmem:[#allocation5 + $0xde0] sm:$0xff]
        %v745 = vld [vmem:[#allocation5 + $0xde8] sm:$0xff]
        %v746 = vld [vmem:[#allocation5 + $0xdf0] sm:$0xff]
        %v747 = vld [vmem:[#allocation5 + $0xdf8] sm:$0xff]
        %v748 = vld [vmem:[#allocation7] sm:$0xff]
        %v750 = vlaneseq
        %v751 = vshrl.u32 %v750, 7
        %v752 = vsub.s32 0, %v751
        %v753 = vrot.slane %v748, %v752
        %v754 = vlaneseq
        %v755 = vshrl.u32 %v754, 7
        %v756 = vsub.s32 1, %v755
        %v757 = vrot.slane %v748, %v756
        %v758 = vlaneseq
        %v759 = vshrl.u32 %v758, 7
        %v760 = vsub.s32 2, %v759
        %v761 = vrot.slane %v748, %v760
        %v762 = vlaneseq
        %v763 = vshrl.u32 %v762, 7
        %v764 = vsub.s32 3, %v763
        %v765 = vrot.slane %v748, %v764
        %v766 = vlaneseq
        %v767 = vshrl.u32 %v766, 7
        %v768 = vsub.s32 4, %v767
        %v769 = vrot.slane %v748, %v768
        %v770 = vlaneseq
        %v771 = vshrl.u32 %v770, 7
        %v772 = vsub.s32 5, %v771
        %v773 = vrot.slane %v748, %v772
        %v774 = vlaneseq
        %v775 = vshrl.u32 %v774, 7
        %v776 = vsub.s32 6, %v775
        %v777 = vrot.slane %v748, %v776
        %v778 = vlaneseq
        %v779 = vshrl.u32 %v778, 7
        %v780 = vsub.s32 7, %v779
        %v781 = vrot.slane %v748, %v780
        %v794 = vunpack.c.l.b16 %v296
        %v795 = vunpack.c.h.b16 %v296
        %v796 = vunpack.c.l.b16 %v297
        %v797 = vunpack.c.h.b16 %v297
        %v798 = vunpack.c.l.b16 %v298
        %v799 = vunpack.c.h.b16 %v298
        %v800 = vunpack.c.l.b16 %v299
        %v801 = vpack.c.b16 %v794, %v794
        %v802 = vpack.c.b16 %v795, %v795
        %v803 = vpack.c.b16 %v796, %v796
        %v804 = vpack.c.b16 %v797, %v797
        %v805 = vpack.c.b16 %v798, %v798
        %v806 = vpack.c.b16 %v799, %v799
        %v807 = vpack.c.b16 %v800, %v800
        %v1263 = vunpack.c.l.b16 %v300
        %v1264 = vunpack.c.h.b16 %v300
        %v1265 = vunpack.c.l.b16 %v301
        %v1266 = vunpack.c.h.b16 %v301
        %v1267 = vunpack.c.l.b16 %v302
        %v1268 = vunpack.c.h.b16 %v302
        %v1269 = vunpack.c.l.b16 %v303
        %v1270 = vunpack.c.h.b16 %v303
        %v1271 = vunpack.c.l.b16 %v304
        %v1272 = vunpack.c.h.b16 %v304
        %v1273 = vunpack.c.l.b16 %v305
        %v1274 = vunpack.c.h.b16 %v305
        %v1275 = vunpack.c.l.b16 %v306
        %v1276 = vunpack.c.h.b16 %v306
        %v1277 = vunpack.c.l.b16 %v307
        %v1278 = vunpack.c.h.b16 %v307
        %v1279 = vunpack.c.l.b16 %v308
        %v1280 = vunpack.c.h.b16 %v308
        %v1281 = vunpack.c.l.b16 %v309
        %v1282 = vunpack.c.h.b16 %v309
        %v1283 = vunpack.c.l.b16 %v310
        %v1284 = vunpack.c.h.b16 %v310
        %v1285 = vunpack.c.l.b16 %v311
        %v1286 = vunpack.c.h.b16 %v311
        %v1287 = vunpack.c.l.b16 %v312
        %v1288 = vunpack.c.h.b16 %v312
        %v1289 = vunpack.c.l.b16 %v313
        %v1290 = vunpack.c.h.b16 %v313
        %v1291 = vunpack.c.l.b16 %v314
        %v1292 = vunpack.c.h.b16 %v314
        %v1293 = vunpack.c.l.b16 %v315
        %v1294 = vunpack.c.h.b16 %v315
        %v1295 = vunpack.c.l.b16 %v316
        %v1296 = vunpack.c.h.b16 %v316
        %v1297 = vunpack.c.l.b16 %v317
        %v1298 = vunpack.c.h.b16 %v317
        %v1299 = vunpack.c.l.b16 %v318
        %v1300 = vunpack.c.h.b16 %v318
        %v1301 = vunpack.c.l.b16 %v319
        %v1302 = vunpack.c.h.b16 %v319
        %v1303 = vunpack.c.l.b16 %v320
        %v1304 = vunpack.c.h.b16 %v320
        %v1305 = vunpack.c.l.b16 %v321
        %v1306 = vunpack.c.h.b16 %v321
        %v1307 = vunpack.c.l.b16 %v322
        %v1308 = vunpack.c.h.b16 %v322
        %v1309 = vunpack.c.l.b16 %v323
        %v1310 = vunpack.c.h.b16 %v323
        %v1311 = vunpack.c.l.b16 %v324
        %v1312 = vunpack.c.h.b16 %v324
        %v1313 = vunpack.c.l.b16 %v325
        %v1314 = vunpack.c.h.b16 %v325
        %v1315 = vunpack.c.l.b16 %v326
        %v1316 = vunpack.c.h.b16 %v326
        %v1317 = vunpack.c.l.b16 %v327
        %v1318 = vunpack.c.h.b16 %v327
        %v1319 = vunpack.c.l.b16 %v328
        %v1320 = vunpack.c.h.b16 %v328
        %v1321 = vunpack.c.l.b16 %v329
        %v1322 = vunpack.c.h.b16 %v329
        %v1323 = vunpack.c.l.b16 %v330
        %v1324 = vunpack.c.h.b16 %v330
        %v1325 = vunpack.c.l.b16 %v331
        %v1326 = vunpack.c.h.b16 %v331
        %v1327 = vunpack.c.l.b16 %v332
        %v1328 = vunpack.c.h.b16 %v332
        %v1329 = vunpack.c.l.b16 %v333
        %v1330 = vunpack.c.h.b16 %v333
        %v1331 = vunpack.c.l.b16 %v334
        %v1332 = vunpack.c.h.b16 %v334
        %v1333 = vunpack.c.l.b16 %v335
        %v1334 = vunpack.c.h.b16 %v335
        %v1335 = vunpack.c.l.b16 %v336
        %v1336 = vunpack.c.h.b16 %v336
        %v1337 = vunpack.c.l.b16 %v337
        %v1338 = vunpack.c.h.b16 %v337
        %v1339 = vunpack.c.l.b16 %v338
        %v1340 = vunpack.c.h.b16 %v338
        %v1341 = vunpack.c.l.b16 %v339
        %v1342 = vunpack.c.h.b16 %v339
        %v1343 = vunpack.c.l.b16 %v340
        %v1344 = vunpack.c.h.b16 %v340
        %v1345 = vunpack.c.l.b16 %v341
        %v1346 = vunpack.c.h.b16 %v341
        %v1347 = vunpack.c.l.b16 %v342
        %v1348 = vunpack.c.h.b16 %v342
        %v1349 = vunpack.c.l.b16 %v343
        %v1350 = vunpack.c.h.b16 %v343
        %v1351 = vunpack.c.l.b16 %v344
        %v1352 = vunpack.c.h.b16 %v344
        %v1353 = vunpack.c.l.b16 %v345
        %v1354 = vunpack.c.h.b16 %v345
        %v1355 = vunpack.c.l.b16 %v346
        %v1356 = vunpack.c.h.b16 %v346
        %v1357 = vunpack.c.l.b16 %v347
        %v1358 = vunpack.c.h.b16 %v347
        %v1359 = vunpack.c.l.b16 %v348
        %v1360 = vunpack.c.h.b16 %v348
        %v1361 = vunpack.c.l.b16 %v349
        %v1362 = vunpack.c.h.b16 %v349
        %v1363 = vunpack.c.l.b16 %v350
        %v1364 = vunpack.c.h.b16 %v350
        %v1365 = vunpack.c.l.b16 %v351
        %v1366 = vunpack.c.h.b16 %v351
        %v1367 = vunpack.c.l.b16 %v352
        %v1368 = vunpack.c.h.b16 %v352
        %v1369 = vunpack.c.l.b16 %v353
        %v1370 = vunpack.c.h.b16 %v353
        %v1371 = vunpack.c.l.b16 %v354
        %v1372 = vunpack.c.h.b16 %v354
        %v1373 = vunpack.c.l.b16 %v355
        %v1374 = vunpack.c.h.b16 %v355
        %v1375 = vunpack.c.l.b16 %v356
        %v1376 = vunpack.c.h.b16 %v356
        %v1377 = vunpack.c.l.b16 %v357
        %v1378 = vunpack.c.h.b16 %v357
        %v1379 = vunpack.c.l.b16 %v358
        %v1380 = vunpack.c.h.b16 %v358
        %v1381 = vunpack.c.l.b16 %v359
        %v1382 = vunpack.c.h.b16 %v359
        %v1383 = vunpack.c.l.b16 %v360
        %v1384 = vunpack.c.h.b16 %v360
        %v1385 = vunpack.c.l.b16 %v361
        %v1386 = vunpack.c.h.b16 %v361
        %v1387 = vunpack.c.l.b16 %v362
        %v1388 = vunpack.c.h.b16 %v362
        %v1389 = vunpack.c.l.b16 %v363
        %v1390 = vunpack.c.h.b16 %v363
        %v1391 = vunpack.c.l.b16 %v364
        %v1392 = vunpack.c.h.b16 %v364
        %v1393 = vunpack.c.l.b16 %v365
        %v1394 = vunpack.c.h.b16 %v365
        %v1395 = vunpack.c.l.b16 %v366
        %v1396 = vunpack.c.h.b16 %v366
        %v1397 = vunpack.c.l.b16 %v367
        %v1398 = vunpack.c.h.b16 %v367
        %v1399 = vunpack.c.l.b16 %v368
        %v1400 = vunpack.c.h.b16 %v368
        %v1401 = vunpack.c.l.b16 %v369
        %v1402 = vunpack.c.h.b16 %v369
        %v1403 = vunpack.c.l.b16 %v370
        %v1404 = vunpack.c.h.b16 %v370
        %v1405 = vunpack.c.l.b16 %v371
        %v1406 = vunpack.c.h.b16 %v371
        %v1407 = vunpack.c.l.b16 %v372
        %v1408 = vunpack.c.h.b16 %v372
        %v1409 = vunpack.c.l.b16 %v373
        %v1410 = vunpack.c.h.b16 %v373
        %v1411 = vunpack.c.l.b16 %v374
        %v1412 = vunpack.c.h.b16 %v374
        %v1413 = vunpack.c.l.b16 %v375
        %v1414 = vunpack.c.h.b16 %v375
        %v1415 = vunpack.c.l.b16 %v376
        %v1416 = vunpack.c.h.b16 %v376
        %v1417 = vunpack.c.l.b16 %v377
        %v1418 = vunpack.c.h.b16 %v377
        %v1419 = vunpack.c.l.b16 %v378
        %v1420 = vunpack.c.h.b16 %v378
        %v1421 = vunpack.c.l.b16 %v379
        %v1422 = vunpack.c.h.b16 %v379
        %v1423 = vunpack.c.l.b16 %v380
        %v1424 = vunpack.c.h.b16 %v380
        %v1425 = vunpack.c.l.b16 %v381
        %v1426 = vunpack.c.h.b16 %v381
        %v1427 = vunpack.c.l.b16 %v382
        %v1428 = vunpack.c.h.b16 %v382
        %v1429 = vunpack.c.l.b16 %v383
        %v1430 = vunpack.c.h.b16 %v383
        %v1431 = vunpack.c.l.b16 %v384
        %v1432 = vunpack.c.h.b16 %v384
        %v1433 = vunpack.c.l.b16 %v385
        %v1434 = vunpack.c.h.b16 %v385
        %v1435 = vunpack.c.l.b16 %v386
        %v1436 = vunpack.c.h.b16 %v386
        %v1437 = vunpack.c.l.b16 %v387
        %v1438 = vunpack.c.h.b16 %v387
        %v1439 = vunpack.c.l.b16 %v388
        %v1440 = vunpack.c.h.b16 %v388
        %v1441 = vunpack.c.l.b16 %v389
        %v1442 = vunpack.c.h.b16 %v389
        %v1443 = vunpack.c.l.b16 %v390
        %v1444 = vunpack.c.h.b16 %v390
        %v1445 = vunpack.c.l.b16 %v391
        %v1446 = vunpack.c.h.b16 %v391
        %v1447 = vunpack.c.l.b16 %v392
        %v1448 = vunpack.c.h.b16 %v392
        %v1449 = vunpack.c.l.b16 %v393
        %v1450 = vunpack.c.h.b16 %v393
        %v1451 = vunpack.c.l.b16 %v394
        %v1452 = vunpack.c.h.b16 %v394
        %v1453 = vunpack.c.l.b16 %v395
        %v1454 = vunpack.c.h.b16 %v395
        %v1455 = vunpack.c.l.b16 %v396
        %v1456 = vunpack.c.h.b16 %v396
        %v1457 = vunpack.c.l.b16 %v397
        %v1458 = vunpack.c.h.b16 %v397
        %v1459 = vunpack.c.l.b16 %v398
        %v1460 = vunpack.c.h.b16 %v398
        %v1461 = vunpack.c.l.b16 %v399
        %v1462 = vunpack.c.h.b16 %v399
        %v1463 = vunpack.c.l.b16 %v400
        %v1464 = vunpack.c.h.b16 %v400
        %v1465 = vunpack.c.l.b16 %v401
        %v1466 = vunpack.c.h.b16 %v401
        %v1467 = vunpack.c.l.b16 %v402
        %v1468 = vunpack.c.h.b16 %v402
        %v1469 = vunpack.c.l.b16 %v403
        %v1470 = vunpack.c.h.b16 %v403
        %v1471 = vunpack.c.l.b16 %v404
        %v1472 = vunpack.c.h.b16 %v404
        %v1473 = vunpack.c.l.b16 %v405
        %v1474 = vunpack.c.h.b16 %v405
        %v1475 = vunpack.c.l.b16 %v406
        %v1476 = vunpack.c.h.b16 %v406
        %v1477 = vunpack.c.l.b16 %v407
        %v1478 = vunpack.c.h.b16 %v407
        %v1479 = vunpack.c.l.b16 %v408
        %v1480 = vunpack.c.h.b16 %v408
        %v1481 = vunpack.c.l.b16 %v409
        %v1482 = vunpack.c.h.b16 %v409
        %v1483 = vunpack.c.l.b16 %v410
        %v1484 = vunpack.c.h.b16 %v410
        %v1485 = vunpack.c.l.b16 %v411
        %v1486 = vunpack.c.h.b16 %v411
        %v1487 = vunpack.c.l.b16 %v412
        %v1488 = vunpack.c.h.b16 %v412
        %v1489 = vunpack.c.l.b16 %v413
        %v1490 = vunpack.c.h.b16 %v413
        %v1491 = vunpack.c.l.b16 %v414
        %v1492 = vunpack.c.h.b16 %v414
        %v1493 = vunpack.c.l.b16 %v415
        %v1494 = vunpack.c.h.b16 %v415
        %v1495 = vunpack.c.l.b16 %v416
        %v1496 = vunpack.c.h.b16 %v416
        %v1497 = vunpack.c.l.b16 %v417
        %v1498 = vunpack.c.h.b16 %v417
        %v1499 = vunpack.c.l.b16 %v418
        %v1500 = vunpack.c.h.b16 %v418
        %v1501 = vunpack.c.l.b16 %v419
        %v1502 = vunpack.c.h.b16 %v419
        %v1503 = vunpack.c.l.b16 %v420
        %v1504 = vunpack.c.h.b16 %v420
        %v1505 = vunpack.c.l.b16 %v421
        %v1506 = vunpack.c.h.b16 %v421
        %v1507 = vunpack.c.l.b16 %v422
        %v1508 = vunpack.c.h.b16 %v422
        %v1509 = vunpack.c.l.b16 %v423
        %v1510 = vunpack.c.h.b16 %v423
        %v1511 = vunpack.c.l.b16 %v424
        %v1512 = vunpack.c.h.b16 %v424
        %v1513 = vunpack.c.l.b16 %v425
        %v1514 = vunpack.c.h.b16 %v425
        %v1515 = vunpack.c.l.b16 %v426
        %v1516 = vunpack.c.h.b16 %v426
        %v1517 = vunpack.c.l.b16 %v427
        %v1518 = vunpack.c.h.b16 %v427
        %v1519 = vunpack.c.l.b16 %v428
        %v1520 = vunpack.c.h.b16 %v428
        %v1521 = vunpack.c.l.b16 %v429
        %v1522 = vunpack.c.h.b16 %v429
        %v1523 = vunpack.c.l.b16 %v430
        %v1524 = vunpack.c.h.b16 %v430
        %v1525 = vunpack.c.l.b16 %v431
        %v1526 = vunpack.c.h.b16 %v431
        %v1527 = vunpack.c.l.b16 %v432
        %v1528 = vunpack.c.h.b16 %v432
        %v1529 = vunpack.c.l.b16 %v433
        %v1530 = vunpack.c.h.b16 %v433
        %v1531 = vunpack.c.l.b16 %v434
        %v1532 = vunpack.c.h.b16 %v434
        %v1533 = vunpack.c.l.b16 %v435
        %v1534 = vunpack.c.h.b16 %v435
        %v1535 = vunpack.c.l.b16 %v436
        %v1536 = vunpack.c.h.b16 %v436
        %v1537 = vunpack.c.l.b16 %v437
        %v1538 = vunpack.c.h.b16 %v437
        %v1539 = vunpack.c.l.b16 %v438
        %v1540 = vunpack.c.h.b16 %v438
        %v1541 = vunpack.c.l.b16 %v439
        %v1542 = vunpack.c.h.b16 %v439
        %v1543 = vunpack.c.l.b16 %v440
        %v1544 = vunpack.c.h.b16 %v440
        %v1545 = vunpack.c.l.b16 %v441
        %v1546 = vunpack.c.h.b16 %v441
        %v1547 = vunpack.c.l.b16 %v442
        %v1548 = vunpack.c.h.b16 %v442
        %v1549 = vunpack.c.l.b16 %v443
        %v1550 = vunpack.c.h.b16 %v443
        %v1551 = vunpack.c.l.b16 %v444
        %v1552 = vunpack.c.h.b16 %v444
        %v1553 = vunpack.c.l.b16 %v445
        %v1554 = vunpack.c.h.b16 %v445
        %v1555 = vunpack.c.l.b16 %v446
        %v1556 = vunpack.c.h.b16 %v446
        %v1557 = vunpack.c.l.b16 %v447
        %v1558 = vunpack.c.h.b16 %v447
        %v1559 = vunpack.c.l.b16 %v448
        %v1560 = vunpack.c.h.b16 %v448
        %v1561 = vunpack.c.l.b16 %v449
        %v1562 = vunpack.c.h.b16 %v449
        %v1563 = vunpack.c.l.b16 %v450
        %v1564 = vunpack.c.h.b16 %v450
        %v1565 = vunpack.c.l.b16 %v451
        %v1566 = vunpack.c.h.b16 %v451
        %v1567 = vunpack.c.l.b16 %v452
        %v1568 = vunpack.c.h.b16 %v452
        %v1569 = vunpack.c.l.b16 %v453
        %v1570 = vunpack.c.h.b16 %v453
        %v1571 = vunpack.c.l.b16 %v454
        %v1572 = vunpack.c.h.b16 %v454
        %v1573 = vunpack.c.l.b16 %v455
        %v1574 = vunpack.c.h.b16 %v455
        %v1575 = vunpack.c.l.b16 %v456
        %v1576 = vunpack.c.h.b16 %v456
        %v1577 = vunpack.c.l.b16 %v457
        %v1578 = vunpack.c.h.b16 %v457
        %v1579 = vunpack.c.l.b16 %v458
        %v1580 = vunpack.c.h.b16 %v458
        %v1581 = vunpack.c.l.b16 %v459
        %v1582 = vunpack.c.h.b16 %v459
        %v1583 = vunpack.c.l.b16 %v460
        %v1584 = vunpack.c.h.b16 %v460
        %v1585 = vunpack.c.l.b16 %v461
        %v1586 = vunpack.c.h.b16 %v461
        %v1587 = vunpack.c.l.b16 %v462
        %v1588 = vunpack.c.h.b16 %v462
        %v1589 = vunpack.c.l.b16 %v463
        %v1590 = vunpack.c.h.b16 %v463
        %v1591 = vunpack.c.l.b16 %v464
        %v1592 = vunpack.c.h.b16 %v464
        %v1593 = vunpack.c.l.b16 %v465
        %v1594 = vunpack.c.h.b16 %v465
        %v1595 = vunpack.c.l.b16 %v466
        %v1596 = vunpack.c.h.b16 %v466
        %v1597 = vunpack.c.l.b16 %v467
        %v1598 = vunpack.c.h.b16 %v467
        %v1599 = vunpack.c.l.b16 %v468
        %v1600 = vunpack.c.h.b16 %v468
        %v1601 = vunpack.c.l.b16 %v469
        %v1602 = vunpack.c.h.b16 %v469
        %v1603 = vunpack.c.l.b16 %v470
        %v1604 = vunpack.c.h.b16 %v470
        %v1605 = vunpack.c.l.b16 %v471
        %v1606 = vunpack.c.h.b16 %v471
        %v1607 = vunpack.c.l.b16 %v472
        %v1608 = vunpack.c.h.b16 %v472
        %v1609 = vunpack.c.l.b16 %v473
        %v1610 = vunpack.c.h.b16 %v473
        %v1611 = vunpack.c.l.b16 %v474
        %v1612 = vunpack.c.h.b16 %v474
        %v1613 = vunpack.c.l.b16 %v475
        %v1614 = vunpack.c.h.b16 %v475
        %v1615 = vunpack.c.l.b16 %v476
        %v1616 = vunpack.c.h.b16 %v476
        %v1617 = vunpack.c.l.b16 %v477
        %v1618 = vunpack.c.h.b16 %v477
        %v1619 = vunpack.c.l.b16 %v478
        %v1620 = vunpack.c.h.b16 %v478
        %v1621 = vunpack.c.l.b16 %v479
        %v1622 = vunpack.c.h.b16 %v479
        %v1623 = vunpack.c.l.b16 %v480
        %v1624 = vunpack.c.h.b16 %v480
        %v1625 = vunpack.c.l.b16 %v481
        %v1626 = vunpack.c.h.b16 %v481
        %v1627 = vunpack.c.l.b16 %v482
        %v1628 = vunpack.c.h.b16 %v482
        %v1629 = vunpack.c.l.b16 %v483
        %v1630 = vunpack.c.h.b16 %v483
        %v1631 = vunpack.c.l.b16 %v484
        %v1632 = vunpack.c.h.b16 %v484
        %v1633 = vunpack.c.l.b16 %v485
        %v1634 = vunpack.c.h.b16 %v485
        %v1635 = vunpack.c.l.b16 %v486
        %v1636 = vunpack.c.h.b16 %v486
        %v1637 = vunpack.c.l.b16 %v487
        %v1638 = vunpack.c.h.b16 %v487
        %v1639 = vunpack.c.l.b16 %v488
        %v1640 = vunpack.c.h.b16 %v488
        %v1641 = vunpack.c.l.b16 %v489
        %v1642 = vunpack.c.h.b16 %v489
        %v1643 = vunpack.c.l.b16 %v490
        %v1644 = vunpack.c.h.b16 %v490
        %v1645 = vunpack.c.l.b16 %v491
        %v1646 = vunpack.c.h.b16 %v491
        %v1647 = vunpack.c.l.b16 %v492
        %v1648 = vunpack.c.h.b16 %v492
        %v1649 = vunpack.c.l.b16 %v493
        %v1650 = vunpack.c.h.b16 %v493
        %v1651 = vunpack.c.l.b16 %v494
        %v1652 = vunpack.c.h.b16 %v494
        %v1653 = vunpack.c.l.b16 %v495
        %v1654 = vunpack.c.h.b16 %v495
        %v1655 = vunpack.c.l.b16 %v496
        %v1656 = vunpack.c.h.b16 %v496
        %v1657 = vunpack.c.l.b16 %v497
        %v1658 = vunpack.c.h.b16 %v497
        %v1659 = vunpack.c.l.b16 %v498
        %v1660 = vunpack.c.h.b16 %v498
        %v1661 = vunpack.c.l.b16 %v499
        %v1662 = vunpack.c.h.b16 %v499
        %v1663 = vunpack.c.l.b16 %v500
        %v1664 = vunpack.c.h.b16 %v500
        %v1665 = vunpack.c.l.b16 %v501
        %v1666 = vunpack.c.h.b16 %v501
        %v1667 = vunpack.c.l.b16 %v502
        %v1668 = vunpack.c.h.b16 %v502
        %v1669 = vunpack.c.l.b16 %v503
        %v1670 = vunpack.c.h.b16 %v503
        %v1671 = vunpack.c.l.b16 %v504
        %v1672 = vunpack.c.h.b16 %v504
        %v1673 = vunpack.c.l.b16 %v505
        %v1674 = vunpack.c.h.b16 %v505
        %v1675 = vunpack.c.l.b16 %v506
        %v1676 = vunpack.c.h.b16 %v506
        %v1677 = vunpack.c.l.b16 %v507
        %v1678 = vunpack.c.h.b16 %v507
        %v1679 = vunpack.c.l.b16 %v508
        %v1680 = vunpack.c.h.b16 %v508
        %v1681 = vunpack.c.l.b16 %v509
        %v1682 = vunpack.c.h.b16 %v509
        %v1683 = vunpack.c.l.b16 %v510
        %v1684 = vunpack.c.h.b16 %v510
        %v1685 = vunpack.c.l.b16 %v511
        %v1686 = vunpack.c.h.b16 %v511
        %v1687 = vunpack.c.l.b16 %v512
        %v1688 = vunpack.c.h.b16 %v512
        %v1689 = vunpack.c.l.b16 %v513
        %v1690 = vunpack.c.h.b16 %v513
        %v1691 = vunpack.c.l.b16 %v514
        %v1692 = vunpack.c.h.b16 %v514
        %v1693 = vunpack.c.l.b16 %v515
        %v1694 = vunpack.c.h.b16 %v515
        %v1695 = vunpack.c.l.b16 %v516
        %v1696 = vunpack.c.h.b16 %v516
        %v1697 = vunpack.c.l.b16 %v517
        %v1698 = vunpack.c.h.b16 %v517
        %v1699 = vunpack.c.l.b16 %v518
        %v1700 = vunpack.c.h.b16 %v518
        %v1701 = vunpack.c.l.b16 %v519
        %v1702 = vunpack.c.h.b16 %v519
        %v1703 = vunpack.c.l.b16 %v520
        %v1704 = vunpack.c.h.b16 %v520
        %v1705 = vunpack.c.l.b16 %v521
        %v1706 = vunpack.c.h.b16 %v521
        %v1707 = vunpack.c.l.b16 %v522
        %v1708 = vunpack.c.h.b16 %v522
        %v1709 = vunpack.c.l.b16 %v523
        %v1710 = vunpack.c.h.b16 %v523
        %v1711 = vunpack.c.l.b16 %v524
        %v1712 = vunpack.c.h.b16 %v524
        %v1713 = vunpack.c.l.b16 %v525
        %v1714 = vunpack.c.h.b16 %v525
        %v1715 = vunpack.c.l.b16 %v526
        %v1716 = vunpack.c.h.b16 %v526
        %v1717 = vunpack.c.l.b16 %v527
        %v1718 = vunpack.c.h.b16 %v527
        %v1719 = vunpack.c.l.b16 %v528
        %v1720 = vunpack.c.h.b16 %v528
        %v1721 = vunpack.c.l.b16 %v529
        %v1722 = vunpack.c.h.b16 %v529
        %v1723 = vunpack.c.l.b16 %v530
        %v1724 = vunpack.c.h.b16 %v530
        %v1725 = vunpack.c.l.b16 %v531
        %v1726 = vunpack.c.h.b16 %v531
        %v1727 = vunpack.c.l.b16 %v532
        %v1728 = vunpack.c.h.b16 %v532
        %v1729 = vunpack.c.l.b16 %v533
        %v1730 = vunpack.c.h.b16 %v533
        %v1731 = vunpack.c.l.b16 %v534
        %v1732 = vunpack.c.h.b16 %v534
        %v1733 = vunpack.c.l.b16 %v535
        %v1734 = vunpack.c.h.b16 %v535
        %v1735 = vunpack.c.l.b16 %v536
        %v1736 = vunpack.c.h.b16 %v536
        %v1737 = vunpack.c.l.b16 %v537
        %v1738 = vunpack.c.h.b16 %v537
        %v1739 = vunpack.c.l.b16 %v538
        %v1740 = vunpack.c.h.b16 %v538
        %v1741 = vunpack.c.l.b16 %v539
        %v1742 = vunpack.c.h.b16 %v539
        %v1743 = vunpack.c.l.b16 %v540
        %v1744 = vunpack.c.h.b16 %v540
        %v1745 = vunpack.c.l.b16 %v541
        %v1746 = vunpack.c.h.b16 %v541
        %v1747 = vunpack.c.l.b16 %v542
        %v1748 = vunpack.c.h.b16 %v542
        %v1749 = vunpack.c.l.b16 %v543
        %v1750 = vunpack.c.h.b16 %v543
        %v1751 = vunpack.c.l.b16 %v544
        %v1752 = vunpack.c.h.b16 %v544
        %v1753 = vunpack.c.l.b16 %v545
        %v1754 = vunpack.c.h.b16 %v545
        %v1755 = vunpack.c.l.b16 %v546
        %v1756 = vunpack.c.h.b16 %v546
        %v1757 = vunpack.c.l.b16 %v547
        %v1758 = vunpack.c.h.b16 %v547
        %v1759 = vunpack.c.l.b16 %v548
        %v1760 = vunpack.c.h.b16 %v548
        %v1761 = vunpack.c.l.b16 %v549
        %v1762 = vunpack.c.h.b16 %v549
        %v1763 = vunpack.c.l.b16 %v550
        %v1764 = vunpack.c.h.b16 %v550
        %v1765 = vunpack.c.l.b16 %v551
        %v1766 = vunpack.c.h.b16 %v551
        %v1767 = vunpack.c.l.b16 %v552
        %v1768 = vunpack.c.h.b16 %v552
        %v1769 = vunpack.c.l.b16 %v553
        %v1770 = vunpack.c.h.b16 %v553
        %v1771 = vunpack.c.l.b16 %v554
        %v1772 = vunpack.c.h.b16 %v554
        %v1773 = vunpack.c.l.b16 %v555
        %v1774 = vunpack.c.h.b16 %v555
        %v1775 = vunpack.c.l.b16 %v556
        %v1776 = vunpack.c.h.b16 %v556
        %v1777 = vunpack.c.l.b16 %v557
        %v1778 = vunpack.c.h.b16 %v557
        %v1779 = vunpack.c.l.b16 %v558
        %v1780 = vunpack.c.h.b16 %v558
        %v1781 = vunpack.c.l.b16 %v559
        %v1782 = vunpack.c.h.b16 %v559
        %v1783 = vunpack.c.l.b16 %v560
        %v1784 = vunpack.c.h.b16 %v560
        %v1785 = vunpack.c.l.b16 %v561
        %v1786 = vunpack.c.h.b16 %v561
        %v1787 = vunpack.c.l.b16 %v562
        %v1788 = vunpack.c.h.b16 %v562
        %v1789 = vunpack.c.l.b16 %v563
        %v1790 = vunpack.c.h.b16 %v563
        %v1791 = vunpack.c.l.b16 %v564
        %v1792 = vunpack.c.h.b16 %v564
        %v1793 = vunpack.c.l.b16 %v565
        %v1794 = vunpack.c.h.b16 %v565
        %v1795 = vunpack.c.l.b16 %v566
        %v1796 = vunpack.c.h.b16 %v566
        %v1797 = vunpack.c.l.b16 %v567
        %v1798 = vunpack.c.h.b16 %v567
        %v1799 = vunpack.c.l.b16 %v568
        %v1800 = vunpack.c.h.b16 %v568
        %v1801 = vunpack.c.l.b16 %v569
        %v1802 = vunpack.c.h.b16 %v569
        %v1803 = vunpack.c.l.b16 %v570
        %v1804 = vunpack.c.h.b16 %v570
        %v1805 = vunpack.c.l.b16 %v571
        %v1806 = vunpack.c.h.b16 %v571
        %v1807 = vunpack.c.l.b16 %v572
        %v1808 = vunpack.c.h.b16 %v572
        %v1809 = vunpack.c.l.b16 %v573
        %v1810 = vunpack.c.h.b16 %v573
        %v1811 = vunpack.c.l.b16 %v574
        %v1812 = vunpack.c.h.b16 %v574
        %v1813 = vunpack.c.l.b16 %v575
        %v1814 = vunpack.c.h.b16 %v575
        %v1815 = vunpack.c.l.b16 %v576
        %v1816 = vunpack.c.h.b16 %v576
        %v1817 = vunpack.c.l.b16 %v577
        %v1818 = vunpack.c.h.b16 %v577
        %v1819 = vunpack.c.l.b16 %v578
        %v1820 = vunpack.c.h.b16 %v578
        %v1821 = vunpack.c.l.b16 %v579
        %v1822 = vunpack.c.h.b16 %v579
        %v1823 = vunpack.c.l.b16 %v580
        %v1824 = vunpack.c.h.b16 %v580
        %v1825 = vunpack.c.l.b16 %v581
        %v1826 = vunpack.c.h.b16 %v581
        %v1827 = vunpack.c.l.b16 %v582
        %v1828 = vunpack.c.h.b16 %v582
        %v1829 = vunpack.c.l.b16 %v583
        %v1830 = vunpack.c.h.b16 %v583
        %v1831 = vunpack.c.l.b16 %v584
        %v1832 = vunpack.c.h.b16 %v584
        %v1833 = vunpack.c.l.b16 %v585
        %v1834 = vunpack.c.h.b16 %v585
        %v1835 = vunpack.c.l.b16 %v586
        %v1836 = vunpack.c.h.b16 %v586
        %v1837 = vunpack.c.l.b16 %v587
        %v1838 = vunpack.c.h.b16 %v587
        %v1839 = vunpack.c.l.b16 %v588
        %v1840 = vunpack.c.h.b16 %v588
        %v1841 = vunpack.c.l.b16 %v589
        %v1842 = vunpack.c.h.b16 %v589
        %v1843 = vunpack.c.l.b16 %v590
        %v1844 = vunpack.c.h.b16 %v590
        %v1845 = vunpack.c.l.b16 %v591
        %v1846 = vunpack.c.h.b16 %v591
        %v1847 = vunpack.c.l.b16 %v592
        %v1848 = vunpack.c.h.b16 %v592
        %v1849 = vunpack.c.l.b16 %v593
        %v1850 = vunpack.c.h.b16 %v593
        %v1851 = vunpack.c.l.b16 %v594
        %v1852 = vunpack.c.h.b16 %v594
        %v1853 = vunpack.c.l.b16 %v595
        %v1854 = vunpack.c.h.b16 %v595
        %v1855 = vunpack.c.l.b16 %v596
        %v1856 = vunpack.c.h.b16 %v596
        %v1857 = vunpack.c.l.b16 %v597
        %v1858 = vunpack.c.h.b16 %v597
        %v1859 = vunpack.c.l.b16 %v598
        %v1860 = vunpack.c.h.b16 %v598
        %v1861 = vunpack.c.l.b16 %v599
        %v1862 = vunpack.c.h.b16 %v599
        %v1863 = vunpack.c.l.b16 %v600
        %v1864 = vunpack.c.h.b16 %v600
        %v1865 = vunpack.c.l.b16 %v601
        %v1866 = vunpack.c.h.b16 %v601
        %v1867 = vunpack.c.l.b16 %v602
        %v1868 = vunpack.c.h.b16 %v602
        %v1869 = vunpack.c.l.b16 %v603
        %v1870 = vunpack.c.h.b16 %v603
        %v1871 = vunpack.c.l.b16 %v604
        %v1872 = vunpack.c.h.b16 %v604
        %v1873 = vunpack.c.l.b16 %v605
        %v1874 = vunpack.c.h.b16 %v605
        %v1875 = vunpack.c.l.b16 %v606
        %v1876 = vunpack.c.h.b16 %v606
        %v1877 = vunpack.c.l.b16 %v607
        %v1878 = vunpack.c.h.b16 %v607
        %v1879 = vunpack.c.l.b16 %v608
        %v1880 = vunpack.c.h.b16 %v608
        %v1881 = vunpack.c.l.b16 %v609
        %v1882 = vunpack.c.h.b16 %v609
        %v1883 = vunpack.c.l.b16 %v610
        %v1884 = vunpack.c.h.b16 %v610
        %v1885 = vunpack.c.l.b16 %v611
        %v1886 = vunpack.c.h.b16 %v611
        %v1887 = vunpack.c.l.b16 %v612
        %v1888 = vunpack.c.h.b16 %v612
        %v1889 = vunpack.c.l.b16 %v613
        %v1890 = vunpack.c.h.b16 %v613
        %v1891 = vunpack.c.l.b16 %v614
        %v1892 = vunpack.c.h.b16 %v614
        %v1893 = vunpack.c.l.b16 %v615
        %v1894 = vunpack.c.h.b16 %v615
        %v1895 = vunpack.c.l.b16 %v616
        %v1896 = vunpack.c.h.b16 %v616
        %v1897 = vunpack.c.l.b16 %v617
        %v1898 = vunpack.c.h.b16 %v617
        %v1899 = vunpack.c.l.b16 %v618
        %v1900 = vunpack.c.h.b16 %v618
        %v1901 = vunpack.c.l.b16 %v619
        %v1902 = vunpack.c.h.b16 %v619
        %v1903 = vunpack.c.l.b16 %v620
        %v1904 = vunpack.c.h.b16 %v620
        %v1905 = vunpack.c.l.b16 %v621
        %v1906 = vunpack.c.h.b16 %v621
        %v1907 = vunpack.c.l.b16 %v622
        %v1908 = vunpack.c.h.b16 %v622
        %v1909 = vunpack.c.l.b16 %v623
        %v1910 = vunpack.c.h.b16 %v623
        %v1911 = vunpack.c.l.b16 %v624
        %v1912 = vunpack.c.h.b16 %v624
        %v1913 = vunpack.c.l.b16 %v625
        %v1914 = vunpack.c.h.b16 %v625
        %v1915 = vunpack.c.l.b16 %v626
        %v1916 = vunpack.c.h.b16 %v626
        %v1917 = vunpack.c.l.b16 %v627
        %v1918 = vunpack.c.h.b16 %v627
        %v1919 = vunpack.c.l.b16 %v628
        %v1920 = vunpack.c.h.b16 %v628
        %v1921 = vunpack.c.l.b16 %v629
        %v1922 = vunpack.c.h.b16 %v629
        %v1923 = vunpack.c.l.b16 %v630
        %v1924 = vunpack.c.h.b16 %v630
        %v1925 = vunpack.c.l.b16 %v631
        %v1926 = vunpack.c.h.b16 %v631
        %v1927 = vunpack.c.l.b16 %v632
        %v1928 = vunpack.c.h.b16 %v632
        %v1929 = vunpack.c.l.b16 %v633
        %v1930 = vunpack.c.h.b16 %v633
        %v1931 = vunpack.c.l.b16 %v634
        %v1932 = vunpack.c.h.b16 %v634
        %v1933 = vunpack.c.l.b16 %v635
        %v1934 = vunpack.c.h.b16 %v635
        %v1935 = vunpack.c.l.b16 %v636
        %v1936 = vunpack.c.h.b16 %v636
        %v1937 = vunpack.c.l.b16 %v637
        %v1938 = vunpack.c.h.b16 %v637
        %v1939 = vunpack.c.l.b16 %v638
        %v1940 = vunpack.c.h.b16 %v638
        %v1941 = vunpack.c.l.b16 %v639
        %v1942 = vunpack.c.h.b16 %v639
        %v1943 = vunpack.c.l.b16 %v640
        %v1944 = vunpack.c.h.b16 %v640
        %v1945 = vunpack.c.l.b16 %v641
        %v1946 = vunpack.c.h.b16 %v641
        %v1947 = vunpack.c.l.b16 %v642
        %v1948 = vunpack.c.h.b16 %v642
        %v1949 = vunpack.c.l.b16 %v643
        %v1950 = vunpack.c.h.b16 %v643
        %v1951 = vunpack.c.l.b16 %v644
        %v1952 = vunpack.c.h.b16 %v644
        %v1953 = vunpack.c.l.b16 %v645
        %v1954 = vunpack.c.h.b16 %v645
        %v1955 = vunpack.c.l.b16 %v646
        %v1956 = vunpack.c.h.b16 %v646
        %v1957 = vunpack.c.l.b16 %v647
        %v1958 = vunpack.c.h.b16 %v647
        %v1959 = vunpack.c.l.b16 %v648
        %v1960 = vunpack.c.h.b16 %v648
        %v1961 = vunpack.c.l.b16 %v649
        %v1962 = vunpack.c.h.b16 %v649
        %v1963 = vunpack.c.l.b16 %v650
        %v1964 = vunpack.c.h.b16 %v650
        %v1965 = vunpack.c.l.b16 %v651
        %v1966 = vunpack.c.h.b16 %v651
        %v1967 = vunpack.c.l.b16 %v652
        %v1968 = vunpack.c.h.b16 %v652
        %v1969 = vunpack.c.l.b16 %v653
        %v1970 = vunpack.c.h.b16 %v653
        %v1971 = vunpack.c.l.b16 %v654
        %v1972 = vunpack.c.h.b16 %v654
        %v1973 = vunpack.c.l.b16 %v655
        %v1974 = vunpack.c.h.b16 %v655
        %v1975 = vunpack.c.l.b16 %v656
        %v1976 = vunpack.c.h.b16 %v656
        %v1977 = vunpack.c.l.b16 %v657
        %v1978 = vunpack.c.h.b16 %v657
        %v1979 = vunpack.c.l.b16 %v658
        %v1980 = vunpack.c.h.b16 %v658
        %v1981 = vunpack.c.l.b16 %v659
        %v1982 = vunpack.c.h.b16 %v659
        %v1983 = vunpack.c.l.b16 %v660
        %v1984 = vunpack.c.h.b16 %v660
        %v1985 = vunpack.c.l.b16 %v661
        %v1986 = vunpack.c.h.b16 %v661
        %v1987 = vunpack.c.l.b16 %v662
        %v1988 = vunpack.c.h.b16 %v662
        %v1989 = vunpack.c.l.b16 %v663
        %v1990 = vunpack.c.h.b16 %v663
        %v1991 = vunpack.c.l.b16 %v664
        %v1992 = vunpack.c.h.b16 %v664
        %v1993 = vunpack.c.l.b16 %v665
        %v1994 = vunpack.c.h.b16 %v665
        %v1995 = vunpack.c.l.b16 %v666
        %v1996 = vunpack.c.h.b16 %v666
        %v1997 = vunpack.c.l.b16 %v667
        %v1998 = vunpack.c.h.b16 %v667
        %v1999 = vunpack.c.l.b16 %v668
        %v2000 = vunpack.c.h.b16 %v668
        %v2001 = vunpack.c.l.b16 %v669
        %v2002 = vunpack.c.h.b16 %v669
        %v2003 = vunpack.c.l.b16 %v670
        %v2004 = vunpack.c.h.b16 %v670
        %v2005 = vunpack.c.l.b16 %v671
        %v2006 = vunpack.c.h.b16 %v671
        %v2007 = vunpack.c.l.b16 %v672
        %v2008 = vunpack.c.h.b16 %v672
        %v2009 = vunpack.c.l.b16 %v673
        %v2010 = vunpack.c.h.b16 %v673
        %v2011 = vunpack.c.l.b16 %v674
        %v2012 = vunpack.c.h.b16 %v674
        %v2013 = vunpack.c.l.b16 %v675
        %v2014 = vunpack.c.h.b16 %v675
        %v2015 = vunpack.c.l.b16 %v676
        %v2016 = vunpack.c.h.b16 %v676
        %v2017 = vunpack.c.l.b16 %v677
        %v2018 = vunpack.c.h.b16 %v677
        %v2019 = vunpack.c.l.b16 %v678
        %v2020 = vunpack.c.h.b16 %v678
        %v2021 = vunpack.c.l.b16 %v679
        %v2022 = vunpack.c.h.b16 %v679
        %v2023 = vunpack.c.l.b16 %v680
        %v2024 = vunpack.c.h.b16 %v680
        %v2025 = vunpack.c.l.b16 %v681
        %v2026 = vunpack.c.h.b16 %v681
        %v2027 = vunpack.c.l.b16 %v682
        %v2028 = vunpack.c.h.b16 %v682
        %v2029 = vunpack.c.l.b16 %v683
        %v2030 = vunpack.c.h.b16 %v683
        %v2031 = vunpack.c.l.b16 %v684
        %v2032 = vunpack.c.h.b16 %v684
        %v2033 = vunpack.c.l.b16 %v685
        %v2034 = vunpack.c.h.b16 %v685
        %v2035 = vunpack.c.l.b16 %v686
        %v2036 = vunpack.c.h.b16 %v686
        %v2037 = vunpack.c.l.b16 %v687
        %v2038 = vunpack.c.h.b16 %v687
        %v2039 = vunpack.c.l.b16 %v688
        %v2040 = vunpack.c.h.b16 %v688
        %v2041 = vunpack.c.l.b16 %v689
        %v2042 = vunpack.c.h.b16 %v689
        %v2043 = vunpack.c.l.b16 %v690
        %v2044 = vunpack.c.h.b16 %v690
        %v2045 = vunpack.c.l.b16 %v691
        %v2046 = vunpack.c.h.b16 %v691
        %v2047 = vunpack.c.l.b16 %v692
        %v2048 = vunpack.c.h.b16 %v692
        %v2049 = vunpack.c.l.b16 %v693
        %v2050 = vunpack.c.h.b16 %v693
        %v2051 = vunpack.c.l.b16 %v694
        %v2052 = vunpack.c.h.b16 %v694
        %v2053 = vunpack.c.l.b16 %v695
        %v2054 = vunpack.c.h.b16 %v695
        %v2055 = vunpack.c.l.b16 %v696
        %v2056 = vunpack.c.h.b16 %v696
        %v2057 = vunpack.c.l.b16 %v697
        %v2058 = vunpack.c.h.b16 %v697
        %v2059 = vunpack.c.l.b16 %v698
        %v2060 = vunpack.c.h.b16 %v698
        %v2061 = vunpack.c.l.b16 %v699
        %v2062 = vunpack.c.h.b16 %v699
        %v2063 = vunpack.c.l.b16 %v700
        %v2064 = vunpack.c.h.b16 %v700
        %v2065 = vunpack.c.l.b16 %v701
        %v2066 = vunpack.c.h.b16 %v701
        %v2067 = vunpack.c.l.b16 %v702
        %v2068 = vunpack.c.h.b16 %v702
        %v2069 = vunpack.c.l.b16 %v703
        %v2070 = vunpack.c.h.b16 %v703
        %v2071 = vunpack.c.l.b16 %v704
        %v2072 = vunpack.c.h.b16 %v704
        %v2073 = vunpack.c.l.b16 %v705
        %v2074 = vunpack.c.h.b16 %v705
        %v2075 = vunpack.c.l.b16 %v706
        %v2076 = vunpack.c.h.b16 %v706
        %v2077 = vunpack.c.l.b16 %v707
        %v2078 = vunpack.c.h.b16 %v707
        %v2079 = vunpack.c.l.b16 %v708
        %v2080 = vunpack.c.h.b16 %v708
        %v2081 = vunpack.c.l.b16 %v709
        %v2082 = vunpack.c.h.b16 %v709
        %v2083 = vunpack.c.l.b16 %v710
        %v2084 = vunpack.c.h.b16 %v710
        %v2085 = vunpack.c.l.b16 %v711
        %v2086 = vunpack.c.h.b16 %v711
        %v2087 = vunpack.c.l.b16 %v712
        %v2088 = vunpack.c.h.b16 %v712
        %v2089 = vunpack.c.l.b16 %v713
        %v2090 = vunpack.c.h.b16 %v713
        %v2091 = vunpack.c.l.b16 %v714
        %v2092 = vunpack.c.h.b16 %v714
        %v2093 = vunpack.c.l.b16 %v715
        %v2094 = vunpack.c.h.b16 %v715
        %v2095 = vunpack.c.l.b16 %v716
        %v2096 = vunpack.c.h.b16 %v716
        %v2097 = vunpack.c.l.b16 %v717
        %v2098 = vunpack.c.h.b16 %v717
        %v2099 = vunpack.c.l.b16 %v718
        %v2100 = vunpack.c.h.b16 %v718
        %v2101 = vunpack.c.l.b16 %v719
        %v2102 = vunpack.c.h.b16 %v719
        %v2103 = vunpack.c.l.b16 %v720
        %v2104 = vunpack.c.h.b16 %v720
        %v2105 = vunpack.c.l.b16 %v721
        %v2106 = vunpack.c.h.b16 %v721
        %v2107 = vunpack.c.l.b16 %v722
        %v2108 = vunpack.c.h.b16 %v722
        %v2109 = vunpack.c.l.b16 %v723
        %v2110 = vunpack.c.h.b16 %v723
        %v2111 = vunpack.c.l.b16 %v724
        %v2112 = vunpack.c.h.b16 %v724
        %v2113 = vunpack.c.l.b16 %v725
        %v2114 = vunpack.c.h.b16 %v725
        %v2115 = vunpack.c.l.b16 %v726
        %v2116 = vunpack.c.h.b16 %v726
        %v2117 = vunpack.c.l.b16 %v727
        %v2118 = vunpack.c.h.b16 %v727
        %v2119 = vunpack.c.l.b16 %v728
        %v2120 = vunpack.c.h.b16 %v728
        %v2121 = vunpack.c.l.b16 %v729
        %v2122 = vunpack.c.h.b16 %v729
        %v2123 = vunpack.c.l.b16 %v730
        %v2124 = vunpack.c.h.b16 %v730
        %v2125 = vunpack.c.l.b16 %v731
        %v2126 = vunpack.c.h.b16 %v731
        %v2127 = vunpack.c.l.b16 %v732
        %v2128 = vunpack.c.h.b16 %v732
        %v2129 = vunpack.c.l.b16 %v733
        %v2130 = vunpack.c.h.b16 %v733
        %v2131 = vunpack.c.l.b16 %v734
        %v2132 = vunpack.c.h.b16 %v734
        %v2133 = vunpack.c.l.b16 %v735
        %v2134 = vunpack.c.h.b16 %v735
        %v2135 = vunpack.c.l.b16 %v736
        %v2136 = vunpack.c.h.b16 %v736
        %v2137 = vunpack.c.l.b16 %v737
        %v2138 = vunpack.c.h.b16 %v737
        %v2139 = vunpack.c.l.b16 %v738
        %v2140 = vunpack.c.h.b16 %v738
        %v2141 = vunpack.c.l.b16 %v739
        %v2142 = vunpack.c.h.b16 %v739
        %v2143 = vunpack.c.l.b16 %v740
        %v2144 = vunpack.c.h.b16 %v740
        %v2145 = vunpack.c.l.b16 %v741
        %v2146 = vunpack.c.h.b16 %v741
        %v2147 = vunpack.c.l.b16 %v742
        %v2148 = vunpack.c.h.b16 %v742
        %v2149 = vunpack.c.l.b16 %v743
        %v2150 = vunpack.c.h.b16 %v743
        %v2151 = vunpack.c.l.b16 %v744
        %v2152 = vunpack.c.h.b16 %v744
        %v2153 = vunpack.c.l.b16 %v745
        %v2154 = vunpack.c.h.b16 %v745
        %v2155 = vunpack.c.l.b16 %v746
        %v2156 = vunpack.c.h.b16 %v746
        %v2157 = vunpack.c.l.b16 %v747
        %v2158 = vunpack.c.h.b16 %v747
        %v2159 = vpack.c.b16 %v1271, %v1263
        %v2160 = vpack.c.b16 %v1272, %v1264
        %v2161 = vpack.c.b16 %v1273, %v1265
        %v2162 = vpack.c.b16 %v1274, %v1266
        %v2163 = vpack.c.b16 %v1275, %v1267
        %v2164 = vpack.c.b16 %v1276, %v1268
        %v2165 = vpack.c.b16 %v1277, %v1269
        %v2166 = vpack.c.b16 %v1278, %v1270
        %v2167 = vpack.c.b16 %v1287, %v1279
        %v2168 = vpack.c.b16 %v1288, %v1280
        %v2169 = vpack.c.b16 %v1289, %v1281
        %v2170 = vpack.c.b16 %v1290, %v1282
        %v2171 = vpack.c.b16 %v1291, %v1283
        %v2172 = vpack.c.b16 %v1292, %v1284
        %v2173 = vpack.c.b16 %v1293, %v1285
        %v2174 = vpack.c.b16 %v1294, %v1286
        %v2175 = vpack.c.b16 %v1303, %v1295
        %v2176 = vpack.c.b16 %v1304, %v1296
        %v2177 = vpack.c.b16 %v1305, %v1297
        %v2178 = vpack.c.b16 %v1306, %v1298
        %v2179 = vpack.c.b16 %v1307, %v1299
        %v2180 = vpack.c.b16 %v1308, %v1300
        %v2181 = vpack.c.b16 %v1309, %v1301
        %v2182 = vpack.c.b16 %v1310, %v1302
        %v2183 = vpack.c.b16 %v1319, %v1311
        %v2184 = vpack.c.b16 %v1320, %v1312
        %v2185 = vpack.c.b16 %v1321, %v1313
        %v2186 = vpack.c.b16 %v1322, %v1314
        %v2187 = vpack.c.b16 %v1323, %v1315
        %v2188 = vpack.c.b16 %v1324, %v1316
        %v2189 = vpack.c.b16 %v1325, %v1317
        %v2190 = vpack.c.b16 %v1326, %v1318
        %v2191 = vpack.c.b16 %v1335, %v1327
        %v2192 = vpack.c.b16 %v1336, %v1328
        %v2193 = vpack.c.b16 %v1337, %v1329
        %v2194 = vpack.c.b16 %v1338, %v1330
        %v2195 = vpack.c.b16 %v1339, %v1331
        %v2196 = vpack.c.b16 %v1340, %v1332
        %v2197 = vpack.c.b16 %v1341, %v1333
        %v2198 = vpack.c.b16 %v1342, %v1334
        %v2199 = vpack.c.b16 %v1351, %v1343
        %v2200 = vpack.c.b16 %v1352, %v1344
        %v2201 = vpack.c.b16 %v1353, %v1345
        %v2202 = vpack.c.b16 %v1354, %v1346
        %v2203 = vpack.c.b16 %v1355, %v1347
        %v2204 = vpack.c.b16 %v1356, %v1348
        %v2205 = vpack.c.b16 %v1357, %v1349
        %v2206 = vpack.c.b16 %v1358, %v1350
        %v2207 = vpack.c.b16 %v1367, %v1359
        %v2208 = vpack.c.b16 %v1368, %v1360
        %v2209 = vpack.c.b16 %v1369, %v1361
        %v2210 = vpack.c.b16 %v1370, %v1362
        %v2211 = vpack.c.b16 %v1371, %v1363
        %v2212 = vpack.c.b16 %v1372, %v1364
        %v2213 = vpack.c.b16 %v1373, %v1365
        %v2214 = vpack.c.b16 %v1374, %v1366
        %v2215 = vpack.c.b16 %v1383, %v1375
        %v2216 = vpack.c.b16 %v1384, %v1376
        %v2217 = vpack.c.b16 %v1385, %v1377
        %v2218 = vpack.c.b16 %v1386, %v1378
        %v2219 = vpack.c.b16 %v1387, %v1379
        %v2220 = vpack.c.b16 %v1388, %v1380
        %v2221 = vpack.c.b16 %v1389, %v1381
        %v2222 = vpack.c.b16 %v1390, %v1382
        %v2223 = vpack.c.b16 %v1399, %v1391
        %v2224 = vpack.c.b16 %v1400, %v1392
        %v2225 = vpack.c.b16 %v1401, %v1393
        %v2226 = vpack.c.b16 %v1402, %v1394
        %v2227 = vpack.c.b16 %v1403, %v1395
        %v2228 = vpack.c.b16 %v1404, %v1396
        %v2229 = vpack.c.b16 %v1405, %v1397
        %v2230 = vpack.c.b16 %v1406, %v1398
        %v2231 = vpack.c.b16 %v1415, %v1407
        %v2232 = vpack.c.b16 %v1416, %v1408
        %v2233 = vpack.c.b16 %v1417, %v1409
        %v2234 = vpack.c.b16 %v1418, %v1410
        %v2235 = vpack.c.b16 %v1419, %v1411
        %v2236 = vpack.c.b16 %v1420, %v1412
        %v2237 = vpack.c.b16 %v1421, %v1413
        %v2238 = vpack.c.b16 %v1422, %v1414
        %v2239 = vpack.c.b16 %v1431, %v1423
        %v2240 = vpack.c.b16 %v1432, %v1424
        %v2241 = vpack.c.b16 %v1433, %v1425
        %v2242 = vpack.c.b16 %v1434, %v1426
        %v2243 = vpack.c.b16 %v1435, %v1427
        %v2244 = vpack.c.b16 %v1436, %v1428
        %v2245 = vpack.c.b16 %v1437, %v1429
        %v2246 = vpack.c.b16 %v1438, %v1430
        %v2247 = vpack.c.b16 %v1447, %v1439
        %v2248 = vpack.c.b16 %v1448, %v1440
        %v2249 = vpack.c.b16 %v1449, %v1441
        %v2250 = vpack.c.b16 %v1450, %v1442
        %v2251 = vpack.c.b16 %v1451, %v1443
        %v2252 = vpack.c.b16 %v1452, %v1444
        %v2253 = vpack.c.b16 %v1453, %v1445
        %v2254 = vpack.c.b16 %v1454, %v1446
        %v2255 = vpack.c.b16 %v1463, %v1455
        %v2256 = vpack.c.b16 %v1464, %v1456
        %v2257 = vpack.c.b16 %v1465, %v1457
        %v2258 = vpack.c.b16 %v1466, %v1458
        %v2259 = vpack.c.b16 %v1467, %v1459
        %v2260 = vpack.c.b16 %v1468, %v1460
        %v2261 = vpack.c.b16 %v1469, %v1461
        %v2262 = vpack.c.b16 %v1470, %v1462
        %v2263 = vpack.c.b16 %v1479, %v1471
        %v2264 = vpack.c.b16 %v1480, %v1472
        %v2265 = vpack.c.b16 %v1481, %v1473
        %v2266 = vpack.c.b16 %v1482, %v1474
        %v2267 = vpack.c.b16 %v1483, %v1475
        %v2268 = vpack.c.b16 %v1484, %v1476
        %v2269 = vpack.c.b16 %v1485, %v1477
        %v2270 = vpack.c.b16 %v1486, %v1478
        %v2271 = vpack.c.b16 %v1495, %v1487
        %v2272 = vpack.c.b16 %v1496, %v1488
        %v2273 = vpack.c.b16 %v1497, %v1489
        %v2274 = vpack.c.b16 %v1498, %v1490
        %v2275 = vpack.c.b16 %v1499, %v1491
        %v2276 = vpack.c.b16 %v1500, %v1492
        %v2277 = vpack.c.b16 %v1501, %v1493
        %v2278 = vpack.c.b16 %v1502, %v1494
        %v2279 = vpack.c.b16 %v1511, %v1503
        %v2280 = vpack.c.b16 %v1512, %v1504
        %v2281 = vpack.c.b16 %v1513, %v1505
        %v2282 = vpack.c.b16 %v1514, %v1506
        %v2283 = vpack.c.b16 %v1515, %v1507
        %v2284 = vpack.c.b16 %v1516, %v1508
        %v2285 = vpack.c.b16 %v1517, %v1509
        %v2286 = vpack.c.b16 %v1518, %v1510
        %v2287 = vpack.c.b16 %v1527, %v1519
        %v2288 = vpack.c.b16 %v1528, %v1520
        %v2289 = vpack.c.b16 %v1529, %v1521
        %v2290 = vpack.c.b16 %v1530, %v1522
        %v2291 = vpack.c.b16 %v1531, %v1523
        %v2292 = vpack.c.b16 %v1532, %v1524
        %v2293 = vpack.c.b16 %v1533, %v1525
        %v2294 = vpack.c.b16 %v1534, %v1526
        %v2295 = vpack.c.b16 %v1543, %v1535
        %v2296 = vpack.c.b16 %v1544, %v1536
        %v2297 = vpack.c.b16 %v1545, %v1537
        %v2298 = vpack.c.b16 %v1546, %v1538
        %v2299 = vpack.c.b16 %v1547, %v1539
        %v2300 = vpack.c.b16 %v1548, %v1540
        %v2301 = vpack.c.b16 %v1549, %v1541
        %v2302 = vpack.c.b16 %v1550, %v1542
        %v2303 = vpack.c.b16 %v1559, %v1551
        %v2304 = vpack.c.b16 %v1560, %v1552
        %v2305 = vpack.c.b16 %v1561, %v1553
        %v2306 = vpack.c.b16 %v1562, %v1554
        %v2307 = vpack.c.b16 %v1563, %v1555
        %v2308 = vpack.c.b16 %v1564, %v1556
        %v2309 = vpack.c.b16 %v1565, %v1557
        %v2310 = vpack.c.b16 %v1566, %v1558
        %v2311 = vpack.c.b16 %v1575, %v1567
        %v2312 = vpack.c.b16 %v1576, %v1568
        %v2313 = vpack.c.b16 %v1577, %v1569
        %v2314 = vpack.c.b16 %v1578, %v1570
        %v2315 = vpack.c.b16 %v1579, %v1571
        %v2316 = vpack.c.b16 %v1580, %v1572
        %v2317 = vpack.c.b16 %v1581, %v1573
        %v2318 = vpack.c.b16 %v1582, %v1574
        %v2319 = vpack.c.b16 %v1591, %v1583
        %v2320 = vpack.c.b16 %v1592, %v1584
        %v2321 = vpack.c.b16 %v1593, %v1585
        %v2322 = vpack.c.b16 %v1594, %v1586
        %v2323 = vpack.c.b16 %v1595, %v1587
        %v2324 = vpack.c.b16 %v1596, %v1588
        %v2325 = vpack.c.b16 %v1597, %v1589
        %v2326 = vpack.c.b16 %v1598, %v1590
        %v2327 = vpack.c.b16 %v1607, %v1599
        %v2328 = vpack.c.b16 %v1608, %v1600
        %v2329 = vpack.c.b16 %v1609, %v1601
        %v2330 = vpack.c.b16 %v1610, %v1602
        %v2331 = vpack.c.b16 %v1611, %v1603
        %v2332 = vpack.c.b16 %v1612, %v1604
        %v2333 = vpack.c.b16 %v1613, %v1605
        %v2334 = vpack.c.b16 %v1614, %v1606
        %v2335 = vpack.c.b16 %v1623, %v1615
        %v2336 = vpack.c.b16 %v1624, %v1616
        %v2337 = vpack.c.b16 %v1625, %v1617
        %v2338 = vpack.c.b16 %v1626, %v1618
        %v2339 = vpack.c.b16 %v1627, %v1619
        %v2340 = vpack.c.b16 %v1628, %v1620
        %v2341 = vpack.c.b16 %v1629, %v1621
        %v2342 = vpack.c.b16 %v1630, %v1622
        %v2343 = vpack.c.b16 %v1639, %v1631
        %v2344 = vpack.c.b16 %v1640, %v1632
        %v2345 = vpack.c.b16 %v1641, %v1633
        %v2346 = vpack.c.b16 %v1642, %v1634
        %v2347 = vpack.c.b16 %v1643, %v1635
        %v2348 = vpack.c.b16 %v1644, %v1636
        %v2349 = vpack.c.b16 %v1645, %v1637
        %v2350 = vpack.c.b16 %v1646, %v1638
        %v2351 = vpack.c.b16 %v1655, %v1647
        %v2352 = vpack.c.b16 %v1656, %v1648
        %v2353 = vpack.c.b16 %v1657, %v1649
        %v2354 = vpack.c.b16 %v1658, %v1650
        %v2355 = vpack.c.b16 %v1659, %v1651
        %v2356 = vpack.c.b16 %v1660, %v1652
        %v2357 = vpack.c.b16 %v1661, %v1653
        %v2358 = vpack.c.b16 %v1662, %v1654
        %v2359 = vpack.c.b16 %v1671, %v1663
        %v2360 = vpack.c.b16 %v1672, %v1664
        %v2361 = vpack.c.b16 %v1673, %v1665
        %v2362 = vpack.c.b16 %v1674, %v1666
        %v2363 = vpack.c.b16 %v1675, %v1667
        %v2364 = vpack.c.b16 %v1676, %v1668
        %v2365 = vpack.c.b16 %v1677, %v1669
        %v2366 = vpack.c.b16 %v1678, %v1670
        %v2367 = vpack.c.b16 %v1687, %v1679
        %v2368 = vpack.c.b16 %v1688, %v1680
        %v2369 = vpack.c.b16 %v1689, %v1681
        %v2370 = vpack.c.b16 %v1690, %v1682
        %v2371 = vpack.c.b16 %v1691, %v1683
        %v2372 = vpack.c.b16 %v1692, %v1684
        %v2373 = vpack.c.b16 %v1693, %v1685
        %v2374 = vpack.c.b16 %v1694, %v1686
        %v2375 = vpack.c.b16 %v1703, %v1695
        %v2376 = vpack.c.b16 %v1704, %v1696
        %v2377 = vpack.c.b16 %v1705, %v1697
        %v2378 = vpack.c.b16 %v1706, %v1698
        %v2379 = vpack.c.b16 %v1707, %v1699
        %v2380 = vpack.c.b16 %v1708, %v1700
        %v2381 = vpack.c.b16 %v1709, %v1701
        %v2382 = vpack.c.b16 %v1710, %v1702
        %v2383 = vpack.c.b16 %v1719, %v1711
        %v2384 = vpack.c.b16 %v1720, %v1712
        %v2385 = vpack.c.b16 %v1721, %v1713
        %v2386 = vpack.c.b16 %v1722, %v1714
        %v2387 = vpack.c.b16 %v1723, %v1715
        %v2388 = vpack.c.b16 %v1724, %v1716
        %v2389 = vpack.c.b16 %v1725, %v1717
        %v2390 = vpack.c.b16 %v1726, %v1718
        %v2391 = vpack.c.b16 %v1735, %v1727
        %v2392 = vpack.c.b16 %v1736, %v1728
        %v2393 = vpack.c.b16 %v1737, %v1729
        %v2394 = vpack.c.b16 %v1738, %v1730
        %v2395 = vpack.c.b16 %v1739, %v1731
        %v2396 = vpack.c.b16 %v1740, %v1732
        %v2397 = vpack.c.b16 %v1741, %v1733
        %v2398 = vpack.c.b16 %v1742, %v1734
        %v2399 = vpack.c.b16 %v1751, %v1743
        %v2400 = vpack.c.b16 %v1752, %v1744
        %v2401 = vpack.c.b16 %v1753, %v1745
        %v2402 = vpack.c.b16 %v1754, %v1746
        %v2403 = vpack.c.b16 %v1755, %v1747
        %v2404 = vpack.c.b16 %v1756, %v1748
        %v2405 = vpack.c.b16 %v1757, %v1749
        %v2406 = vpack.c.b16 %v1758, %v1750
        %v2407 = vpack.c.b16 %v1767, %v1759
        %v2408 = vpack.c.b16 %v1768, %v1760
        %v2409 = vpack.c.b16 %v1769, %v1761
        %v2410 = vpack.c.b16 %v1770, %v1762
        %v2411 = vpack.c.b16 %v1771, %v1763
        %v2412 = vpack.c.b16 %v1772, %v1764
        %v2413 = vpack.c.b16 %v1773, %v1765
        %v2414 = vpack.c.b16 %v1774, %v1766
        %v2415 = vpack.c.b16 %v1783, %v1775
        %v2416 = vpack.c.b16 %v1784, %v1776
        %v2417 = vpack.c.b16 %v1785, %v1777
        %v2418 = vpack.c.b16 %v1786, %v1778
        %v2419 = vpack.c.b16 %v1787, %v1779
        %v2420 = vpack.c.b16 %v1788, %v1780
        %v2421 = vpack.c.b16 %v1789, %v1781
        %v2422 = vpack.c.b16 %v1790, %v1782
        %v2423 = vpack.c.b16 %v1799, %v1791
        %v2424 = vpack.c.b16 %v1800, %v1792
        %v2425 = vpack.c.b16 %v1801, %v1793
        %v2426 = vpack.c.b16 %v1802, %v1794
        %v2427 = vpack.c.b16 %v1803, %v1795
        %v2428 = vpack.c.b16 %v1804, %v1796
        %v2429 = vpack.c.b16 %v1805, %v1797
        %v2430 = vpack.c.b16 %v1806, %v1798
        %v2431 = vpack.c.b16 %v1815, %v1807
        %v2432 = vpack.c.b16 %v1816, %v1808
        %v2433 = vpack.c.b16 %v1817, %v1809
        %v2434 = vpack.c.b16 %v1818, %v1810
        %v2435 = vpack.c.b16 %v1819, %v1811
        %v2436 = vpack.c.b16 %v1820, %v1812
        %v2437 = vpack.c.b16 %v1821, %v1813
        %v2438 = vpack.c.b16 %v1822, %v1814
        %v2439 = vpack.c.b16 %v1831, %v1823
        %v2440 = vpack.c.b16 %v1832, %v1824
        %v2441 = vpack.c.b16 %v1833, %v1825
        %v2442 = vpack.c.b16 %v1834, %v1826
        %v2443 = vpack.c.b16 %v1835, %v1827
        %v2444 = vpack.c.b16 %v1836, %v1828
        %v2445 = vpack.c.b16 %v1837, %v1829
        %v2446 = vpack.c.b16 %v1838, %v1830
        %v2447 = vpack.c.b16 %v1847, %v1839
        %v2448 = vpack.c.b16 %v1848, %v1840
        %v2449 = vpack.c.b16 %v1849, %v1841
        %v2450 = vpack.c.b16 %v1850, %v1842
        %v2451 = vpack.c.b16 %v1851, %v1843
        %v2452 = vpack.c.b16 %v1852, %v1844
        %v2453 = vpack.c.b16 %v1853, %v1845
        %v2454 = vpack.c.b16 %v1854, %v1846
        %v2455 = vpack.c.b16 %v1863, %v1855
        %v2456 = vpack.c.b16 %v1864, %v1856
        %v2457 = vpack.c.b16 %v1865, %v1857
        %v2458 = vpack.c.b16 %v1866, %v1858
        %v2459 = vpack.c.b16 %v1867, %v1859
        %v2460 = vpack.c.b16 %v1868, %v1860
        %v2461 = vpack.c.b16 %v1869, %v1861
        %v2462 = vpack.c.b16 %v1870, %v1862
        %v2463 = vpack.c.b16 %v1879, %v1871
        %v2464 = vpack.c.b16 %v1880, %v1872
        %v2465 = vpack.c.b16 %v1881, %v1873
        %v2466 = vpack.c.b16 %v1882, %v1874
        %v2467 = vpack.c.b16 %v1883, %v1875
        %v2468 = vpack.c.b16 %v1884, %v1876
        %v2469 = vpack.c.b16 %v1885, %v1877
        %v2470 = vpack.c.b16 %v1886, %v1878
        %v2471 = vpack.c.b16 %v1895, %v1887
        %v2472 = vpack.c.b16 %v1896, %v1888
        %v2473 = vpack.c.b16 %v1897, %v1889
        %v2474 = vpack.c.b16 %v1898, %v1890
        %v2475 = vpack.c.b16 %v1899, %v1891
        %v2476 = vpack.c.b16 %v1900, %v1892
        %v2477 = vpack.c.b16 %v1901, %v1893
        %v2478 = vpack.c.b16 %v1902, %v1894
        %v2479 = vpack.c.b16 %v1911, %v1903
        %v2480 = vpack.c.b16 %v1912, %v1904
        %v2481 = vpack.c.b16 %v1913, %v1905
        %v2482 = vpack.c.b16 %v1914, %v1906
        %v2483 = vpack.c.b16 %v1915, %v1907
        %v2484 = vpack.c.b16 %v1916, %v1908
        %v2485 = vpack.c.b16 %v1917, %v1909
        %v2486 = vpack.c.b16 %v1918, %v1910
        %v2487 = vpack.c.b16 %v1927, %v1919
        %v2488 = vpack.c.b16 %v1928, %v1920
        %v2489 = vpack.c.b16 %v1929, %v1921
        %v2490 = vpack.c.b16 %v1930, %v1922
        %v2491 = vpack.c.b16 %v1931, %v1923
        %v2492 = vpack.c.b16 %v1932, %v1924
        %v2493 = vpack.c.b16 %v1933, %v1925
        %v2494 = vpack.c.b16 %v1934, %v1926
        %v2495 = vpack.c.b16 %v1943, %v1935
        %v2496 = vpack.c.b16 %v1944, %v1936
        %v2497 = vpack.c.b16 %v1945, %v1937
        %v2498 = vpack.c.b16 %v1946, %v1938
        %v2499 = vpack.c.b16 %v1947, %v1939
        %v2500 = vpack.c.b16 %v1948, %v1940
        %v2501 = vpack.c.b16 %v1949, %v1941
        %v2502 = vpack.c.b16 %v1950, %v1942
        %v2503 = vpack.c.b16 %v1959, %v1951
        %v2504 = vpack.c.b16 %v1960, %v1952
        %v2505 = vpack.c.b16 %v1961, %v1953
        %v2506 = vpack.c.b16 %v1962, %v1954
        %v2507 = vpack.c.b16 %v1963, %v1955
        %v2508 = vpack.c.b16 %v1964, %v1956
        %v2509 = vpack.c.b16 %v1965, %v1957
        %v2510 = vpack.c.b16 %v1966, %v1958
        %v2511 = vpack.c.b16 %v1975, %v1967
        %v2512 = vpack.c.b16 %v1976, %v1968
        %v2513 = vpack.c.b16 %v1977, %v1969
        %v2514 = vpack.c.b16 %v1978, %v1970
        %v2515 = vpack.c.b16 %v1979, %v1971
        %v2516 = vpack.c.b16 %v1980, %v1972
        %v2517 = vpack.c.b16 %v1981, %v1973
        %v2518 = vpack.c.b16 %v1982, %v1974
        %v2519 = vpack.c.b16 %v1991, %v1983
        %v2520 = vpack.c.b16 %v1992, %v1984
        %v2521 = vpack.c.b16 %v1993, %v1985
        %v2522 = vpack.c.b16 %v1994, %v1986
        %v2523 = vpack.c.b16 %v1995, %v1987
        %v2524 = vpack.c.b16 %v1996, %v1988
        %v2525 = vpack.c.b16 %v1997, %v1989
        %v2526 = vpack.c.b16 %v1998, %v1990
        %v2527 = vpack.c.b16 %v2007, %v1999
        %v2528 = vpack.c.b16 %v2008, %v2000
        %v2529 = vpack.c.b16 %v2009, %v2001
        %v2530 = vpack.c.b16 %v2010, %v2002
        %v2531 = vpack.c.b16 %v2011, %v2003
        %v2532 = vpack.c.b16 %v2012, %v2004
        %v2533 = vpack.c.b16 %v2013, %v2005
        %v2534 = vpack.c.b16 %v2014, %v2006
        %v2535 = vpack.c.b16 %v2023, %v2015
        %v2536 = vpack.c.b16 %v2024, %v2016
        %v2537 = vpack.c.b16 %v2025, %v2017
        %v2538 = vpack.c.b16 %v2026, %v2018
        %v2539 = vpack.c.b16 %v2027, %v2019
        %v2540 = vpack.c.b16 %v2028, %v2020
        %v2541 = vpack.c.b16 %v2029, %v2021
        %v2542 = vpack.c.b16 %v2030, %v2022
        %v2543 = vpack.c.b16 %v2039, %v2031
        %v2544 = vpack.c.b16 %v2040, %v2032
        %v2545 = vpack.c.b16 %v2041, %v2033
        %v2546 = vpack.c.b16 %v2042, %v2034
        %v2547 = vpack.c.b16 %v2043, %v2035
        %v2548 = vpack.c.b16 %v2044, %v2036
        %v2549 = vpack.c.b16 %v2045, %v2037
        %v2550 = vpack.c.b16 %v2046, %v2038
        %v2551 = vpack.c.b16 %v2055, %v2047
        %v2552 = vpack.c.b16 %v2056, %v2048
        %v2553 = vpack.c.b16 %v2057, %v2049
        %v2554 = vpack.c.b16 %v2058, %v2050
        %v2555 = vpack.c.b16 %v2059, %v2051
        %v2556 = vpack.c.b16 %v2060, %v2052
        %v2557 = vpack.c.b16 %v2061, %v2053
        %v2558 = vpack.c.b16 %v2062, %v2054
        %v2559 = vpack.c.b16 %v2071, %v2063
        %v2560 = vpack.c.b16 %v2072, %v2064
        %v2561 = vpack.c.b16 %v2073, %v2065
        %v2562 = vpack.c.b16 %v2074, %v2066
        %v2563 = vpack.c.b16 %v2075, %v2067
        %v2564 = vpack.c.b16 %v2076, %v2068
        %v2565 = vpack.c.b16 %v2077, %v2069
        %v2566 = vpack.c.b16 %v2078, %v2070
        %v2567 = vpack.c.b16 %v2087, %v2079
        %v2568 = vpack.c.b16 %v2088, %v2080
        %v2569 = vpack.c.b16 %v2089, %v2081
        %v2570 = vpack.c.b16 %v2090, %v2082
        %v2571 = vpack.c.b16 %v2091, %v2083
        %v2572 = vpack.c.b16 %v2092, %v2084
        %v2573 = vpack.c.b16 %v2093, %v2085
        %v2574 = vpack.c.b16 %v2094, %v2086
        %v2575 = vpack.c.b16 %v2103, %v2095
        %v2576 = vpack.c.b16 %v2104, %v2096
        %v2577 = vpack.c.b16 %v2105, %v2097
        %v2578 = vpack.c.b16 %v2106, %v2098
        %v2579 = vpack.c.b16 %v2107, %v2099
        %v2580 = vpack.c.b16 %v2108, %v2100
        %v2581 = vpack.c.b16 %v2109, %v2101
        %v2582 = vpack.c.b16 %v2110, %v2102
        %v2583 = vpack.c.b16 %v2119, %v2111
        %v2584 = vpack.c.b16 %v2120, %v2112
        %v2585 = vpack.c.b16 %v2121, %v2113
        %v2586 = vpack.c.b16 %v2122, %v2114
        %v2587 = vpack.c.b16 %v2123, %v2115
        %v2588 = vpack.c.b16 %v2124, %v2116
        %v2589 = vpack.c.b16 %v2125, %v2117
        %v2590 = vpack.c.b16 %v2126, %v2118
        %v2591 = vpack.c.b16 %v2135, %v2127
        %v2592 = vpack.c.b16 %v2136, %v2128
        %v2593 = vpack.c.b16 %v2137, %v2129
        %v2594 = vpack.c.b16 %v2138, %v2130
        %v2595 = vpack.c.b16 %v2139, %v2131
        %v2596 = vpack.c.b16 %v2140, %v2132
        %v2597 = vpack.c.b16 %v2141, %v2133
        %v2598 = vpack.c.b16 %v2142, %v2134
        %v2599 = vpack.c.b16 %v2151, %v2143
        %v2600 = vpack.c.b16 %v2152, %v2144
        %v2601 = vpack.c.b16 %v2153, %v2145
        %v2602 = vpack.c.b16 %v2154, %v2146
        %v2603 = vpack.c.b16 %v2155, %v2147
        %v2604 = vpack.c.b16 %v2156, %v2148
        %v2605 = vpack.c.b16 %v2157, %v2149
        %v2606 = vpack.c.b16 %v2158, %v2150
        %3055 = vmatprep.subr.bf16.mxu0 %v2160
        %3056 = vmatpush1.bf16.msra.mxu0 %v2159
        %3057 = vmatprep.subr.bf16.mxu0 %v2168
        %3058 = vmatpush1.bf16.msra.mxu0 %v2167
        %3059 = vmatprep.subr.bf16.mxu0 %v2176
        %3060 = vmatpush1.bf16.msra.mxu0 %v2175
        %3061 = vmatprep.subr.bf16.mxu0 %v2184
        %3062 = vmatpush1.bf16.msra.mxu0 %v2183
        %3063 = vmatprep.subr.bf16.mxu0 %v2192
        %3064 = vmatpush1.bf16.msra.mxu0 %v2191
        %3065 = vmatprep.subr.bf16.mxu0 %v2200
        %3066 = vmatpush1.bf16.msra.mxu0 %v2199
        %3067 = vmatprep.subr.bf16.mxu0 %v2208
        %3068 = vmatpush1.bf16.msra.mxu0 %v2207
        %3069 = vmatprep.subr.bf16.mxu0 %v2216
        %3070 = vmatpush1.bf16.msra.mxu0 %v2215
        %3071 = vmatprep.subr.bf16.mxu0 %v2224
        %3072 = vmatpush1.bf16.msra.mxu0 %v2223
        %3073 = vmatprep.subr.bf16.mxu0 %v2232
        %3074 = vmatpush1.bf16.msra.mxu0 %v2231
        %3075 = vmatprep.subr.bf16.mxu0 %v2240
        %3076 = vmatpush1.bf16.msra.mxu0 %v2239
        %3077 = vmatprep.subr.bf16.mxu0 %v2248
        %3078 = vmatpush1.bf16.msra.mxu0 %v2247
        %3079 = vmatprep.subr.bf16.mxu0 %v2256
        %3080 = vmatpush1.bf16.msra.mxu0 %v2255
        %3081 = vmatprep.subr.bf16.mxu0 %v2264
        %3082 = vmatpush1.bf16.msra.mxu0 %v2263
        %3083 = vmatprep.subr.bf16.mxu0 %v2272
        %3084 = vmatpush1.bf16.msra.mxu0 %v2271
        %3085 = vmatprep.subr.bf16.mxu0 %v2280
        %3086 = vmatpush1.bf16.msra.mxu0 %v2279
        %3087 = vmatprep.mubr.bf16.mxu0 %v802
        %3088 = vmatmul.mubr.bf16.gmra.mrb[0].mxu0 %v801
        %v3089 = vpop.f32.mrb[0].mxu0
        %v3090 = vadd.f32 %v753, %v3089
        %v3091 = vpop.f32.mrb[0].mxu0
        %v3092 = vadd.f32 %v757, %v3091
        %v3093 = vpop.f32.mrb[0].mxu0
        %v3094 = vpop.f32.mrb[0].mxu0
        %3095 = vdwg.mxu0
        %3096 = vmatprep.subr.bf16.mxu0 %v2288
        %3097 = vmatpush1.bf16.msra.mxu0 %v2287
        %3098 = vmatprep.subr.bf16.mxu0 %v2296
        %3099 = vmatpush1.bf16.msra.mxu0 %v2295
        %3100 = vmatprep.subr.bf16.mxu0 %v2304
        %3101 = vmatpush1.bf16.msra.mxu0 %v2303
        %3102 = vmatprep.subr.bf16.mxu0 %v2312
        %3103 = vmatpush1.bf16.msra.mxu0 %v2311
        %3104 = vmatprep.subr.bf16.mxu0 %v2320
        %3105 = vmatpush1.bf16.msra.mxu0 %v2319
        %3106 = vmatprep.subr.bf16.mxu0 %v2328
        %3107 = vmatpush1.bf16.msra.mxu0 %v2327
        %3108 = vmatprep.subr.bf16.mxu0 %v2336
        %3109 = vmatpush1.bf16.msra.mxu0 %v2335
        %3110 = vmatprep.subr.bf16.mxu0 %v2344
        %3111 = vmatpush1.bf16.msra.mxu0 %v2343
        %3112 = vmatprep.subr.bf16.mxu0 %v2352
        %3113 = vmatpush1.bf16.msra.mxu0 %v2351
        %3114 = vmatprep.subr.bf16.mxu0 %v2360
        %3115 = vmatpush1.bf16.msra.mxu0 %v2359
        %3116 = vmatprep.subr.bf16.mxu0 %v2368
        %3117 = vmatpush1.bf16.msra.mxu0 %v2367
        %3118 = vmatprep.subr.bf16.mxu0 %v2376
        %3119 = vmatpush1.bf16.msra.mxu0 %v2375
        %3120 = vmatprep.subr.bf16.mxu0 %v2384
        %3121 = vmatpush1.bf16.msra.mxu0 %v2383
        %3122 = vmatprep.subr.bf16.mxu0 %v2392
        %3123 = vmatpush1.bf16.msra.mxu0 %v2391
        %3124 = vmatprep.subr.bf16.mxu0 %v2400
        %3125 = vmatpush1.bf16.msra.mxu0 %v2399
        %3126 = vmatprep.subr.bf16.mxu0 %v2408
        %3127 = vmatpush1.bf16.msra.mxu0 %v2407
        %3128 = vmatprep.mubr.bf16.mxu0 %v804
        %3129 = vmatmul.mubr.bf16.gmra.mrb[0].mxu0 %v803
        %v3130 = vpop.f32.mrb[0].mxu0
        %v3131 = vadd.f32 %v3090, %v3130
        %v3132 = vpop.f32.mrb[0].mxu0
        %v3133 = vadd.f32 %v3092, %v3132
        %v3134 = vpop.f32.mrb[0].mxu0
        %v3135 = vpop.f32.mrb[0].mxu0
        %3136 = vdwg.mxu0
        %3137 = vmatprep.subr.bf16.mxu0 %v2416
        %3138 = vmatpush1.bf16.msra.mxu0 %v2415
        %3139 = vmatprep.subr.bf16.mxu0 %v2424
        %3140 = vmatpush1.bf16.msra.mxu0 %v2423
        %3141 = vmatprep.subr.bf16.mxu0 %v2432
        %3142 = vmatpush1.bf16.msra.mxu0 %v2431
        %3143 = vmatprep.subr.bf16.mxu0 %v2440
        %3144 = vmatpush1.bf16.msra.mxu0 %v2439
        %3145 = vmatprep.subr.bf16.mxu0 %v2448
        %3146 = vmatpush1.bf16.msra.mxu0 %v2447
        %3147 = vmatprep.subr.bf16.mxu0 %v2456
        %3148 = vmatpush1.bf16.msra.mxu0 %v2455
        %3149 = vmatprep.subr.bf16.mxu0 %v2464
        %3150 = vmatpush1.bf16.msra.mxu0 %v2463
        %3151 = vmatprep.subr.bf16.mxu0 %v2472
        %3152 = vmatpush1.bf16.msra.mxu0 %v2471
        %3153 = vmatprep.subr.bf16.mxu0 %v2480
        %3154 = vmatpush1.bf16.msra.mxu0 %v2479
        %3155 = vmatprep.subr.bf16.mxu0 %v2488
        %3156 = vmatpush1.bf16.msra.mxu0 %v2487
        %3157 = vmatprep.subr.bf16.mxu0 %v2496
        %3158 = vmatpush1.bf16.msra.mxu0 %v2495
        %3159 = vmatprep.subr.bf16.mxu0 %v2504
        %3160 = vmatpush1.bf16.msra.mxu0 %v2503
        %3161 = vmatprep.subr.bf16.mxu0 %v2512
        %3162 = vmatpush1.bf16.msra.mxu0 %v2511
        %3163 = vmatprep.subr.bf16.mxu0 %v2520
        %3164 = vmatpush1.bf16.msra.mxu0 %v2519
        %3165 = vmatprep.subr.bf16.mxu0 %v2528
        %3166 = vmatpush1.bf16.msra.mxu0 %v2527
        %3167 = vmatprep.subr.bf16.mxu0 %v2536
        %3168 = vmatpush1.bf16.msra.mxu0 %v2535
        %3169 = vmatprep.mubr.bf16.mxu0 %v806
        %3170 = vmatmul.mubr.bf16.gmra.mrb[0].mxu0 %v805
        %v3171 = vpop.f32.mrb[0].mxu0
        %v3172 = vadd.f32 %v3131, %v3171
        %v3173 = vpop.f32.mrb[0].mxu0
        %v3174 = vadd.f32 %v3133, %v3173
        %v3175 = vpop.f32.mrb[0].mxu0
        %v3176 = vpop.f32.mrb[0].mxu0
        %3177 = vdwg.mxu0
        %3178 = vmatprep.subr.bf16.mxu0 %v2544
        %3179 = vmatpush1.bf16.msra.mxu0 %v2543
        %3180 = vmatprep.subr.bf16.mxu0 %v2552
        %3181 = vmatpush1.bf16.msra.mxu0 %v2551
        %3182 = vmatprep.subr.bf16.mxu0 %v2560
        %3183 = vmatpush1.bf16.msra.mxu0 %v2559
        %3184 = vmatprep.subr.bf16.mxu0 %v2568
        %3185 = vmatpush1.bf16.msra.mxu0 %v2567
        %3186 = vmatprep.subr.bf16.mxu0 %v2576
        %3187 = vmatpush1.bf16.msra.mxu0 %v2575
        %3188 = vmatprep.subr.bf16.mxu0 %v2584
        %3189 = vmatpush1.bf16.msra.mxu0 %v2583
        %3190 = vmatprep.subr.bf16.mxu0 %v2592
        %3191 = vmatpush1.bf16.msra.mxu0 %v2591
        %3192 = vmatprep.subr.bf16.mxu0 %v2600
        %3193 = vmatpush1.bf16.msra.mxu0 %v2599
        %3194 = vmatprep.subr.bf16.mxu0 0
        %3195 = vmatpush1.bf16.msra.mxu0 0
        %3196 = vmatprep.subr.bf16.mxu0 0
        %3197 = vmatpush1.bf16.msra.mxu0 0
        %3198 = vmatprep.subr.bf16.mxu0 0
        %3199 = vmatpush1.bf16.msra.mxu0 0
        %3200 = vmatprep.subr.bf16.mxu0 0
        %3201 = vmatpush1.bf16.msra.mxu0 0
        %3202 = vmatprep.subr.bf16.mxu0 0
        %3203 = vmatpush1.bf16.msra.mxu0 0
        %3204 = vmatprep.subr.bf16.mxu0 0
        %3205 = vmatpush1.bf16.msra.mxu0 0
        %3206 = vmatprep.subr.bf16.mxu0 0
        %3207 = vmatpush1.bf16.msra.mxu0 0
        %3208 = vmatprep.subr.bf16.mxu0 0
        %3209 = vmatpush1.bf16.msra.mxu0 0
        %3210 = vmatprep.mubr.bf16.mxu0 0
        %3211 = vmatmul.mubr.bf16.gmra.mrb[0].mxu0 %v807
        %v3212 = vpop.f32.mrb[0].mxu0
        %v3213 = vadd.f32 %v3172, %v3212
        %v3214 = vpop.f32.mrb[0].mxu0
        %v3215 = vadd.f32 %v3174, %v3214
        %v3216 = vpop.f32.mrb[0].mxu0
        %v3217 = vpop.f32.mrb[0].mxu0
        %3218 = vdwg.mxu0
        %3219 = vmatprep.subr.bf16.mxu0 %v2162
        %3220 = vmatpush1.bf16.msra.mxu0 %v2161
        %3221 = vmatprep.subr.bf16.mxu0 %v2170
        %3222 = vmatpush1.bf16.msra.mxu0 %v2169
        %3223 = vmatprep.subr.bf16.mxu0 %v2178
        %3224 = vmatpush1.bf16.msra.mxu0 %v2177
        %3225 = vmatprep.subr.bf16.mxu0 %v2186
        %3226 = vmatpush1.bf16.msra.mxu0 %v2185
        %3227 = vmatprep.subr.bf16.mxu0 %v2194
        %3228 = vmatpush1.bf16.msra.mxu0 %v2193
        %3229 = vmatprep.subr.bf16.mxu0 %v2202
        %3230 = vmatpush1.bf16.msra.mxu0 %v2201
        %3231 = vmatprep.subr.bf16.mxu0 %v2210
        %3232 = vmatpush1.bf16.msra.mxu0 %v2209
        %3233 = vmatprep.subr.bf16.mxu0 %v2218
        %3234 = vmatpush1.bf16.msra.mxu0 %v2217
        %3235 = vmatprep.subr.bf16.mxu0 %v2226
        %3236 = vmatpush1.bf16.msra.mxu0 %v2225
        %3237 = vmatprep.subr.bf16.mxu0 %v2234
        %3238 = vmatpush1.bf16.msra.mxu0 %v2233
        %3239 = vmatprep.subr.bf16.mxu0 %v2242
        %3240 = vmatpush1.bf16.msra.mxu0 %v2241
        %3241 = vmatprep.subr.bf16.mxu0 %v2250
        %3242 = vmatpush1.bf16.msra.mxu0 %v2249
        %3243 = vmatprep.subr.bf16.mxu0 %v2258
        %3244 = vmatpush1.bf16.msra.mxu0 %v2257
        %3245 = vmatprep.subr.bf16.mxu0 %v2266
        %3246 = vmatpush1.bf16.msra.mxu0 %v2265
        %3247 = vmatprep.subr.bf16.mxu0 %v2274
        %3248 = vmatpush1.bf16.msra.mxu0 %v2273
        %3249 = vmatprep.subr.bf16.mxu0 %v2282
        %3250 = vmatpush1.bf16.msra.mxu0 %v2281
        %3251 = vmatprep.mubr.bf16.mxu0 %v802
        %3252 = vmatmul.mubr.bf16.gmra.mrb[0].mxu0 %v801
        %v3253 = vpop.f32.mrb[0].mxu0
        %v3254 = vadd.f32 %v761, %v3253
        %v3255 = vpop.f32.mrb[0].mxu0
        %v3256 = vadd.f32 %v765, %v3255
        %v3257 = vpop.f32.mrb[0].mxu0
        %v3258 = vpop.f32.mrb[0].mxu0
        %3259 = vdwg.mxu0
        %3260 = vmatprep.subr.bf16.mxu0 %v2290
        %3261 = vmatpush1.bf16.msra.mxu0 %v2289
        %3262 = vmatprep.subr.bf16.mxu0 %v2298
        %3263 = vmatpush1.bf16.msra.mxu0 %v2297
        %3264 = vmatprep.subr.bf16.mxu0 %v2306
        %3265 = vmatpush1.bf16.msra.mxu0 %v2305
        %3266 = vmatprep.subr.bf16.mxu0 %v2314
        %3267 = vmatpush1.bf16.msra.mxu0 %v2313
        %3268 = vmatprep.subr.bf16.mxu0 %v2322
        %3269 = vmatpush1.bf16.msra.mxu0 %v2321
        %3270 = vmatprep.subr.bf16.mxu0 %v2330
        %3271 = vmatpush1.bf16.msra.mxu0 %v2329
        %3272 = vmatprep.subr.bf16.mxu0 %v2338
        %3273 = vmatpush1.bf16.msra.mxu0 %v2337
        %3274 = vmatprep.subr.bf16.mxu0 %v2346
        %3275 = vmatpush1.bf16.msra.mxu0 %v2345
        %3276 = vmatprep.subr.bf16.mxu0 %v2354
        %3277 = vmatpush1.bf16.msra.mxu0 %v2353
        %3278 = vmatprep.subr.bf16.mxu0 %v2362
        %3279 = vmatpush1.bf16.msra.mxu0 %v2361
        %3280 = vmatprep.subr.bf16.mxu0 %v2370
        %3281 = vmatpush1.bf16.msra.mxu0 %v2369
        %3282 = vmatprep.subr.bf16.mxu0 %v2378
        %3283 = vmatpush1.bf16.msra.mxu0 %v2377
        %3284 = vmatprep.subr.bf16.mxu0 %v2386
        %3285 = vmatpush1.bf16.msra.mxu0 %v2385
        %3286 = vmatprep.subr.bf16.mxu0 %v2394
        %3287 = vmatpush1.bf16.msra.mxu0 %v2393
        %3288 = vmatprep.subr.bf16.mxu0 %v2402
        %3289 = vmatpush1.bf16.msra.mxu0 %v2401
        %3290 = vmatprep.subr.bf16.mxu0 %v2410
        %3291 = vmatpush1.bf16.msra.mxu0 %v2409
        %3292 = vmatprep.mubr.bf16.mxu0 %v804
        %3293 = vmatmul.mubr.bf16.gmra.mrb[0].mxu0 %v803
        %v3294 = vpop.f32.mrb[0].mxu0
        %v3295 = vadd.f32 %v3254, %v3294
        %v3296 = vpop.f32.mrb[0].mxu0
        %v3297 = vadd.f32 %v3256, %v3296
        %v3298 = vpop.f32.mrb[0].mxu0
        %v3299 = vpop.f32.mrb[0].mxu0
        %3300 = vdwg.mxu0
        %3301 = vmatprep.subr.bf16.mxu0 %v2418
        %3302 = vmatpush1.bf16.msra.mxu0 %v2417
        %3303 = vmatprep.subr.bf16.mxu0 %v2426
        %3304 = vmatpush1.bf16.msra.mxu0 %v2425
        %3305 = vmatprep.subr.bf16.mxu0 %v2434
        %3306 = vmatpush1.bf16.msra.mxu0 %v2433
        %3307 = vmatprep.subr.bf16.mxu0 %v2442
        %3308 = vmatpush1.bf16.msra.mxu0 %v2441
        %3309 = vmatprep.subr.bf16.mxu0 %v2450
        %3310 = vmatpush1.bf16.msra.mxu0 %v2449
        %3311 = vmatprep.subr.bf16.mxu0 %v2458
        %3312 = vmatpush1.bf16.msra.mxu0 %v2457
        %3313 = vmatprep.subr.bf16.mxu0 %v2466
        %3314 = vmatpush1.bf16.msra.mxu0 %v2465
        %3315 = vmatprep.subr.bf16.mxu0 %v2474
        %3316 = vmatpush1.bf16.msra.mxu0 %v2473
        %3317 = vmatprep.subr.bf16.mxu0 %v2482
        %3318 = vmatpush1.bf16.msra.mxu0 %v2481
        %3319 = vmatprep.subr.bf16.mxu0 %v2490
        %3320 = vmatpush1.bf16.msra.mxu0 %v2489
        %3321 = vmatprep.subr.bf16.mxu0 %v2498
        %3322 = vmatpush1.bf16.msra.mxu0 %v2497
        %3323 = vmatprep.subr.bf16.mxu0 %v2506
        %3324 = vmatpush1.bf16.msra.mxu0 %v2505
        %3325 = vmatprep.subr.bf16.mxu0 %v2514
        %3326 = vmatpush1.bf16.msra.mxu0 %v2513
        %3327 = vmatprep.subr.bf16.mxu0 %v2522
        %3328 = vmatpush1.bf16.msra.mxu0 %v2521
        %3329 = vmatprep.subr.bf16.mxu0 %v2530
        %3330 = vmatpush1.bf16.msra.mxu0 %v2529
        %3331 = vmatprep.subr.bf16.mxu0 %v2538
        %3332 = vmatpush1.bf16.msra.mxu0 %v2537
        %3333 = vmatprep.mubr.bf16.mxu0 %v806
        %3334 = vmatmul.mubr.bf16.gmra.mrb[0].mxu0 %v805
        %v3335 = vpop.f32.mrb[0].mxu0
        %v3336 = vadd.f32 %v3295, %v3335
        %v3337 = vpop.f32.mrb[0].mxu0
        %v3338 = vadd.f32 %v3297, %v3337
        %v3339 = vpop.f32.mrb[0].mxu0
        %v3340 = vpop.f32.mrb[0].mxu0
        %3341 = vdwg.mxu0
        %3342 = vmatprep.subr.bf16.mxu0 %v2546
        %3343 = vmatpush1.bf16.msra.mxu0 %v2545
        %3344 = vmatprep.subr.bf16.mxu0 %v2554
        %3345 = vmatpush1.bf16.msra.mxu0 %v2553
        %3346 = vmatprep.subr.bf16.mxu0 %v2562
        %3347 = vmatpush1.bf16.msra.mxu0 %v2561
        %3348 = vmatprep.subr.bf16.mxu0 %v2570
        %3349 = vmatpush1.bf16.msra.mxu0 %v2569
        %3350 = vmatprep.subr.bf16.mxu0 %v2578
        %3351 = vmatpush1.bf16.msra.mxu0 %v2577
        %3352 = vmatprep.subr.bf16.mxu0 %v2586
        %3353 = vmatpush1.bf16.msra.mxu0 %v2585
        %3354 = vmatprep.subr.bf16.mxu0 %v2594
        %3355 = vmatpush1.bf16.msra.mxu0 %v2593
        %3356 = vmatprep.subr.bf16.mxu0 %v2602
        %3357 = vmatpush1.bf16.msra.mxu0 %v2601
        %3358 = vmatprep.subr.bf16.mxu0 0
        %3359 = vmatpush1.bf16.msra.mxu0 0
        %3360 = vmatprep.subr.bf16.mxu0 0
        %3361 = vmatpush1.bf16.msra.mxu0 0
        %3362 = vmatprep.subr.bf16.mxu0 0
        %3363 = vmatpush1.bf16.msra.mxu0 0
        %3364 = vmatprep.subr.bf16.mxu0 0
        %3365 = vmatpush1.bf16.msra.mxu0 0
        %3366 = vmatprep.subr.bf16.mxu0 0
        %3367 = vmatpush1.bf16.msra.mxu0 0
        %3368 = vmatprep.subr.bf16.mxu0 0
        %3369 = vmatpush1.bf16.msra.mxu0 0
        %3370 = vmatprep.subr.bf16.mxu0 0
        %3371 = vmatpush1.bf16.msra.mxu0 0
        %3372 = vmatprep.subr.bf16.mxu0 0
        %3373 = vmatpush1.bf16.msra.mxu0 0
        %3374 = vmatprep.mubr.bf16.mxu0 0
        %3375 = vmatmul.mubr.bf16.gmra.mrb[0].mxu0 %v807
        %v3376 = vpop.f32.mrb[0].mxu0
        %v3377 = vadd.f32 %v3336, %v3376
        %v3378 = vpop.f32.mrb[0].mxu0
        %v3379 = vadd.f32 %v3338, %v3378
        %v3380 = vpop.f32.mrb[0].mxu0
        %v3381 = vpop.f32.mrb[0].mxu0
        %3382 = vdwg.mxu0
        %3383 = vmatprep.subr.bf16.mxu0 %v2164
        %3384 = vmatpush1.bf16.msra.mxu0 %v2163
        %3385 = vmatprep.subr.bf16.mxu0 %v2172
        %3386 = vmatpush1.bf16.msra.mxu0 %v2171
        %3387 = vmatprep.subr.bf16.mxu0 %v2180
        %3388 = vmatpush1.bf16.msra.mxu0 %v2179
        %3389 = vmatprep.subr.bf16.mxu0 %v2188
        %3390 = vmatpush1.bf16.msra.mxu0 %v2187
        %3391 = vmatprep.subr.bf16.mxu0 %v2196
        %3392 = vmatpush1.bf16.msra.mxu0 %v2195
        %3393 = vmatprep.subr.bf16.mxu0 %v2204
        %3394 = vmatpush1.bf16.msra.mxu0 %v2203
        %3395 = vmatprep.subr.bf16.mxu0 %v2212
        %3396 = vmatpush1.bf16.msra.mxu0 %v2211
        %3397 = vmatprep.subr.bf16.mxu0 %v2220
        %3398 = vmatpush1.bf16.msra.mxu0 %v2219
        %3399 = vmatprep.subr.bf16.mxu0 %v2228
        %3400 = vmatpush1.bf16.msra.mxu0 %v2227
        %3401 = vmatprep.subr.bf16.mxu0 %v2236
        %3402 = vmatpush1.bf16.msra.mxu0 %v2235
        %3403 = vmatprep.subr.bf16.mxu0 %v2244
        %3404 = vmatpush1.bf16.msra.mxu0 %v2243
        %3405 = vmatprep.subr.bf16.mxu0 %v2252
        %3406 = vmatpush1.bf16.msra.mxu0 %v2251
        %3407 = vmatprep.subr.bf16.mxu0 %v2260
        %3408 = vmatpush1.bf16.msra.mxu0 %v2259
        %3409 = vmatprep.subr.bf16.mxu0 %v2268
        %3410 = vmatpush1.bf16.msra.mxu0 %v2267
        %3411 = vmatprep.subr.bf16.mxu0 %v2276
        %3412 = vmatpush1.bf16.msra.mxu0 %v2275
        %3413 = vmatprep.subr.bf16.mxu0 %v2284
        %3414 = vmatpush1.bf16.msra.mxu0 %v2283
        %3415 = vmatprep.mubr.bf16.mxu0 %v802
        %3416 = vmatmul.mubr.bf16.gmra.mrb[0].mxu0 %v801
        %v3417 = vpop.f32.mrb[0].mxu0
        %v3418 = vadd.f32 %v769, %v3417
        %v3419 = vpop.f32.mrb[0].mxu0
        %v3420 = vadd.f32 %v773, %v3419
        %v3421 = vpop.f32.mrb[0].mxu0
        %v3422 = vpop.f32.mrb[0].mxu0
        %3423 = vdwg.mxu0
        %3424 = vmatprep.subr.bf16.mxu0 %v2292
        %3425 = vmatpush1.bf16.msra.mxu0 %v2291
        %3426 = vmatprep.subr.bf16.mxu0 %v2300
        %3427 = vmatpush1.bf16.msra.mxu0 %v2299
        %3428 = vmatprep.subr.bf16.mxu0 %v2308
        %3429 = vmatpush1.bf16.msra.mxu0 %v2307
        %3430 = vmatprep.subr.bf16.mxu0 %v2316
        %3431 = vmatpush1.bf16.msra.mxu0 %v2315
        %3432 = vmatprep.subr.bf16.mxu0 %v2324
        %3433 = vmatpush1.bf16.msra.mxu0 %v2323
        %3434 = vmatprep.subr.bf16.mxu0 %v2332
        %3435 = vmatpush1.bf16.msra.mxu0 %v2331
        %3436 = vmatprep.subr.bf16.mxu0 %v2340
        %3437 = vmatpush1.bf16.msra.mxu0 %v2339
        %3438 = vmatprep.subr.bf16.mxu0 %v2348
        %3439 = vmatpush1.bf16.msra.mxu0 %v2347
        %3440 = vmatprep.subr.bf16.mxu0 %v2356
        %3441 = vmatpush1.bf16.msra.mxu0 %v2355
        %3442 = vmatprep.subr.bf16.mxu0 %v2364
        %3443 = vmatpush1.bf16.msra.mxu0 %v2363
        %3444 = vmatprep.subr.bf16.mxu0 %v2372
        %3445 = vmatpush1.bf16.msra.mxu0 %v2371
        %3446 = vmatprep.subr.bf16.mxu0 %v2380
        %3447 = vmatpush1.bf16.msra.mxu0 %v2379
        %3448 = vmatprep.subr.bf16.mxu0 %v2388
        %3449 = vmatpush1.bf16.msra.mxu0 %v2387
        %3450 = vmatprep.subr.bf16.mxu0 %v2396
        %3451 = vmatpush1.bf16.msra.mxu0 %v2395
        %3452 = vmatprep.subr.bf16.mxu0 %v2404
        %3453 = vmatpush1.bf16.msra.mxu0 %v2403
        %3454 = vmatprep.subr.bf16.mxu0 %v2412
        %3455 = vmatpush1.bf16.msra.mxu0 %v2411
        %3456 = vmatprep.mubr.bf16.mxu0 %v804
        %3457 = vmatmul.mubr.bf16.gmra.mrb[0].mxu0 %v803
        %v3458 = vpop.f32.mrb[0].mxu0
        %v3459 = vadd.f32 %v3418, %v3458
        %v3460 = vpop.f32.mrb[0].mxu0
        %v3461 = vadd.f32 %v3420, %v3460
        %v3462 = vpop.f32.mrb[0].mxu0
        %v3463 = vpop.f32.mrb[0].mxu0
        %3464 = vdwg.mxu0
        %3465 = vmatprep.subr.bf16.mxu0 %v2420
        %3466 = vmatpush1.bf16.msra.mxu0 %v2419
        %3467 = vmatprep.subr.bf16.mxu0 %v2428
        %3468 = vmatpush1.bf16.msra.mxu0 %v2427
        %3469 = vmatprep.subr.bf16.mxu0 %v2436
        %3470 = vmatpush1.bf16.msra.mxu0 %v2435
        %3471 = vmatprep.subr.bf16.mxu0 %v2444
        %3472 = vmatpush1.bf16.msra.mxu0 %v2443
        %3473 = vmatprep.subr.bf16.mxu0 %v2452
        %3474 = vmatpush1.bf16.msra.mxu0 %v2451
        %3475 = vmatprep.subr.bf16.mxu0 %v2460
        %3476 = vmatpush1.bf16.msra.mxu0 %v2459
        %3477 = vmatprep.subr.bf16.mxu0 %v2468
        %3478 = vmatpush1.bf16.msra.mxu0 %v2467
        %3479 = vmatprep.subr.bf16.mxu0 %v2476
        %3480 = vmatpush1.bf16.msra.mxu0 %v2475
        %3481 = vmatprep.subr.bf16.mxu0 %v2484
        %3482 = vmatpush1.bf16.msra.mxu0 %v2483
        %3483 = vmatprep.subr.bf16.mxu0 %v2492
        %3484 = vmatpush1.bf16.msra.mxu0 %v2491
        %3485 = vmatprep.subr.bf16.mxu0 %v2500
        %3486 = vmatpush1.bf16.msra.mxu0 %v2499
        %3487 = vmatprep.subr.bf16.mxu0 %v2508
        %3488 = vmatpush1.bf16.msra.mxu0 %v2507
        %3489 = vmatprep.subr.bf16.mxu0 %v2516
        %3490 = vmatpush1.bf16.msra.mxu0 %v2515
        %3491 = vmatprep.subr.bf16.mxu0 %v2524
        %3492 = vmatpush1.bf16.msra.mxu0 %v2523
        %3493 = vmatprep.subr.bf16.mxu0 %v2532
        %3494 = vmatpush1.bf16.msra.mxu0 %v2531
        %3495 = vmatprep.subr.bf16.mxu0 %v2540
        %3496 = vmatpush1.bf16.msra.mxu0 %v2539
        %3497 = vmatprep.mubr.bf16.mxu0 %v806
        %3498 = vmatmul.mubr.bf16.gmra.mrb[0].mxu0 %v805
        %v3499 = vpop.f32.mrb[0].mxu0
        %v3500 = vadd.f32 %v3459, %v3499
        %v3501 = vpop.f32.mrb[0].mxu0
        %v3502 = vadd.f32 %v3461, %v3501
        %v3503 = vpop.f32.mrb[0].mxu0
        %v3504 = vpop.f32.mrb[0].mxu0
        %3505 = vdwg.mxu0
        %3506 = vmatprep.subr.bf16.mxu0 %v2548
        %3507 = vmatpush1.bf16.msra.mxu0 %v2547
        %3508 = vmatprep.subr.bf16.mxu0 %v2556
        %3509 = vmatpush1.bf16.msra.mxu0 %v2555
        %3510 = vmatprep.subr.bf16.mxu0 %v2564
        %3511 = vmatpush1.bf16.msra.mxu0 %v2563
        %3512 = vmatprep.subr.bf16.mxu0 %v2572
        %3513 = vmatpush1.bf16.msra.mxu0 %v2571
        %3514 = vmatprep.subr.bf16.mxu0 %v2580
        %3515 = vmatpush1.bf16.msra.mxu0 %v2579
        %3516 = vmatprep.subr.bf16.mxu0 %v2588
        %3517 = vmatpush1.bf16.msra.mxu0 %v2587
        %3518 = vmatprep.subr.bf16.mxu0 %v2596
        %3519 = vmatpush1.bf16.msra.mxu0 %v2595
        %3520 = vmatprep.subr.bf16.mxu0 %v2604
        %3521 = vmatpush1.bf16.msra.mxu0 %v2603
        %3522 = vmatprep.subr.bf16.mxu0 0
        %3523 = vmatpush1.bf16.msra.mxu0 0
        %3524 = vmatprep.subr.bf16.mxu0 0
        %3525 = vmatpush1.bf16.msra.mxu0 0
        %3526 = vmatprep.subr.bf16.mxu0 0
        %3527 = vmatpush1.bf16.msra.mxu0 0
        %3528 = vmatprep.subr.bf16.mxu0 0
        %3529 = vmatpush1.bf16.msra.mxu0 0
        %3530 = vmatprep.subr.bf16.mxu0 0
        %3531 = vmatpush1.bf16.msra.mxu0 0
        %3532 = vmatprep.subr.bf16.mxu0 0
        %3533 = vmatpush1.bf16.msra.mxu0 0
        %3534 = vmatprep.subr.bf16.mxu0 0
        %3535 = vmatpush1.bf16.msra.mxu0 0
        %3536 = vmatprep.subr.bf16.mxu0 0
        %3537 = vmatpush1.bf16.msra.mxu0 0
        %3538 = vmatprep.mubr.bf16.mxu0 0
        %3539 = vmatmul.mubr.bf16.gmra.mrb[0].mxu0 %v807
        %v3540 = vpop.f32.mrb[0].mxu0
        %v3541 = vadd.f32 %v3500, %v3540
        %v3542 = vpop.f32.mrb[0].mxu0
        %v3543 = vadd.f32 %v3502, %v3542
        %v3544 = vpop.f32.mrb[0].mxu0
        %v3545 = vpop.f32.mrb[0].mxu0
        %3546 = vdwg.mxu0
        %3547 = vmatprep.subr.bf16.mxu0 %v2166
        %3548 = vmatpush1.bf16.msra.mxu0 %v2165
        %3549 = vmatprep.subr.bf16.mxu0 %v2174
        %3550 = vmatpush1.bf16.msra.mxu0 %v2173
        %3551 = vmatprep.subr.bf16.mxu0 %v2182
        %3552 = vmatpush1.bf16.msra.mxu0 %v2181
        %3553 = vmatprep.subr.bf16.mxu0 %v2190
        %3554 = vmatpush1.bf16.msra.mxu0 %v2189
        %3555 = vmatprep.subr.bf16.mxu0 %v2198
        %3556 = vmatpush1.bf16.msra.mxu0 %v2197
        %3557 = vmatprep.subr.bf16.mxu0 %v2206
        %3558 = vmatpush1.bf16.msra.mxu0 %v2205
        %3559 = vmatprep.subr.bf16.mxu0 %v2214
        %3560 = vmatpush1.bf16.msra.mxu0 %v2213
        %3561 = vmatprep.subr.bf16.mxu0 %v2222
        %3562 = vmatpush1.bf16.msra.mxu0 %v2221
        %3563 = vmatprep.subr.bf16.mxu0 %v2230
        %3564 = vmatpush1.bf16.msra.mxu0 %v2229
        %3565 = vmatprep.subr.bf16.mxu0 %v2238
        %3566 = vmatpush1.bf16.msra.mxu0 %v2237
        %3567 = vmatprep.subr.bf16.mxu0 %v2246
        %3568 = vmatpush1.bf16.msra.mxu0 %v2245
        %3569 = vmatprep.subr.bf16.mxu0 %v2254
        %3570 = vmatpush1.bf16.msra.mxu0 %v2253
        %3571 = vmatprep.subr.bf16.mxu0 %v2262
        %3572 = vmatpush1.bf16.msra.mxu0 %v2261
        %3573 = vmatprep.subr.bf16.mxu0 %v2270
        %3574 = vmatpush1.bf16.msra.mxu0 %v2269
        %3575 = vmatprep.subr.bf16.mxu0 %v2278
        %3576 = vmatpush1.bf16.msra.mxu0 %v2277
        %3577 = vmatprep.subr.bf16.mxu0 %v2286
        %3578 = vmatpush1.bf16.msra.mxu0 %v2285
        %3579 = vmatprep.mubr.bf16.mxu0 %v802
        %3580 = vmatmul.mubr.bf16.gmra.mrb[0].mxu0 %v801
        %v3581 = vpop.f32.mrb[0].mxu0
        %v3582 = vadd.f32 %v777, %v3581
        %v3583 = vpop.f32.mrb[0].mxu0
        %v3584 = vadd.f32 %v781, %v3583
        %v3585 = vpop.f32.mrb[0].mxu0
        %v3586 = vpop.f32.mrb[0].mxu0
        %3587 = vdwg.mxu0
        %3588 = vmatprep.subr.bf16.mxu0 %v2294
        %3589 = vmatpush1.bf16.msra.mxu0 %v2293
        %3590 = vmatprep.subr.bf16.mxu0 %v2302
        %3591 = vmatpush1.bf16.msra.mxu0 %v2301
        %3592 = vmatprep.subr.bf16.mxu0 %v2310
        %3593 = vmatpush1.bf16.msra.mxu0 %v2309
        %3594 = vmatprep.subr.bf16.mxu0 %v2318
        %3595 = vmatpush1.bf16.msra.mxu0 %v2317
        %3596 = vmatprep.subr.bf16.mxu0 %v2326
        %3597 = vmatpush1.bf16.msra.mxu0 %v2325
        %3598 = vmatprep.subr.bf16.mxu0 %v2334
        %3599 = vmatpush1.bf16.msra.mxu0 %v2333
        %3600 = vmatprep.subr.bf16.mxu0 %v2342
        %3601 = vmatpush1.bf16.msra.mxu0 %v2341
        %3602 = vmatprep.subr.bf16.mxu0 %v2350
        %3603 = vmatpush1.bf16.msra.mxu0 %v2349
        %3604 = vmatprep.subr.bf16.mxu0 %v2358
        %3605 = vmatpush1.bf16.msra.mxu0 %v2357
        %3606 = vmatprep.subr.bf16.mxu0 %v2366
        %3607 = vmatpush1.bf16.msra.mxu0 %v2365
        %3608 = vmatprep.subr.bf16.mxu0 %v2374
        %3609 = vmatpush1.bf16.msra.mxu0 %v2373
        %3610 = vmatprep.subr.bf16.mxu0 %v2382
        %3611 = vmatpush1.bf16.msra.mxu0 %v2381
        %3612 = vmatprep.subr.bf16.mxu0 %v2390
        %3613 = vmatpush1.bf16.msra.mxu0 %v2389
        %3614 = vmatprep.subr.bf16.mxu0 %v2398
        %3615 = vmatpush1.bf16.msra.mxu0 %v2397
        %3616 = vmatprep.subr.bf16.mxu0 %v2406
        %3617 = vmatpush1.bf16.msra.mxu0 %v2405
        %3618 = vmatprep.subr.bf16.mxu0 %v2414
        %3619 = vmatpush1.bf16.msra.mxu0 %v2413
        %3620 = vmatprep.mubr.bf16.mxu0 %v804
        %3621 = vmatmul.mubr.bf16.gmra.mrb[0].mxu0 %v803
        %v3622 = vpop.f32.mrb[0].mxu0
        %v3623 = vadd.f32 %v3582, %v3622
        %v3624 = vpop.f32.mrb[0].mxu0
        %v3625 = vadd.f32 %v3584, %v3624
        %v3626 = vpop.f32.mrb[0].mxu0
        %v3627 = vpop.f32.mrb[0].mxu0
        %3628 = vdwg.mxu0
        %3629 = vmatprep.subr.bf16.mxu0 %v2422
        %3630 = vmatpush1.bf16.msra.mxu0 %v2421
        %3631 = vmatprep.subr.bf16.mxu0 %v2430
        %3632 = vmatpush1.bf16.msra.mxu0 %v2429
        %3633 = vmatprep.subr.bf16.mxu0 %v2438
        %3634 = vmatpush1.bf16.msra.mxu0 %v2437
        %3635 = vmatprep.subr.bf16.mxu0 %v2446
        %3636 = vmatpush1.bf16.msra.mxu0 %v2445
        %3637 = vmatprep.subr.bf16.mxu0 %v2454
        %3638 = vmatpush1.bf16.msra.mxu0 %v2453
        %3639 = vmatprep.subr.bf16.mxu0 %v2462
        %3640 = vmatpush1.bf16.msra.mxu0 %v2461
        %3641 = vmatprep.subr.bf16.mxu0 %v2470
        %3642 = vmatpush1.bf16.msra.mxu0 %v2469
        %3643 = vmatprep.subr.bf16.mxu0 %v2478
        %3644 = vmatpush1.bf16.msra.mxu0 %v2477
        %3645 = vmatprep.subr.bf16.mxu0 %v2486
        %3646 = vmatpush1.bf16.msra.mxu0 %v2485
        %3647 = vmatprep.subr.bf16.mxu0 %v2494
        %3648 = vmatpush1.bf16.msra.mxu0 %v2493
        %3649 = vmatprep.subr.bf16.mxu0 %v2502
        %3650 = vmatpush1.bf16.msra.mxu0 %v2501
        %3651 = vmatprep.subr.bf16.mxu0 %v2510
        %3652 = vmatpush1.bf16.msra.mxu0 %v2509
        %3653 = vmatprep.subr.bf16.mxu0 %v2518
        %3654 = vmatpush1.bf16.msra.mxu0 %v2517
        %3655 = vmatprep.subr.bf16.mxu0 %v2526
        %3656 = vmatpush1.bf16.msra.mxu0 %v2525
        %3657 = vmatprep.subr.bf16.mxu0 %v2534
        %3658 = vmatpush1.bf16.msra.mxu0 %v2533
        %3659 = vmatprep.subr.bf16.mxu0 %v2542
        %3660 = vmatpush1.bf16.msra.mxu0 %v2541
        %3661 = vmatprep.mubr.bf16.mxu0 %v806
        %3662 = vmatmul.mubr.bf16.gmra.mrb[0].mxu0 %v805
        %v3663 = vpop.f32.mrb[0].mxu0
        %v3664 = vadd.f32 %v3623, %v3663
        %v3665 = vpop.f32.mrb[0].mxu0
        %v3666 = vadd.f32 %v3625, %v3665
        %v3667 = vpop.f32.mrb[0].mxu0
        %v3668 = vpop.f32.mrb[0].mxu0
        %3669 = vdwg.mxu0
        %3670 = vmatprep.subr.bf16.mxu0 %v2550
        %3671 = vmatpush1.bf16.msra.mxu0 %v2549
        %3672 = vmatprep.subr.bf16.mxu0 %v2558
        %3673 = vmatpush1.bf16.msra.mxu0 %v2557
        %3674 = vmatprep.subr.bf16.mxu0 %v2566
        %3675 = vmatpush1.bf16.msra.mxu0 %v2565
        %3676 = vmatprep.subr.bf16.mxu0 %v2574
        %3677 = vmatpush1.bf16.msra.mxu0 %v2573
        %3678 = vmatprep.subr.bf16.mxu0 %v2582
        %3679 = vmatpush1.bf16.msra.mxu0 %v2581
        %3680 = vmatprep.subr.bf16.mxu0 %v2590
        %3681 = vmatpush1.bf16.msra.mxu0 %v2589
        %3682 = vmatprep.subr.bf16.mxu0 %v2598
        %3683 = vmatpush1.bf16.msra.mxu0 %v2597
        %3684 = vmatprep.subr.bf16.mxu0 %v2606
        %3685 = vmatpush1.bf16.msra.mxu0 %v2605
        %3686 = vmatprep.subr.bf16.mxu0 0
        %3687 = vmatpush1.bf16.msra.mxu0 0
        %3688 = vmatprep.subr.bf16.mxu0 0
        %3689 = vmatpush1.bf16.msra.mxu0 0
        %3690 = vmatprep.subr.bf16.mxu0 0
        %3691 = vmatpush1.bf16.msra.mxu0 0
        %3692 = vmatprep.subr.bf16.mxu0 0
        %3693 = vmatpush1.bf16.msra.mxu0 0
        %3694 = vmatprep.subr.bf16.mxu0 0
        %3695 = vmatpush1.bf16.msra.mxu0 0
        %3696 = vmatprep.subr.bf16.mxu0 0
        %3697 = vmatpush1.bf16.msra.mxu0 0
        %3698 = vmatprep.subr.bf16.mxu0 0
        %3699 = vmatpush1.bf16.msra.mxu0 0
        %3700 = vmatprep.subr.bf16.mxu0 0
        %3701 = vmatpush1.bf16.msra.mxu0 0
        %3702 = vmatprep.mubr.bf16.mxu0 0
        %3703 = vmatmul.mubr.bf16.gmra.mrb[0].mxu0 %v807
        %v3704 = vpop.f32.mrb[0].mxu0
        %v3705 = vadd.f32 %v3664, %v3704
        %v3706 = vpop.f32.mrb[0].mxu0
        %v3707 = vadd.f32 %v3666, %v3706
        %v3708 = vpop.f32.mrb[0].mxu0
        %v3709 = vpop.f32.mrb[0].mxu0
        %3710 = vdwg.mxu0
        %v3711 = vmax.f32 %v3213, 0.0
        %v3712 = vmax.f32 %v3215, 0.0
        %v3713 = vmax.f32 %v3377, 0.0
        %v3714 = vmax.f32 %v3379, 0.0
        %v3715 = vmax.f32 %v3541, 0.0
        %v3716 = vmax.f32 %v3543, 0.0
        %v3717 = vmax.f32 %v3705, 0.0
        %v3718 = vmax.f32 %v3707, 0.0
        %v3719 = vpack.c.bf16 %v3711, %v3711
        %v3720 = vpack.c.bf16 %v3712, %v3712
        %v3721 = vpack.c.bf16 %v3713, %v3713
        %v3722 = vpack.c.bf16 %v3714, %v3714
        %v3723 = vpack.c.bf16 %v3715, %v3715
        %v3724 = vpack.c.bf16 %v3716, %v3716
        %v3725 = vpack.c.bf16 %v3717, %v3717
        %v3726 = vpack.c.bf16 %v3718, %v3718
        %v3727 = vld [vmem:[#allocation8] sm:$0xf]
        %v3728 = vld [vmem:[#allocation8 + $0x4] sm:$0xf]
        %v3729 = vld [vmem:[#allocation8 + $0x8] sm:$0xf]
        %v3730 = vld [vmem:[#allocation8 + $0xc] sm:$0xf]
        %v3731 = vld [vmem:[#allocation8 + $0x10] sm:$0xf]
        %v3732 = vld [vmem:[#allocation8 + $0x14] sm:$0xf]
        %v3733 = vld [vmem:[#allocation8 + $0x18] sm:$0xf]
        %v3734 = vld [vmem:[#allocation8 + $0x1c] sm:$0xf]
        %v3735 = vld [vmem:[#allocation8 + $0x20] sm:$0xf]
        %v3736 = vld [vmem:[#allocation8 + $0x24] sm:$0xf]
        %v3737 = vld [vmem:[#allocation8 + $0x28] sm:$0xf]
        %v3738 = vld [vmem:[#allocation8 + $0x2c] sm:$0xf]
        %v3739 = vld [vmem:[#allocation8 + $0x30] sm:$0xf]
        %v3740 = vld [vmem:[#allocation8 + $0x34] sm:$0xf]
        %v3741 = vld [vmem:[#allocation8 + $0x38] sm:$0xf]
        %v3742 = vld [vmem:[#allocation8 + $0x3c] sm:$0xf]
        %v3743 = vld [vmem:[#allocation8 + $0x40] sm:$0xf]
        %v3744 = vld [vmem:[#allocation8 + $0x44] sm:$0xf]
        %v3745 = vld [vmem:[#allocation8 + $0x48] sm:$0xf]
        %v3746 = vld [vmem:[#allocation8 + $0x4c] sm:$0xf]
        %v3747 = vld [vmem:[#allocation8 + $0x50] sm:$0xf]
        %v3748 = vld [vmem:[#allocation8 + $0x54] sm:$0xf]
        %v3749 = vld [vmem:[#allocation8 + $0x58] sm:$0xf]
        %v3750 = vld [vmem:[#allocation8 + $0x5c] sm:$0xf]
        %v3751 = vld [vmem:[#allocation8 + $0x60] sm:$0xf]
        %v3752 = vld [vmem:[#allocation8 + $0x64] sm:$0xf]
        %v3753 = vld [vmem:[#allocation8 + $0x68] sm:$0xf]
        %v3754 = vld [vmem:[#allocation8 + $0x6c] sm:$0xf]
        %v3755 = vld [vmem:[#allocation8 + $0x70] sm:$0xf]
        %v3756 = vld [vmem:[#allocation8 + $0x74] sm:$0xf]
        %v3757 = vld [vmem:[#allocation8 + $0x78] sm:$0xf]
        %v3758 = vld [vmem:[#allocation8 + $0x7c] sm:$0xf]
        %v3759 = vld [vmem:[#allocation8 + $0x80] sm:$0xf]
        %v3760 = vld [vmem:[#allocation8 + $0x84] sm:$0xf]
        %v3761 = vld [vmem:[#allocation8 + $0x88] sm:$0xf]
        %v3762 = vld [vmem:[#allocation8 + $0x8c] sm:$0xf]
        %v3763 = vld [vmem:[#allocation8 + $0x90] sm:$0xf]
        %v3764 = vld [vmem:[#allocation8 + $0x94] sm:$0xf]
        %v3765 = vld [vmem:[#allocation8 + $0x98] sm:$0xf]
        %v3766 = vld [vmem:[#allocation8 + $0x9c] sm:$0xf]
        %v3767 = vld [vmem:[#allocation8 + $0xa0] sm:$0xf]
        %v3768 = vld [vmem:[#allocation8 + $0xa4] sm:$0xf]
        %v3769 = vld [vmem:[#allocation8 + $0xa8] sm:$0xf]
        %v3770 = vld [vmem:[#allocation8 + $0xac] sm:$0xf]
        %v3771 = vld [vmem:[#allocation8 + $0xb0] sm:$0xf]
        %v3772 = vld [vmem:[#allocation8 + $0xb4] sm:$0xf]
        %v3773 = vld [vmem:[#allocation8 + $0xb8] sm:$0xf]
        %v3774 = vld [vmem:[#allocation8 + $0xbc] sm:$0xf]
        %v3775 = vld [vmem:[#allocation8 + $0xc0] sm:$0xf]
        %v3776 = vld [vmem:[#allocation8 + $0xc4] sm:$0xf]
        %v3777 = vld [vmem:[#allocation8 + $0xc8] sm:$0xf]
        %v3778 = vld [vmem:[#allocation8 + $0xcc] sm:$0xf]
        %v3779 = vld [vmem:[#allocation8 + $0xd0] sm:$0xf]
        %v3780 = vld [vmem:[#allocation8 + $0xd4] sm:$0xf]
        %v3781 = vld [vmem:[#allocation8 + $0xd8] sm:$0xf]
        %v3782 = vld [vmem:[#allocation8 + $0xdc] sm:$0xf]
        %v3783 = vld [vmem:[#allocation8 + $0xe0] sm:$0xf]
        %v3784 = vld [vmem:[#allocation8 + $0xe4] sm:$0xf]
        %v3785 = vld [vmem:[#allocation8 + $0xe8] sm:$0xf]
        %v3786 = vld [vmem:[#allocation8 + $0xec] sm:$0xf]
        %v3787 = vld [vmem:[#allocation8 + $0xf0] sm:$0xf]
        %v3788 = vld [vmem:[#allocation8 + $0xf4] sm:$0xf]
        %v3789 = vld [vmem:[#allocation8 + $0xf8] sm:$0xf]
        %v3790 = vld [vmem:[#allocation8 + $0xfc] sm:$0xf]
        %v3791 = vld [vmem:[#allocation8 + $0x100] sm:$0xf]
        %v3792 = vld [vmem:[#allocation8 + $0x104] sm:$0xf]
        %v3793 = vld [vmem:[#allocation8 + $0x108] sm:$0xf]
        %v3794 = vld [vmem:[#allocation8 + $0x10c] sm:$0xf]
        %v3795 = vld [vmem:[#allocation8 + $0x110] sm:$0xf]
        %v3796 = vld [vmem:[#allocation8 + $0x114] sm:$0xf]
        %v3797 = vld [vmem:[#allocation8 + $0x118] sm:$0xf]
        %v3798 = vld [vmem:[#allocation8 + $0x11c] sm:$0xf]
        %v3799 = vld [vmem:[#allocation8 + $0x120] sm:$0xf]
        %v3800 = vld [vmem:[#allocation8 + $0x124] sm:$0xf]
        %v3801 = vld [vmem:[#allocation8 + $0x128] sm:$0xf]
        %v3802 = vld [vmem:[#allocation8 + $0x12c] sm:$0xf]
        %v3803 = vld [vmem:[#allocation8 + $0x130] sm:$0xf]
        %v3804 = vld [vmem:[#allocation8 + $0x134] sm:$0xf]
        %v3805 = vld [vmem:[#allocation8 + $0x138] sm:$0xf]
        %v3806 = vld [vmem:[#allocation8 + $0x13c] sm:$0xf]
        %v3807 = vld [vmem:[#allocation8 + $0x140] sm:$0xf]
        %v3808 = vld [vmem:[#allocation8 + $0x144] sm:$0xf]
        %v3809 = vld [vmem:[#allocation8 + $0x148] sm:$0xf]
        %v3810 = vld [vmem:[#allocation8 + $0x14c] sm:$0xf]
        %v3811 = vld [vmem:[#allocation8 + $0x150] sm:$0xf]
        %v3812 = vld [vmem:[#allocation8 + $0x154] sm:$0xf]
        %v3813 = vld [vmem:[#allocation8 + $0x158] sm:$0xf]
        %v3814 = vld [vmem:[#allocation8 + $0x15c] sm:$0xf]
        %v3815 = vld [vmem:[#allocation8 + $0x160] sm:$0xf]
        %v3816 = vld [vmem:[#allocation8 + $0x164] sm:$0xf]
        %v3817 = vld [vmem:[#allocation8 + $0x168] sm:$0xf]
        %v3818 = vld [vmem:[#allocation8 + $0x16c] sm:$0xf]
        %v3819 = vld [vmem:[#allocation8 + $0x170] sm:$0xf]
        %v3820 = vld [vmem:[#allocation8 + $0x174] sm:$0xf]
        %v3821 = vld [vmem:[#allocation8 + $0x178] sm:$0xf]
        %v3822 = vld [vmem:[#allocation8 + $0x17c] sm:$0xf]
        %v3823 = vld [vmem:[#allocation8 + $0x180] sm:$0xf]
        %v3824 = vld [vmem:[#allocation8 + $0x184] sm:$0xf]
        %v3825 = vld [vmem:[#allocation8 + $0x188] sm:$0xf]
        %v3826 = vld [vmem:[#allocation8 + $0x18c] sm:$0xf]
        %v3827 = vld [vmem:[#allocation8 + $0x190] sm:$0xf]
        %v3828 = vld [vmem:[#allocation8 + $0x194] sm:$0xf]
        %v3829 = vld [vmem:[#allocation8 + $0x198] sm:$0xf]
        %v3830 = vld [vmem:[#allocation8 + $0x19c] sm:$0xf]
        %v3831 = vld [vmem:[#allocation8 + $0x1a0] sm:$0xf]
        %v3832 = vld [vmem:[#allocation8 + $0x1a4] sm:$0xf]
        %v3833 = vld [vmem:[#allocation8 + $0x1a8] sm:$0xf]
        %v3834 = vld [vmem:[#allocation8 + $0x1ac] sm:$0xf]
        %v3835 = vld [vmem:[#allocation8 + $0x1b0] sm:$0xf]
        %v3836 = vld [vmem:[#allocation8 + $0x1b4] sm:$0xf]
        %v3837 = vld [vmem:[#allocation8 + $0x1b8] sm:$0xf]
        %v3838 = vld [vmem:[#allocation8 + $0x1bc] sm:$0xf]
        %v3839 = vld [vmem:[#allocation8 + $0x1c0] sm:$0xf]
        %v3840 = vld [vmem:[#allocation8 + $0x1c4] sm:$0xf]
        %v3841 = vld [vmem:[#allocation8 + $0x1c8] sm:$0xf]
        %v3842 = vld [vmem:[#allocation8 + $0x1cc] sm:$0xf]
        %v3843 = vld [vmem:[#allocation8 + $0x1d0] sm:$0xf]
        %v3844 = vld [vmem:[#allocation8 + $0x1d4] sm:$0xf]
        %v3845 = vld [vmem:[#allocation8 + $0x1d8] sm:$0xf]
        %v3846 = vld [vmem:[#allocation8 + $0x1dc] sm:$0xf]
        %v3847 = vld [vmem:[#allocation8 + $0x1e0] sm:$0xf]
        %v3848 = vld [vmem:[#allocation8 + $0x1e4] sm:$0xf]
        %v3849 = vld [vmem:[#allocation8 + $0x1e8] sm:$0xf]
        %v3850 = vld [vmem:[#allocation8 + $0x1ec] sm:$0xf]
        %v3851 = vld [vmem:[#allocation8 + $0x1f0] sm:$0xf]
        %v3852 = vld [vmem:[#allocation8 + $0x1f4] sm:$0xf]
        %v3853 = vld [vmem:[#allocation8 + $0x1f8] sm:$0xf]
        %v3854 = vld [vmem:[#allocation8 + $0x1fc] sm:$0xf]
        %v3855 = vld [vmem:[#allocation10] sm:$0x1]
        %v3857 = vlaneseq
        %v3858 = vshrl.u32 %v3857, 7
        %v3859 = vsub.s32 0, %v3858
        %v3860 = vrot.slane %v3855, %v3859
        %v3990 = vunpack.c.l.b16 %v3727
        %v3991 = vunpack.c.l.b16 %v3728
        %v3992 = vunpack.c.l.b16 %v3729
        %v3993 = vunpack.c.l.b16 %v3730
        %v3994 = vunpack.c.l.b16 %v3731
        %v3995 = vunpack.c.l.b16 %v3732
        %v3996 = vunpack.c.l.b16 %v3733
        %v3997 = vunpack.c.l.b16 %v3734
        %v3998 = vunpack.c.l.b16 %v3735
        %v3999 = vunpack.c.l.b16 %v3736
        %v4000 = vunpack.c.l.b16 %v3737
        %v4001 = vunpack.c.l.b16 %v3738
        %v4002 = vunpack.c.l.b16 %v3739
        %v4003 = vunpack.c.l.b16 %v3740
        %v4004 = vunpack.c.l.b16 %v3741
        %v4005 = vunpack.c.l.b16 %v3742
        %v4006 = vunpack.c.l.b16 %v3743
        %v4007 = vunpack.c.l.b16 %v3744
        %v4008 = vunpack.c.l.b16 %v3745
        %v4009 = vunpack.c.l.b16 %v3746
        %v4010 = vunpack.c.l.b16 %v3747
        %v4011 = vunpack.c.l.b16 %v3748
        %v4012 = vunpack.c.l.b16 %v3749
        %v4013 = vunpack.c.l.b16 %v3750
        %v4014 = vunpack.c.l.b16 %v3751
        %v4015 = vunpack.c.l.b16 %v3752
        %v4016 = vunpack.c.l.b16 %v3753
        %v4017 = vunpack.c.l.b16 %v3754
        %v4018 = vunpack.c.l.b16 %v3755
        %v4019 = vunpack.c.l.b16 %v3756
        %v4020 = vunpack.c.l.b16 %v3757
        %v4021 = vunpack.c.l.b16 %v3758
        %v4022 = vunpack.c.l.b16 %v3759
        %v4023 = vunpack.c.l.b16 %v3760
        %v4024 = vunpack.c.l.b16 %v3761
        %v4025 = vunpack.c.l.b16 %v3762
        %v4026 = vunpack.c.l.b16 %v3763
        %v4027 = vunpack.c.l.b16 %v3764
        %v4028 = vunpack.c.l.b16 %v3765
        %v4029 = vunpack.c.l.b16 %v3766
        %v4030 = vunpack.c.l.b16 %v3767
        %v4031 = vunpack.c.l.b16 %v3768
        %v4032 = vunpack.c.l.b16 %v3769
        %v4033 = vunpack.c.l.b16 %v3770
        %v4034 = vunpack.c.l.b16 %v3771
        %v4035 = vunpack.c.l.b16 %v3772
        %v4036 = vunpack.c.l.b16 %v3773
        %v4037 = vunpack.c.l.b16 %v3774
        %v4038 = vunpack.c.l.b16 %v3775
        %v4039 = vunpack.c.l.b16 %v3776
        %v4040 = vunpack.c.l.b16 %v3777
        %v4041 = vunpack.c.l.b16 %v3778
        %v4042 = vunpack.c.l.b16 %v3779
        %v4043 = vunpack.c.l.b16 %v3780
        %v4044 = vunpack.c.l.b16 %v3781
        %v4045 = vunpack.c.l.b16 %v3782
        %v4046 = vunpack.c.l.b16 %v3783
        %v4047 = vunpack.c.l.b16 %v3784
        %v4048 = vunpack.c.l.b16 %v3785
        %v4049 = vunpack.c.l.b16 %v3786
        %v4050 = vunpack.c.l.b16 %v3787
        %v4051 = vunpack.c.l.b16 %v3788
        %v4052 = vunpack.c.l.b16 %v3789
        %v4053 = vunpack.c.l.b16 %v3790
        %v4054 = vunpack.c.l.b16 %v3791
        %v4055 = vunpack.c.l.b16 %v3792
        %v4056 = vunpack.c.l.b16 %v3793
        %v4057 = vunpack.c.l.b16 %v3794
        %v4058 = vunpack.c.l.b16 %v3795
        %v4059 = vunpack.c.l.b16 %v3796
        %v4060 = vunpack.c.l.b16 %v3797
        %v4061 = vunpack.c.l.b16 %v3798
        %v4062 = vunpack.c.l.b16 %v3799
        %v4063 = vunpack.c.l.b16 %v3800
        %v4064 = vunpack.c.l.b16 %v3801
        %v4065 = vunpack.c.l.b16 %v3802
        %v4066 = vunpack.c.l.b16 %v3803
        %v4067 = vunpack.c.l.b16 %v3804
        %v4068 = vunpack.c.l.b16 %v3805
        %v4069 = vunpack.c.l.b16 %v3806
        %v4070 = vunpack.c.l.b16 %v3807
        %v4071 = vunpack.c.l.b16 %v3808
        %v4072 = vunpack.c.l.b16 %v3809
        %v4073 = vunpack.c.l.b16 %v3810
        %v4074 = vunpack.c.l.b16 %v3811
        %v4075 = vunpack.c.l.b16 %v3812
        %v4076 = vunpack.c.l.b16 %v3813
        %v4077 = vunpack.c.l.b16 %v3814
        %v4078 = vunpack.c.l.b16 %v3815
        %v4079 = vunpack.c.l.b16 %v3816
        %v4080 = vunpack.c.l.b16 %v3817
        %v4081 = vunpack.c.l.b16 %v3818
        %v4082 = vunpack.c.l.b16 %v3819
        %v4083 = vunpack.c.l.b16 %v3820
        %v4084 = vunpack.c.l.b16 %v3821
        %v4085 = vunpack.c.l.b16 %v3822
        %v4086 = vunpack.c.l.b16 %v3823
        %v4087 = vunpack.c.l.b16 %v3824
        %v4088 = vunpack.c.l.b16 %v3825
        %v4089 = vunpack.c.l.b16 %v3826
        %v4090 = vunpack.c.l.b16 %v3827
        %v4091 = vunpack.c.l.b16 %v3828
        %v4092 = vunpack.c.l.b16 %v3829
        %v4093 = vunpack.c.l.b16 %v3830
        %v4094 = vunpack.c.l.b16 %v3831
        %v4095 = vunpack.c.l.b16 %v3832
        %v4096 = vunpack.c.l.b16 %v3833
        %v4097 = vunpack.c.l.b16 %v3834
        %v4098 = vunpack.c.l.b16 %v3835
        %v4099 = vunpack.c.l.b16 %v3836
        %v4100 = vunpack.c.l.b16 %v3837
        %v4101 = vunpack.c.l.b16 %v3838
        %v4102 = vunpack.c.l.b16 %v3839
        %v4103 = vunpack.c.l.b16 %v3840
        %v4104 = vunpack.c.l.b16 %v3841
        %v4105 = vunpack.c.l.b16 %v3842
        %v4106 = vunpack.c.l.b16 %v3843
        %v4107 = vunpack.c.l.b16 %v3844
        %v4108 = vunpack.c.l.b16 %v3845
        %v4109 = vunpack.c.l.b16 %v3846
        %v4110 = vunpack.c.l.b16 %v3847
        %v4111 = vunpack.c.l.b16 %v3848
        %v4112 = vunpack.c.l.b16 %v3849
        %v4113 = vunpack.c.l.b16 %v3850
        %v4114 = vunpack.c.l.b16 %v3851
        %v4115 = vunpack.c.l.b16 %v3852
        %v4116 = vunpack.c.l.b16 %v3853
        %v4117 = vunpack.c.l.b16 %v3854
        %v4118 = vpack.c.b16 %v3991, %v3990
        %v4119 = vpack.c.b16 %v3993, %v3992
        %v4120 = vpack.c.b16 %v3995, %v3994
        %v4121 = vpack.c.b16 %v3997, %v3996
        %v4122 = vpack.c.b16 %v3999, %v3998
        %v4123 = vpack.c.b16 %v4001, %v4000
        %v4124 = vpack.c.b16 %v4003, %v4002
        %v4125 = vpack.c.b16 %v4005, %v4004
        %v4126 = vpack.c.b16 %v4007, %v4006
        %v4127 = vpack.c.b16 %v4009, %v4008
        %v4128 = vpack.c.b16 %v4011, %v4010
        %v4129 = vpack.c.b16 %v4013, %v4012
        %v4130 = vpack.c.b16 %v4015, %v4014
        %v4131 = vpack.c.b16 %v4017, %v4016
        %v4132 = vpack.c.b16 %v4019, %v4018
        %v4133 = vpack.c.b16 %v4021, %v4020
        %v4134 = vpack.c.b16 %v4023, %v4022
        %v4135 = vpack.c.b16 %v4025, %v4024
        %v4136 = vpack.c.b16 %v4027, %v4026
        %v4137 = vpack.c.b16 %v4029, %v4028
        %v4138 = vpack.c.b16 %v4031, %v4030
        %v4139 = vpack.c.b16 %v4033, %v4032
        %v4140 = vpack.c.b16 %v4035, %v4034
        %v4141 = vpack.c.b16 %v4037, %v4036
        %v4142 = vpack.c.b16 %v4039, %v4038
        %v4143 = vpack.c.b16 %v4041, %v4040
        %v4144 = vpack.c.b16 %v4043, %v4042
        %v4145 = vpack.c.b16 %v4045, %v4044
        %v4146 = vpack.c.b16 %v4047, %v4046
        %v4147 = vpack.c.b16 %v4049, %v4048
        %v4148 = vpack.c.b16 %v4051, %v4050
        %v4149 = vpack.c.b16 %v4053, %v4052
        %v4150 = vpack.c.b16 %v4055, %v4054
        %v4151 = vpack.c.b16 %v4057, %v4056
        %v4152 = vpack.c.b16 %v4059, %v4058
        %v4153 = vpack.c.b16 %v4061, %v4060
        %v4154 = vpack.c.b16 %v4063, %v4062
        %v4155 = vpack.c.b16 %v4065, %v4064
        %v4156 = vpack.c.b16 %v4067, %v4066
        %v4157 = vpack.c.b16 %v4069, %v4068
        %v4158 = vpack.c.b16 %v4071, %v4070
        %v4159 = vpack.c.b16 %v4073, %v4072
        %v4160 = vpack.c.b16 %v4075, %v4074
        %v4161 = vpack.c.b16 %v4077, %v4076
        %v4162 = vpack.c.b16 %v4079, %v4078
        %v4163 = vpack.c.b16 %v4081, %v4080
        %v4164 = vpack.c.b16 %v4083, %v4082
        %v4165 = vpack.c.b16 %v4085, %v4084
        %v4166 = vpack.c.b16 %v4087, %v4086
        %v4167 = vpack.c.b16 %v4089, %v4088
        %v4168 = vpack.c.b16 %v4091, %v4090
        %v4169 = vpack.c.b16 %v4093, %v4092
        %v4170 = vpack.c.b16 %v4095, %v4094
        %v4171 = vpack.c.b16 %v4097, %v4096
        %v4172 = vpack.c.b16 %v4099, %v4098
        %v4173 = vpack.c.b16 %v4101, %v4100
        %v4174 = vpack.c.b16 %v4103, %v4102
        %v4175 = vpack.c.b16 %v4105, %v4104
        %v4176 = vpack.c.b16 %v4107, %v4106
        %v4177 = vpack.c.b16 %v4109, %v4108
        %v4178 = vpack.c.b16 %v4111, %v4110
        %v4179 = vpack.c.b16 %v4113, %v4112
        %v4180 = vpack.c.b16 %v4115, %v4114
        %v4181 = vpack.c.b16 %v4117, %v4116
        %4246 = vmatprep.subr.bf16.mxu0 0
        %4247 = vmatpush1.bf16.msra.mxu0 %v4118
        %4248 = vmatprep.subr.bf16.mxu0 0
        %4249 = vmatpush1.bf16.msra.mxu0 %v4119
        %4250 = vmatprep.subr.bf16.mxu0 0
        %4251 = vmatpush1.bf16.msra.mxu0 %v4120
        %4252 = vmatprep.subr.bf16.mxu0 0
        %4253 = vmatpush1.bf16.msra.mxu0 %v4121
        %4254 = vmatprep.subr.bf16.mxu0 0
        %4255 = vmatpush1.bf16.msra.mxu0 %v4122
        %4256 = vmatprep.subr.bf16.mxu0 0
        %4257 = vmatpush1.bf16.msra.mxu0 %v4123
        %4258 = vmatprep.subr.bf16.mxu0 0
        %4259 = vmatpush1.bf16.msra.mxu0 %v4124
        %4260 = vmatprep.subr.bf16.mxu0 0
        %4261 = vmatpush1.bf16.msra.mxu0 %v4125
        %4262 = vmatprep.subr.bf16.mxu0 0
        %4263 = vmatpush1.bf16.msra.mxu0 %v4126
        %4264 = vmatprep.subr.bf16.mxu0 0
        %4265 = vmatpush1.bf16.msra.mxu0 %v4127
        %4266 = vmatprep.subr.bf16.mxu0 0
        %4267 = vmatpush1.bf16.msra.mxu0 %v4128
        %4268 = vmatprep.subr.bf16.mxu0 0
        %4269 = vmatpush1.bf16.msra.mxu0 %v4129
        %4270 = vmatprep.subr.bf16.mxu0 0
        %4271 = vmatpush1.bf16.msra.mxu0 %v4130
        %4272 = vmatprep.subr.bf16.mxu0 0
        %4273 = vmatpush1.bf16.msra.mxu0 %v4131
        %4274 = vmatprep.subr.bf16.mxu0 0
        %4275 = vmatpush1.bf16.msra.mxu0 %v4132
        %4276 = vmatprep.subr.bf16.mxu0 0
        %4277 = vmatpush1.bf16.msra.mxu0 %v4133
        %4278 = vmatprep.mubr.bf16.mxu0 %v3720
        %4279 = vmatmul.mubr.bf16.gmra.mrb[0].mxu0 %v3719
        %v4280 = vpop.f32.mrb[0].mxu0
        %v4281 = vadd.f32 %v3860, %v4280
        %v4282 = vpop.f32.mrb[0].mxu0
        %v4283 = vpop.f32.mrb[0].mxu0
        %v4284 = vpop.f32.mrb[0].mxu0
        %4285 = vdwg.mxu0
        %4286 = vmatprep.subr.bf16.mxu0 0
        %4287 = vmatpush1.bf16.msra.mxu0 %v4134
        %4288 = vmatprep.subr.bf16.mxu0 0
        %4289 = vmatpush1.bf16.msra.mxu0 %v4135
        %4290 = vmatprep.subr.bf16.mxu0 0
        %4291 = vmatpush1.bf16.msra.mxu0 %v4136
        %4292 = vmatprep.subr.bf16.mxu0 0
        %4293 = vmatpush1.bf16.msra.mxu0 %v4137
        %4294 = vmatprep.subr.bf16.mxu0 0
        %4295 = vmatpush1.bf16.msra.mxu0 %v4138
        %4296 = vmatprep.subr.bf16.mxu0 0
        %4297 = vmatpush1.bf16.msra.mxu0 %v4139
        %4298 = vmatprep.subr.bf16.mxu0 0
        %4299 = vmatpush1.bf16.msra.mxu0 %v4140
        %4300 = vmatprep.subr.bf16.mxu0 0
        %4301 = vmatpush1.bf16.msra.mxu0 %v4141
        %4302 = vmatprep.subr.bf16.mxu0 0
        %4303 = vmatpush1.bf16.msra.mxu0 %v4142
        %4304 = vmatprep.subr.bf16.mxu0 0
        %4305 = vmatpush1.bf16.msra.mxu0 %v4143
        %4306 = vmatprep.subr.bf16.mxu0 0
        %4307 = vmatpush1.bf16.msra.mxu0 %v4144
        %4308 = vmatprep.subr.bf16.mxu0 0
        %4309 = vmatpush1.bf16.msra.mxu0 %v4145
        %4310 = vmatprep.subr.bf16.mxu0 0
        %4311 = vmatpush1.bf16.msra.mxu0 %v4146
        %4312 = vmatprep.subr.bf16.mxu0 0
        %4313 = vmatpush1.bf16.msra.mxu0 %v4147
        %4314 = vmatprep.subr.bf16.mxu0 0
        %4315 = vmatpush1.bf16.msra.mxu0 %v4148
        %4316 = vmatprep.subr.bf16.mxu0 0
        %4317 = vmatpush1.bf16.msra.mxu0 %v4149
        %4318 = vmatprep.mubr.bf16.mxu0 %v3722
        %4319 = vmatmul.mubr.bf16.gmra.mrb[0].mxu0 %v3721
        %v4320 = vpop.f32.mrb[0].mxu0
        %v4321 = vadd.f32 %v4281, %v4320
        %v4322 = vpop.f32.mrb[0].mxu0
        %v4323 = vpop.f32.mrb[0].mxu0
        %v4324 = vpop.f32.mrb[0].mxu0
        %4325 = vdwg.mxu0
        %4326 = vmatprep.subr.bf16.mxu0 0
        %4327 = vmatpush1.bf16.msra.mxu0 %v4150
        %4328 = vmatprep.subr.bf16.mxu0 0
        %4329 = vmatpush1.bf16.msra.mxu0 %v4151
        %4330 = vmatprep.subr.bf16.mxu0 0
        %4331 = vmatpush1.bf16.msra.mxu0 %v4152
        %4332 = vmatprep.subr.bf16.mxu0 0
        %4333 = vmatpush1.bf16.msra.mxu0 %v4153
        %4334 = vmatprep.subr.bf16.mxu0 0
        %4335 = vmatpush1.bf16.msra.mxu0 %v4154
        %4336 = vmatprep.subr.bf16.mxu0 0
        %4337 = vmatpush1.bf16.msra.mxu0 %v4155
        %4338 = vmatprep.subr.bf16.mxu0 0
        %4339 = vmatpush1.bf16.msra.mxu0 %v4156
        %4340 = vmatprep.subr.bf16.mxu0 0
        %4341 = vmatpush1.bf16.msra.mxu0 %v4157
        %4342 = vmatprep.subr.bf16.mxu0 0
        %4343 = vmatpush1.bf16.msra.mxu0 %v4158
        %4344 = vmatprep.subr.bf16.mxu0 0
        %4345 = vmatpush1.bf16.msra.mxu0 %v4159
        %4346 = vmatprep.subr.bf16.mxu0 0
        %4347 = vmatpush1.bf16.msra.mxu0 %v4160
        %4348 = vmatprep.subr.bf16.mxu0 0
        %4349 = vmatpush1.bf16.msra.mxu0 %v4161
        %4350 = vmatprep.subr.bf16.mxu0 0
        %4351 = vmatpush1.bf16.msra.mxu0 %v4162
        %4352 = vmatprep.subr.bf16.mxu0 0
        %4353 = vmatpush1.bf16.msra.mxu0 %v4163
        %4354 = vmatprep.subr.bf16.mxu0 0
        %4355 = vmatpush1.bf16.msra.mxu0 %v4164
        %4356 = vmatprep.subr.bf16.mxu0 0
        %4357 = vmatpush1.bf16.msra.mxu0 %v4165
        %4358 = vmatprep.mubr.bf16.mxu0 %v3724
        %4359 = vmatmul.mubr.bf16.gmra.mrb[0].mxu0 %v3723
        %v4360 = vpop.f32.mrb[0].mxu0
        %v4361 = vadd.f32 %v4321, %v4360
        %v4362 = vpop.f32.mrb[0].mxu0
        %v4363 = vpop.f32.mrb[0].mxu0
        %v4364 = vpop.f32.mrb[0].mxu0
        %4365 = vdwg.mxu0
        %4366 = vmatprep.subr.bf16.mxu0 0
        %4367 = vmatpush1.bf16.msra.mxu0 %v4166
        %4368 = vmatprep.subr.bf16.mxu0 0
        %4369 = vmatpush1.bf16.msra.mxu0 %v4167
        %4370 = vmatprep.subr.bf16.mxu0 0
        %4371 = vmatpush1.bf16.msra.mxu0 %v4168
        %4372 = vmatprep.subr.bf16.mxu0 0
        %4373 = vmatpush1.bf16.msra.mxu0 %v4169
        %4374 = vmatprep.subr.bf16.mxu0 0
        %4375 = vmatpush1.bf16.msra.mxu0 %v4170
        %4376 = vmatprep.subr.bf16.mxu0 0
        %4377 = vmatpush1.bf16.msra.mxu0 %v4171
        %4378 = vmatprep.subr.bf16.mxu0 0
        %4379 = vmatpush1.bf16.msra.mxu0 %v4172
        %4380 = vmatprep.subr.bf16.mxu0 0
        %4381 = vmatpush1.bf16.msra.mxu0 %v4173
        %4382 = vmatprep.subr.bf16.mxu0 0
        %4383 = vmatpush1.bf16.msra.mxu0 %v4174
        %4384 = vmatprep.subr.bf16.mxu0 0
        %4385 = vmatpush1.bf16.msra.mxu0 %v4175
        %4386 = vmatprep.subr.bf16.mxu0 0
        %4387 = vmatpush1.bf16.msra.mxu0 %v4176
        %4388 = vmatprep.subr.bf16.mxu0 0
        %4389 = vmatpush1.bf16.msra.mxu0 %v4177
        %4390 = vmatprep.subr.bf16.mxu0 0
        %4391 = vmatpush1.bf16.msra.mxu0 %v4178
        %4392 = vmatprep.subr.bf16.mxu0 0
        %4393 = vmatpush1.bf16.msra.mxu0 %v4179
        %4394 = vmatprep.subr.bf16.mxu0 0
        %4395 = vmatpush1.bf16.msra.mxu0 %v4180
        %4396 = vmatprep.subr.bf16.mxu0 0
        %4397 = vmatpush1.bf16.msra.mxu0 %v4181
        %4398 = vmatprep.mubr.bf16.mxu0 %v3726
        %4399 = vmatmul.mubr.bf16.gmra.mrb[0].mxu0 %v3725
        %v4400 = vpop.f32.mrb[0].mxu0
        %v4401 = vadd.f32 %v4361, %v4400
        %v4402 = vpop.f32.mrb[0].mxu0
        %v4403 = vpop.f32.mrb[0].mxu0
        %v4404 = vpop.f32.mrb[0].mxu0
        %4405 = vdwg.mxu0
        %v4406 = vmax.f32 %v4401, 0.0
        %4407 = vst [vmem:[%s294] sm:$0xff] %v4406
        %s4408 = sand.u32 %s142, 1
        %s4409 = scalar_lea.sflag [#allocation4], %s4408
        %s4410 = sand.u32 %s142, 1
        %s4411 = smul.addr %s4410, 8
        %s4412 = scalar_lea.vmem [#allocation11], %s4411
        // Predicated region
        $region61: #{tpu_custom_call.1} parent=39 // pred_check
          %p4413 = pneg %p152
        $region62: #{tpu_custom_call.1} parent=39 // pred_check_branch
          %4415 = sbr.rel (%p4413) target = $region64
        $region63: #{tpu_custom_call.1} parent=39 // pred_region
          %s4417 = ssub.s32 128, 128
          %4418 = vsyncadd %s4409, %s4417
          %s4419 = smul.addr %s24, 128
          %s4420 = scalar_lea.hbm %s5, %s4419
          %s4422 = sshll.u32 %s4412, 4
          %s4423 = int_to_ptr.vmem [resolvable:$true] %s4422
          %4425 = dma.vmem_to_hbm [thread:$0]  %s4423, 128, %s4420, %s4409
        $region64: #{tpu_custom_call.1} parent=39 // pred_fallthru
          _
      $region40: #{tpu_custom_call.1} parent=5 // pred_fallthru
        _
      %p4426 = scmp.le.s32.totalorder 2, %s19
      // Predicated region
      $region65: #{tpu_custom_call.1} parent=5 // pred_check
        %p4427 = pneg %p4426
      $region66: #{tpu_custom_call.1} parent=5 // pred_check_branch
        %4429 = sbr.rel (%p4427) target = $region68
      $region67: #{tpu_custom_call.1} parent=5 // pred_region
        %s4430 = ssub.s32 %s19, 2
        // Predicated region
        $region69: #{tpu_custom_call.1} parent=67 // pred_check
          %p4431 = pneg %p158
        $region70: #{tpu_custom_call.1} parent=67 // pred_check_branch
          %4433 = sbr.rel (%p4431) target = $region72
        $region71: #{tpu_custom_call.1} parent=67 // pred_region
          %s4434 = sand.u32 %s143, 1
          %s4435 = scalar_lea.sflag [#allocation4], %s4434
          %s4436 = sand.u32 %s143, 1
          %s4437 = smul.addr %s4436, 8
          %s4438 = scalar_lea.vmem [#allocation11], %s4437
          %4439 = dma.done %s4435, 128
        $region72: #{tpu_custom_call.1} parent=67 // pred_fallthru
          _
      $region68: #{tpu_custom_call.1} parent=5 // pred_fallthru
        _
    $region6: #{tpu_custom_call.1} parent=1 // loop_footer
      %s23 = sadd.s32 1, %s19
    $region7: #{tpu_custom_call.1} parent=1 // loop_footer_branch
      %18 = sbr.rel target = $region3
    $region8: #{tpu_custom_call.1} parent=1 // loop_exit
      _
    %4440 = vsyncpa [#allocation3], 1
    %s4441 = scalar_lea.sflag [#allocation3], 1
    %4442 = vsyncpa %s4441, 1
    %4443 = vsyncpa [#allocation6], 1
    %4444 = vsyncpa [#allocation9], 1
    %4445 = vsyncpa [#allocation4], 1
    %s4446 = scalar_lea.sflag [#allocation4], 1
    %4447 = vsyncpa %s4446, 1

</llo_original>
